<compile_context>
chip_gen: v6e
topology: v6e:2x2x1
jax: 0.10.0
libtpu: 0.0.40
codegen_flags: <defaults>
</compile_context>

<pallas_src>
import jax
import jax.numpy as jnp
from jax import lax
from jax.experimental import pallas as pl
from jax.experimental.pallas import tpu as pltpu
import numpy as np

K0 = 5          # conv0: depthwise 5x5, padding 2
PAD0 = 2
K1 = 7          # conv_spatial: depthwise 7x7, dilation 3, padding 9
DIL = 3
PAD1 = 9
HALO = PAD0 + PAD1            # x rows of halo needed per output strip (11)

SMALL_C_MIX = 16              # C <= this: 1x1 via lane-shift diagonals (VPU)
                              # C >  this: 1x1 via MXU matmul


def _pick_strip_rows(H):
    """Strip height: multiple of 8, >= 16 (halo reads), divides H; else H."""
    if H <= 32:
        return H
    for t in (32, 16, 24, 40, 48, 56, 64):
        if H % t == 0:
            return t
    return H


def _vmem_limit_bytes(request):
    """Generation-aware VMEM cap: <= 75% of physical VMEM."""
    cap = 64 * 1024 * 1024                     # conservative fallback (v7x)
    try:
        cap = int(pltpu.get_tpu_info().vmem_capacity_bytes)
    except Exception:
        pass
    return int(max(16 * 1024 * 1024, min(request, (3 * cap) // 4)))


def _make_kernel(H, W, C, TH, small_mix, prefer_bf16):
    WL = W * C
    NR0 = TH + 2 * PAD1        # conv0 rows computed per strip (TH + 18)

    def shift_lanes(v, d):
        # result[:, l] = v[:, l - d], zero-filled at the edges (static d).
        if d == 0:
            return v
        rows = v.shape[0]
        if d > 0:
            z = jnp.zeros((rows, d), v.dtype)
            return jnp.concatenate([z, v[:, :WL - d]], axis=1)
        d = -d
        z = jnp.zeros((rows, d), v.dtype)
        return jnp.concatenate([v[:, d:], z], axis=1)

    def kernel(x_ref, w0_ref, b0_ref, w1_ref, b1_ref, w2_ref, b2_ref,
               out_ref, xpad_ref, apad_ref):
        # x_ref:    (1, H, W*C)   full image for this batch (lane-dense)
        # w0_ref:   (5, 5, W*C)   depthwise 5x5 weights, lane-tiled across W
        # w1_ref:   (7, 7, W*C)   depthwise 7x7 (dilated) weights, lane-tiled
        # w2_ref:   (2C-1, W*C)   diagonal 1x1 weights   (small_mix)
        #           (C, C)        (Cin, Cout) 1x1 weights (MXU path)
        # b*_ref:   (1, W*C)      lane-tiled biases
        # out_ref:  (1, TH, W*C)  output strip
        # xpad_ref: (TH+22, (W+4)*C)   zero-haloed x strip       (scratch)
        # apad_ref: (TH+18, (W+18)*C)  zero-haloed conv0 output  (scratch)
        s = pl.program_id(1)
        ns = pl.num_programs(1)
        r0 = s * TH
        if TH % 8 == 0:
            r0 = pl.multiple_of(r0, 8)
        dt = xpad_ref.dtype
        c0, c1 = PAD0 * C, (PAD0 + W) * C          # xpad interior columns
        a0c0, a0c1 = PAD1 * C, (PAD1 + W) * C      # apad interior columns

        # ---- x strip (+11-row halo) into the zero-haloed scratch ---------
        xpad_ref[:, 0:c0] = jnp.zeros((TH + 2 * HALO, c0), dt)
        xpad_ref[:, c1:] = jnp.zeros((TH + 2 * HALO, PAD0 * C), dt)
        xpad_ref[HALO:HALO + TH, c0:c1] = x_ref[0, pl.ds(r0, TH), :].astype(dt)

        @pl.when(s == 0)
        def _():
            xpad_ref[0:HALO, c0:c1] = jnp.zeros((HALO, WL), dt)

        @pl.when(s > 0)
        def _():
            xpad_ref[0:HALO, c0:c1] = (
                x_ref[0, pl.ds(r0 - HALO, HALO), :].astype(dt))

        @pl.when(s == ns - 1)
        def _():
            xpad_ref[HALO + TH:, c0:c1] = jnp.zeros((HALO, WL), dt)

        @pl.when(s < ns - 1)
        def _():
            xpad_ref[HALO + TH:, c0:c1] = (
                x_ref[0, pl.ds(r0 + TH, HALO), :].astype(dt))

        # ---- conv0: depthwise 5x5 over TH+18 rows, register accumulator --
        a0 = jnp.broadcast_to(b0_ref[...].astype(jnp.float32), (NR0, WL))
        for kh in range(K0):
            for kw in range(K0):
                tap = xpad_ref[kh:kh + NR0,
                               kw * C:(kw + W) * C].astype(jnp.float32)
                a0 = a0 + tap * w0_ref[kh, kw, :]

        # ---- conv0 output into the zero-haloed scratch for the dilated conv
        apad_ref[:, 0:a0c0] = jnp.zeros((NR0, a0c0), dt)
        apad_ref[:, a0c1:] = jnp.zeros((NR0, PAD1 * C), dt)
        apad_ref[:, a0c0:a0c1] = a0.astype(dt)

        # conv0-output rows outside the image must be zero for conv1's
        # zero padding (only the first / last strip have such rows).
        @pl.when(s == 0)
        def _():
            apad_ref[0:PAD1, a0c0:a0c1] = jnp.zeros((PAD1, WL), dt)

        @pl.when(s == ns - 1)
        def _():
            apad_ref[TH + PAD1:, a0c0:a0c1] = jnp.zeros((PAD1, WL), dt)

        # ---- conv_spatial: depthwise 7x7, dilation 3, register accumulator
        acc1 = jnp.broadcast_to(b1_ref[...].astype(jnp.float32), (TH, WL))
        for kh in range(K1):
            for kw in range(K1):
                tap = apad_ref[DIL * kh:DIL * kh + TH,
                               DIL * kw * C:(DIL * kw + W) * C
                               ].astype(jnp.float32)
                acc1 = acc1 + tap * w1_ref[kh, kw, :]

        # ---- conv1: 1x1 pointwise channel mixing --------------------------
        if small_mix:
            # lane-space diagonal formulation: out[., w*C+co] =
            #   b2[co] + sum_ci acc1[., w*C+ci] * w2[ci,co]; the wrapper packs
            #   w2 into (2C-1) lane-tiled diagonals so no relayout is needed.
            out1 = jnp.broadcast_to(b2_ref[...].astype(jnp.float32), (TH, WL))
            for idx, delta in enumerate(range(-(C - 1), C)):
                out1 = out1 + shift_lanes(acc1, delta) * w2_ref[idx, :]
        else:
            # TODO(synk): verify Mosaic reshape (TH, W*C) <-> (TH*W, C) at
            #             large ColonFormer shapes; MXU is otherwise idle.
            flat = acc1.reshape(TH * W, C)
            w2 = w2_ref[...]
            if prefer_bf16:
                flat = flat.astype(jnp.bfloat16)
                w2 = w2.astype(jnp.bfloat16)
            out1 = jnp.dot(flat, w2, preferred_element_type=jnp.float32)
            out1 = (out1 + b2_ref[:, 0:C].astype(jnp.float32)).reshape(TH, WL)

        # ---- gate: u * attn (u read in full f32 from the input block) -----
        u = x_ref[0, pl.ds(r0, TH), :].astype(jnp.float32)
        out_ref[0] = (u * out1).astype(out_ref.dtype)

    return kernel


def attention_module_nhwc(x, params, *, prefer_bf16=False):
    """x: (B, H, W, C) float32 (NHWC, transpose-free path). Returns NHWC."""
    w0, b0, w1, b1, w2, b2 = params
    B, H, W, C = x.shape
    WL = W * C
    TH = _pick_strip_rows(H)
    ns = H // TH
    small_mix = C <= SMALL_C_MIX
    tap_dtype = jnp.bfloat16 if prefer_bf16 else jnp.float32

    x2 = x.reshape(B, H, WL)                       # free lane-dense view

    # PyTorch depthwise weights (C,1,kh,kw) -> (kh,kw,C), then lane-tiled
    # across W; 1x1 weight -> (Cin, Cout).
    w0_k = jnp.transpose(w0[:, 0], (1, 2, 0)).astype(jnp.float32)
    w1_k = jnp.transpose(w1[:, 0], (1, 2, 0)).astype(jnp.float32)
    w2_k = jnp.transpose(w2[:, :, 0, 0]).astype(jnp.float32)
    w0_t = jnp.tile(w0_k, (1, 1, W))               # (5, 5, W*C)
    w1_t = jnp.tile(w1_k, (1, 1, W))               # (7, 7, W*C)
    b0_t = jnp.tile(b0.astype(jnp.float32), W).reshape(1, WL)
    b1_t = jnp.tile(b1.astype(jnp.float32), W).reshape(1, WL)
    b2_t = jnp.tile(b2.astype(jnp.float32), W).reshape(1, WL)

    if small_mix:
        co = jnp.arange(C)
        rows = []
        for delta in range(-(C - 1), C):
            ci = co - delta
            valid = (ci >= 0) & (ci < C)
            g = jnp.where(valid, w2_k[jnp.clip(ci, 0, C - 1), co], 0.0)
            rows.append(jnp.tile(g, W))
        w2_mix = jnp.stack(rows)                   # (2C-1, W*C)
    else:
        w2_mix = w2_k                              # (C, C)

    kernel = _make_kernel(H, W, C, TH, small_mix, prefer_bf16)

    # VMEM budget: x/out blocks (double buffered) + weights + haloed strip
    # scratches + headroom for (possibly spilled) register accumulators.
    itap = 2 if prefer_bf16 else 4
    req = 4 * (2 * H * WL + 2 * TH * WL)
    req += 4 * WL * (K0 * K0 + K1 * K1 + 3) + 4 * int(np.prod(w2_mix.shape))
    req += itap * ((TH + 2 * HALO) * (W + 2 * PAD0) * C
                   + (TH + 2 * PAD1) * (W + 2 * PAD1) * C)
    req += 16 * (TH + 2 * PAD1) * WL
    vmem_limit = _vmem_limit_bytes(2 * req)

    out = pl.pallas_call(
        kernel,
        out_shape=jax.ShapeDtypeStruct((B, H, WL), x.dtype),
        grid=(B, ns),
        in_specs=[
            pl.BlockSpec((1, H, WL), lambda b, s: (b, 0, 0)),       # x image
            pl.BlockSpec((K0, K0, WL), lambda b, s: (0, 0, 0)),     # w0 tiled
            pl.BlockSpec((1, WL), lambda b, s: (0, 0)),             # b0 tiled
            pl.BlockSpec((K1, K1, WL), lambda b, s: (0, 0, 0)),     # w1 tiled
            pl.BlockSpec((1, WL), lambda b, s: (0, 0)),             # b1 tiled
            pl.BlockSpec(w2_mix.shape, lambda b, s: (0, 0)),        # w2 mix
            pl.BlockSpec((1, WL), lambda b, s: (0, 0)),             # b2 tiled
        ],
        out_specs=pl.BlockSpec((1, TH, WL), lambda b, s: (b, s, 0)),
        scratch_shapes=[
            pltpu.VMEM((TH + 2 * HALO, (W + 2 * PAD0) * C), tap_dtype),
            pltpu.VMEM((TH + 2 * PAD1, (W + 2 * PAD1) * C), tap_dtype),
        ],
        compiler_params=pltpu.CompilerParams(
            dimension_semantics=("parallel", "parallel"),
            vmem_limit_bytes=vmem_limit),
    )(x2, w0_t, b0_t, w1_t, b1_t, w2_mix, b2_t)

    return out.reshape(B, H, W, C)


def attention_module(x_nchw, params, *, prefer_bf16=False):
    """NCHW adapter kept only for parity with the PyTorch module interface."""
    x = jnp.transpose(x_nchw, (0, 2, 3, 1))
    out = attention_module_nhwc(x, params, prefer_bf16=prefer_bf16)
    return jnp.transpose(out, (0, 3, 1, 2))


def reference_attention(x, w0, b0, w1, b1, w2, b2):
    """Pure-JAX (XLA conv) reference, NCHW, mirrors the PyTorch module."""
    dn = ('NCHW', 'OIHW', 'NCHW')
    C = x.shape[1]
    a = lax.conv_general_dilated(x, w0, (1, 1), [(PAD0, PAD0), (PAD0, PAD0)],
                                 feature_group_count=C,
                                 dimension_numbers=dn) + b0[None, :, None, None]
    a = lax.conv_general_dilated(a, w1, (1, 1), [(PAD1, PAD1), (PAD1, PAD1)],
                                 rhs_dilation=(DIL, DIL),
                                 feature_group_count=C,
                                 dimension_numbers=dn) + b1[None, :, None, None]
    a = lax.conv_general_dilated(a, w2, (1, 1), [(0, 0), (0, 0)],
                                 dimension_numbers=dn) + b2[None, :, None, None]
    return x * a


def init_params(key, dim):
    ks = jax.random.split(key, 6)
    w0 = 0.1 * jax.random.normal(ks[0], (dim, 1, K0, K0), jnp.float32)
    b0 = 0.1 * jax.random.normal(ks[1], (dim,), jnp.float32)
    w1 = 0.1 * jax.random.normal(ks[2], (dim, 1, K1, K1), jnp.float32)
    b1 = 0.1 * jax.random.normal(ks[3], (dim,), jnp.float32)
    w2 = 0.1 * jax.random.normal(ks[4], (dim, dim, 1, 1), jnp.float32)
    b2 = 0.1 * jax.random.normal(ks[5], (dim,), jnp.float32)
    return (w0, b0, w1, b1, w2, b2)


if __name__ == "__main__":
    key = jax.random.PRNGKey(0)
    kx, kp, kx2, kp2 = jax.random.split(key, 4)

    # Test 1: PyTorch-interface (NCHW) adapter at the spec demo shape.
    B, C, H, W = 2, 4, 16, 16
    x = jax.random.normal(kx, (B, C, H, W), jnp.float32)
    params = init_params(kp, C)
    out = jax.block_until_ready(attention_module(x, params))
    ref = jax.block_until_ready(reference_attention(x, *params))
    np.testing.assert_allclose(np.asarray(out), np.asarray(ref),
                               rtol=1e-3, atol=1e-3)

    # Test 2: NHWC-native (transpose-free) path with multiple H strips,
    # exercising the strip-halo logic (first / middle / last strip branches).
    B2, H2, W2, C2 = 1, 64, 16, 4
    x2 = jax.random.normal(kx2, (B2, H2, W2, C2), jnp.float32)
    params2 = init_params(kp2, C2)
    out2 = jax.block_until_ready(attention_module_nhwc(x2, params2))
    x2_nchw = jnp.transpose(x2, (0, 3, 1, 2))
    ref2 = jnp.transpose(reference_attention(x2_nchw, *params2), (0, 2, 3, 1))
    ref2 = jax.block_until_ready(ref2)
    np.testing.assert_allclose(np.asarray(out2), np.asarray(ref2),
                               rtol=1e-3, atol=1e-3)

    print("KERNEL_OK")
</pallas_src>

<mosaic_0001>
module attributes {stable_mosaic.version = 11 : i64} {
  func.func @kernel(%arg0: i32, %arg1: i32, %arg2: memref<1x16x64xf32, #tpu.memory_space<vmem>>, %arg3: memref<5x5x64xf32, #tpu.memory_space<vmem>>, %arg4: memref<1x64xf32, #tpu.memory_space<vmem>>, %arg5: memref<7x7x64xf32, #tpu.memory_space<vmem>>, %arg6: memref<1x64xf32, #tpu.memory_space<vmem>>, %arg7: memref<7x64xf32, #tpu.memory_space<vmem>>, %arg8: memref<1x64xf32, #tpu.memory_space<vmem>>, %arg9: memref<1x16x64xf32, #tpu.memory_space<vmem>>, %arg10: memref<38x80xf32, #tpu.memory_space<vmem>>, %arg11: memref<34x136xf32, #tpu.memory_space<vmem>>) attributes {dimension_semantics = [#tpu.dimension_semantics<parallel>, #tpu.dimension_semantics<parallel>], iteration_bounds = array<i64: 2, 1>, scalar_prefetch = 0 : i64, scratch_operands = 2 : i64, tpu.core_type = #tpu.core_type<tc>, window_params = [{transform_indices = @transform_0, window_bounds = array<i64: 1, 16, 64>}, {pipeline_mode = #tpu.pipeline_mode<synchronous>, transform_indices = @transform_1, window_bounds = array<i64: 5, 5, 64>}, {pipeline_mode = #tpu.pipeline_mode<synchronous>, transform_indices = @transform_2, window_bounds = array<i64: 1, 64>}, {pipeline_mode = #tpu.pipeline_mode<synchronous>, transform_indices = @transform_3, window_bounds = array<i64: 7, 7, 64>}, {pipeline_mode = #tpu.pipeline_mode<synchronous>, transform_indices = @transform_4, window_bounds = array<i64: 1, 64>}, {pipeline_mode = #tpu.pipeline_mode<synchronous>, transform_indices = @transform_5, window_bounds = array<i64: 7, 64>}, {pipeline_mode = #tpu.pipeline_mode<synchronous>, transform_indices = @transform_6, window_bounds = array<i64: 1, 64>}, {transform_indices = @transform_7, window_bounds = array<i64: 1, 16, 64>}]} {
    %c16_i32 = arith.constant 16 : i32
    %0 = arith.muli %arg1, %c16_i32 : i32
    %1 = tpu.assume_multiple %0, 8 : i32
    %cst = arith.constant 0.000000e+00 : f32
    %2 = vector.broadcast %cst : f32 to vector<38x8xf32>
    %c0 = arith.constant 0 : index
    %c0_0 = arith.constant 0 : index
    %3 = vector.load %arg10[%c0, %c0_0] : memref<38x80xf32, #tpu.memory_space<vmem>>, vector<38x8xf32>
    tpu.vector_store %arg10[%c0, %c0_0], %2 {strides = array<i32>} : memref<38x80xf32, #tpu.memory_space<vmem>>, vector<38x8xf32>,
    %cst_1 = arith.constant 0.000000e+00 : f32
    %4 = vector.broadcast %cst_1 : f32 to vector<38x8xf32>
    %c0_2 = arith.constant 0 : index
    %c72 = arith.constant 72 : index
    %5 = vector.load %arg10[%c0_2, %c72] : memref<38x80xf32, #tpu.memory_space<vmem>>, vector<38x8xf32>
    tpu.vector_store %arg10[%c0_2, %c72], %4 {strides = array<i32>} : memref<38x80xf32, #tpu.memory_space<vmem>>, vector<38x8xf32>,
    %c0_3 = arith.constant 0 : index
    %6 = arith.index_cast %1 : i32 to index
    %c0_4 = arith.constant 0 : index
    %7 = vector.load %arg2[%c0_3, %6, %c0_4] : memref<1x16x64xf32, #tpu.memory_space<vmem>>, vector<1x16x64xf32>
    %8 = vector.shape_cast %7 : vector<1x16x64xf32> to vector<16x64xf32>
    %c11 = arith.constant 11 : index
    %c8 = arith.constant 8 : index
    %9 = vector.load %arg10[%c11, %c8] : memref<38x80xf32, #tpu.memory_space<vmem>>, vector<16x64xf32>
    tpu.vector_store %arg10[%c11, %c8], %8 {strides = array<i32>} : memref<38x80xf32, #tpu.memory_space<vmem>>, vector<16x64xf32>,
    %c0_i32 = arith.constant 0 : i32
    %10 = arith.cmpi eq, %arg1, %c0_i32 : i32
    %11 = arith.extui %10 : i1 to i32
    %c0_i32_5 = arith.constant 0 : i32
    %12 = arith.cmpi ne, %11, %c0_i32_5 : i32
    scf.if %12 {
      %cst_409 = arith.constant 0.000000e+00 : f32
      %627 = vector.broadcast %cst_409 : f32 to vector<11x64xf32>
      %c0_410 = arith.constant 0 : index
      %c8_411 = arith.constant 8 : index
      %628 = vector.load %arg10[%c0_410, %c8_411] : memref<38x80xf32, #tpu.memory_space<vmem>>, vector<11x64xf32>
      tpu.vector_store %arg10[%c0_410, %c8_411], %627 {strides = array<i32>} : memref<38x80xf32, #tpu.memory_space<vmem>>, vector<11x64xf32>,
    } else {
    }
    %c0_i32_6 = arith.constant 0 : i32
    %13 = arith.cmpi sgt, %arg1, %c0_i32_6 : i32
    %14 = arith.extui %13 : i1 to i32
    %c0_i32_7 = arith.constant 0 : i32
    %15 = arith.cmpi ne, %14, %c0_i32_7 : i32
    scf.if %15 {
      %c11_i32 = arith.constant 11 : i32
      %627 = arith.subi %1, %c11_i32 : i32
      %c0_409 = arith.constant 0 : index
      %628 = arith.index_cast %627 : i32 to index
      %c0_410 = arith.constant 0 : index
      %629 = vector.load %arg2[%c0_409, %628, %c0_410] : memref<1x16x64xf32, #tpu.memory_space<vmem>>, vector<1x11x64xf32>
      %630 = vector.shape_cast %629 : vector<1x11x64xf32> to vector<11x64xf32>
      %c0_411 = arith.constant 0 : index
      %c8_412 = arith.constant 8 : index
      %631 = vector.load %arg10[%c0_411, %c8_412] : memref<38x80xf32, #tpu.memory_space<vmem>>, vector<11x64xf32>
      tpu.vector_store %arg10[%c0_411, %c8_412], %630 {strides = array<i32>} : memref<38x80xf32, #tpu.memory_space<vmem>>, vector<11x64xf32>,
    } else {
    }
    %c0_i32_8 = arith.constant 0 : i32
    %16 = arith.cmpi eq, %arg1, %c0_i32_8 : i32
    %17 = arith.extui %16 : i1 to i32
    %c0_i32_9 = arith.constant 0 : i32
    %18 = arith.cmpi ne, %17, %c0_i32_9 : i32
    scf.if %18 {
      %cst_409 = arith.constant 0.000000e+00 : f32
      %627 = vector.broadcast %cst_409 : f32 to vector<11x64xf32>
      %c27 = arith.constant 27 : index
      %c8_410 = arith.constant 8 : index
      %628 = vector.load %arg10[%c27, %c8_410] : memref<38x80xf32, #tpu.memory_space<vmem>>, vector<11x64xf32>
      tpu.vector_store %arg10[%c27, %c8_410], %627 {strides = array<i32>} : memref<38x80xf32, #tpu.memory_space<vmem>>, vector<11x64xf32>,
    } else {
    }
    %c0_i32_10 = arith.constant 0 : i32
    %19 = arith.cmpi slt, %arg1, %c0_i32_10 : i32
    %20 = arith.extui %19 : i1 to i32
    %c0_i32_11 = arith.constant 0 : i32
    %21 = arith.cmpi ne, %20, %c0_i32_11 : i32
    scf.if %21 {
      %c16_i32_409 = arith.constant 16 : i32
      %627 = arith.addi %1, %c16_i32_409 : i32
      %c0_410 = arith.constant 0 : index
      %628 = arith.index_cast %627 : i32 to index
      %c0_411 = arith.constant 0 : index
      %629 = vector.load %arg2[%c0_410, %628, %c0_411] : memref<1x16x64xf32, #tpu.memory_space<vmem>>, vector<1x11x64xf32>
      %630 = vector.shape_cast %629 : vector<1x11x64xf32> to vector<11x64xf32>
      %c27 = arith.constant 27 : index
      %c8_412 = arith.constant 8 : index
      %631 = vector.load %arg10[%c27, %c8_412] : memref<38x80xf32, #tpu.memory_space<vmem>>, vector<11x64xf32>
      tpu.vector_store %arg10[%c27, %c8_412], %630 {strides = array<i32>} : memref<38x80xf32, #tpu.memory_space<vmem>>, vector<11x64xf32>,
    } else {
    }
    %c0_12 = arith.constant 0 : index
    %c0_13 = arith.constant 0 : index
    %22 = vector.load %arg4[%c0_12, %c0_13] : memref<1x64xf32, #tpu.memory_space<vmem>>, vector<1x64xf32>
    %23 = vector.shape_cast %22 : vector<1x64xf32> to vector<1x64xf32>
    %24 = vector.broadcast %23 : vector<1x64xf32> to vector<34x64xf32>
    %c0_14 = arith.constant 0 : index
    %c0_15 = arith.constant 0 : index
    %25 = vector.load %arg10[%c0_14, %c0_15] : memref<38x80xf32, #tpu.memory_space<vmem>>, vector<34x64xf32>
    %c0_16 = arith.constant 0 : index
    %c0_17 = arith.constant 0 : index
    %c0_18 = arith.constant 0 : index
    %26 = vector.load %arg3[%c0_16, %c0_17, %c0_18] : memref<5x5x64xf32, #tpu.memory_space<vmem>>, vector<1x1x64xf32>
    %27 = vector.shape_cast %26 : vector<1x1x64xf32> to vector<64xf32>
    %28 = vector.shape_cast %27 : vector<64xf32> to vector<1x64xf32>
    %29 = vector.broadcast %28 : vector<1x64xf32> to vector<34x64xf32>
    %30 = arith.mulf %25, %29 : vector<34x64xf32>
    %31 = arith.addf %24, %30 : vector<34x64xf32>
    %c0_19 = arith.constant 0 : index
    %c4 = arith.constant 4 : index
    %32 = vector.load %arg10[%c0_19, %c4] : memref<38x80xf32, #tpu.memory_space<vmem>>, vector<34x64xf32>
    %c0_20 = arith.constant 0 : index
    %c1 = arith.constant 1 : index
    %c0_21 = arith.constant 0 : index
    %33 = vector.load %arg3[%c0_20, %c1, %c0_21] : memref<5x5x64xf32, #tpu.memory_space<vmem>>, vector<1x1x64xf32>
    %34 = vector.shape_cast %33 : vector<1x1x64xf32> to vector<64xf32>
    %35 = vector.shape_cast %34 : vector<64xf32> to vector<1x64xf32>
    %36 = vector.broadcast %35 : vector<1x64xf32> to vector<34x64xf32>
    %37 = arith.mulf %32, %36 : vector<34x64xf32>
    %38 = arith.addf %31, %37 : vector<34x64xf32>
    %c0_22 = arith.constant 0 : index
    %c8_23 = arith.constant 8 : index
    %39 = vector.load %arg10[%c0_22, %c8_23] : memref<38x80xf32, #tpu.memory_space<vmem>>, vector<34x64xf32>
    %c0_24 = arith.constant 0 : index
    %c2 = arith.constant 2 : index
    %c0_25 = arith.constant 0 : index
    %40 = vector.load %arg3[%c0_24, %c2, %c0_25] : memref<5x5x64xf32, #tpu.memory_space<vmem>>, vector<1x1x64xf32>
    %41 = vector.shape_cast %40 : vector<1x1x64xf32> to vector<64xf32>
    %42 = vector.shape_cast %41 : vector<64xf32> to vector<1x64xf32>
    %43 = vector.broadcast %42 : vector<1x64xf32> to vector<34x64xf32>
    %44 = arith.mulf %39, %43 : vector<34x64xf32>
    %45 = arith.addf %38, %44 : vector<34x64xf32>
    %c0_26 = arith.constant 0 : index
    %c12 = arith.constant 12 : index
    %46 = vector.load %arg10[%c0_26, %c12] : memref<38x80xf32, #tpu.memory_space<vmem>>, vector<34x64xf32>
    %c0_27 = arith.constant 0 : index
    %c3 = arith.constant 3 : index
    %c0_28 = arith.constant 0 : index
    %47 = vector.load %arg3[%c0_27, %c3, %c0_28] : memref<5x5x64xf32, #tpu.memory_space<vmem>>, vector<1x1x64xf32>
    %48 = vector.shape_cast %47 : vector<1x1x64xf32> to vector<64xf32>
    %49 = vector.shape_cast %48 : vector<64xf32> to vector<1x64xf32>
    %50 = vector.broadcast %49 : vector<1x64xf32> to vector<34x64xf32>
    %51 = arith.mulf %46, %50 : vector<34x64xf32>
    %52 = arith.addf %45, %51 : vector<34x64xf32>
    %c0_29 = arith.constant 0 : index
    %c16 = arith.constant 16 : index
    %53 = vector.load %arg10[%c0_29, %c16] : memref<38x80xf32, #tpu.memory_space<vmem>>, vector<34x64xf32>
    %c0_30 = arith.constant 0 : index
    %c4_31 = arith.constant 4 : index
    %c0_32 = arith.constant 0 : index
    %54 = vector.load %arg3[%c0_30, %c4_31, %c0_32] : memref<5x5x64xf32, #tpu.memory_space<vmem>>, vector<1x1x64xf32>
    %55 = vector.shape_cast %54 : vector<1x1x64xf32> to vector<64xf32>
    %56 = vector.shape_cast %55 : vector<64xf32> to vector<1x64xf32>
    %57 = vector.broadcast %56 : vector<1x64xf32> to vector<34x64xf32>
    %58 = arith.mulf %53, %57 : vector<34x64xf32>
    %59 = arith.addf %52, %58 : vector<34x64xf32>
    %c1_33 = arith.constant 1 : index
    %c0_34 = arith.constant 0 : index
    %60 = vector.load %arg10[%c1_33, %c0_34] : memref<38x80xf32, #tpu.memory_space<vmem>>, vector<34x64xf32>
    %c1_35 = arith.constant 1 : index
    %c0_36 = arith.constant 0 : index
    %c0_37 = arith.constant 0 : index
    %61 = vector.load %arg3[%c1_35, %c0_36, %c0_37] : memref<5x5x64xf32, #tpu.memory_space<vmem>>, vector<1x1x64xf32>
    %62 = vector.shape_cast %61 : vector<1x1x64xf32> to vector<64xf32>
    %63 = vector.shape_cast %62 : vector<64xf32> to vector<1x64xf32>
    %64 = vector.broadcast %63 : vector<1x64xf32> to vector<34x64xf32>
    %65 = arith.mulf %60, %64 : vector<34x64xf32>
    %66 = arith.addf %59, %65 : vector<34x64xf32>
    %c1_38 = arith.constant 1 : index
    %c4_39 = arith.constant 4 : index
    %67 = vector.load %arg10[%c1_38, %c4_39] : memref<38x80xf32, #tpu.memory_space<vmem>>, vector<34x64xf32>
    %c1_40 = arith.constant 1 : index
    %c1_41 = arith.constant 1 : index
    %c0_42 = arith.constant 0 : index
    %68 = vector.load %arg3[%c1_40, %c1_41, %c0_42] : memref<5x5x64xf32, #tpu.memory_space<vmem>>, vector<1x1x64xf32>
    %69 = vector.shape_cast %68 : vector<1x1x64xf32> to vector<64xf32>
    %70 = vector.shape_cast %69 : vector<64xf32> to vector<1x64xf32>
    %71 = vector.broadcast %70 : vector<1x64xf32> to vector<34x64xf32>
    %72 = arith.mulf %67, %71 : vector<34x64xf32>
    %73 = arith.addf %66, %72 : vector<34x64xf32>
    %c1_43 = arith.constant 1 : index
    %c8_44 = arith.constant 8 : index
    %74 = vector.load %arg10[%c1_43, %c8_44] : memref<38x80xf32, #tpu.memory_space<vmem>>, vector<34x64xf32>
    %c1_45 = arith.constant 1 : index
    %c2_46 = arith.constant 2 : index
    %c0_47 = arith.constant 0 : index
    %75 = vector.load %arg3[%c1_45, %c2_46, %c0_47] : memref<5x5x64xf32, #tpu.memory_space<vmem>>, vector<1x1x64xf32>
    %76 = vector.shape_cast %75 : vector<1x1x64xf32> to vector<64xf32>
    %77 = vector.shape_cast %76 : vector<64xf32> to vector<1x64xf32>
    %78 = vector.broadcast %77 : vector<1x64xf32> to vector<34x64xf32>
    %79 = arith.mulf %74, %78 : vector<34x64xf32>
    %80 = arith.addf %73, %79 : vector<34x64xf32>
    %c1_48 = arith.constant 1 : index
    %c12_49 = arith.constant 12 : index
    %81 = vector.load %arg10[%c1_48, %c12_49] : memref<38x80xf32, #tpu.memory_space<vmem>>, vector<34x64xf32>
    %c1_50 = arith.constant 1 : index
    %c3_51 = arith.constant 3 : index
    %c0_52 = arith.constant 0 : index
    %82 = vector.load %arg3[%c1_50, %c3_51, %c0_52] : memref<5x5x64xf32, #tpu.memory_space<vmem>>, vector<1x1x64xf32>
    %83 = vector.shape_cast %82 : vector<1x1x64xf32> to vector<64xf32>
    %84 = vector.shape_cast %83 : vector<64xf32> to vector<1x64xf32>
    %85 = vector.broadcast %84 : vector<1x64xf32> to vector<34x64xf32>
    %86 = arith.mulf %81, %85 : vector<34x64xf32>
    %87 = arith.addf %80, %86 : vector<34x64xf32>
    %c1_53 = arith.constant 1 : index
    %c16_54 = arith.constant 16 : index
    %88 = vector.load %arg10[%c1_53, %c16_54] : memref<38x80xf32, #tpu.memory_space<vmem>>, vector<34x64xf32>
    %c1_55 = arith.constant 1 : index
    %c4_56 = arith.constant 4 : index
    %c0_57 = arith.constant 0 : index
    %89 = vector.load %arg3[%c1_55, %c4_56, %c0_57] : memref<5x5x64xf32, #tpu.memory_space<vmem>>, vector<1x1x64xf32>
    %90 = vector.shape_cast %89 : vector<1x1x64xf32> to vector<64xf32>
    %91 = vector.shape_cast %90 : vector<64xf32> to vector<1x64xf32>
    %92 = vector.broadcast %91 : vector<1x64xf32> to vector<34x64xf32>
    %93 = arith.mulf %88, %92 : vector<34x64xf32>
    %94 = arith.addf %87, %93 : vector<34x64xf32>
    %c2_58 = arith.constant 2 : index
    %c0_59 = arith.constant 0 : index
    %95 = vector.load %arg10[%c2_58, %c0_59] : memref<38x80xf32, #tpu.memory_space<vmem>>, vector<34x64xf32>
    %c2_60 = arith.constant 2 : index
    %c0_61 = arith.constant 0 : index
    %c0_62 = arith.constant 0 : index
    %96 = vector.load %arg3[%c2_60, %c0_61, %c0_62] : memref<5x5x64xf32, #tpu.memory_space<vmem>>, vector<1x1x64xf32>
    %97 = vector.shape_cast %96 : vector<1x1x64xf32> to vector<64xf32>
    %98 = vector.shape_cast %97 : vector<64xf32> to vector<1x64xf32>
    %99 = vector.broadcast %98 : vector<1x64xf32> to vector<34x64xf32>
    %100 = arith.mulf %95, %99 : vector<34x64xf32>
    %101 = arith.addf %94, %100 : vector<34x64xf32>
    %c2_63 = arith.constant 2 : index
    %c4_64 = arith.constant 4 : index
    %102 = vector.load %arg10[%c2_63, %c4_64] : memref<38x80xf32, #tpu.memory_space<vmem>>, vector<34x64xf32>
    %c2_65 = arith.constant 2 : index
    %c1_66 = arith.constant 1 : index
    %c0_67 = arith.constant 0 : index
    %103 = vector.load %arg3[%c2_65, %c1_66, %c0_67] : memref<5x5x64xf32, #tpu.memory_space<vmem>>, vector<1x1x64xf32>
    %104 = vector.shape_cast %103 : vector<1x1x64xf32> to vector<64xf32>
    %105 = vector.shape_cast %104 : vector<64xf32> to vector<1x64xf32>
    %106 = vector.broadcast %105 : vector<1x64xf32> to vector<34x64xf32>
    %107 = arith.mulf %102, %106 : vector<34x64xf32>
    %108 = arith.addf %101, %107 : vector<34x64xf32>
    %c2_68 = arith.constant 2 : index
    %c8_69 = arith.constant 8 : index
    %109 = vector.load %arg10[%c2_68, %c8_69] : memref<38x80xf32, #tpu.memory_space<vmem>>, vector<34x64xf32>
    %c2_70 = arith.constant 2 : index
    %c2_71 = arith.constant 2 : index
    %c0_72 = arith.constant 0 : index
    %110 = vector.load %arg3[%c2_70, %c2_71, %c0_72] : memref<5x5x64xf32, #tpu.memory_space<vmem>>, vector<1x1x64xf32>
    %111 = vector.shape_cast %110 : vector<1x1x64xf32> to vector<64xf32>
    %112 = vector.shape_cast %111 : vector<64xf32> to vector<1x64xf32>
    %113 = vector.broadcast %112 : vector<1x64xf32> to vector<34x64xf32>
    %114 = arith.mulf %109, %113 : vector<34x64xf32>
    %115 = arith.addf %108, %114 : vector<34x64xf32>
    %c2_73 = arith.constant 2 : index
    %c12_74 = arith.constant 12 : index
    %116 = vector.load %arg10[%c2_73, %c12_74] : memref<38x80xf32, #tpu.memory_space<vmem>>, vector<34x64xf32>
    %c2_75 = arith.constant 2 : index
    %c3_76 = arith.constant 3 : index
    %c0_77 = arith.constant 0 : index
    %117 = vector.load %arg3[%c2_75, %c3_76, %c0_77] : memref<5x5x64xf32, #tpu.memory_space<vmem>>, vector<1x1x64xf32>
    %118 = vector.shape_cast %117 : vector<1x1x64xf32> to vector<64xf32>
    %119 = vector.shape_cast %118 : vector<64xf32> to vector<1x64xf32>
    %120 = vector.broadcast %119 : vector<1x64xf32> to vector<34x64xf32>
    %121 = arith.mulf %116, %120 : vector<34x64xf32>
    %122 = arith.addf %115, %121 : vector<34x64xf32>
    %c2_78 = arith.constant 2 : index
    %c16_79 = arith.constant 16 : index
    %123 = vector.load %arg10[%c2_78, %c16_79] : memref<38x80xf32, #tpu.memory_space<vmem>>, vector<34x64xf32>
    %c2_80 = arith.constant 2 : index
    %c4_81 = arith.constant 4 : index
    %c0_82 = arith.constant 0 : index
    %124 = vector.load %arg3[%c2_80, %c4_81, %c0_82] : memref<5x5x64xf32, #tpu.memory_space<vmem>>, vector<1x1x64xf32>
    %125 = vector.shape_cast %124 : vector<1x1x64xf32> to vector<64xf32>
    %126 = vector.shape_cast %125 : vector<64xf32> to vector<1x64xf32>
    %127 = vector.broadcast %126 : vector<1x64xf32> to vector<34x64xf32>
    %128 = arith.mulf %123, %127 : vector<34x64xf32>
    %129 = arith.addf %122, %128 : vector<34x64xf32>
    %c3_83 = arith.constant 3 : index
    %c0_84 = arith.constant 0 : index
    %130 = vector.load %arg10[%c3_83, %c0_84] : memref<38x80xf32, #tpu.memory_space<vmem>>, vector<34x64xf32>
    %c3_85 = arith.constant 3 : index
    %c0_86 = arith.constant 0 : index
    %c0_87 = arith.constant 0 : index
    %131 = vector.load %arg3[%c3_85, %c0_86, %c0_87] : memref<5x5x64xf32, #tpu.memory_space<vmem>>, vector<1x1x64xf32>
    %132 = vector.shape_cast %131 : vector<1x1x64xf32> to vector<64xf32>
    %133 = vector.shape_cast %132 : vector<64xf32> to vector<1x64xf32>
    %134 = vector.broadcast %133 : vector<1x64xf32> to vector<34x64xf32>
    %135 = arith.mulf %130, %134 : vector<34x64xf32>
    %136 = arith.addf %129, %135 : vector<34x64xf32>
    %c3_88 = arith.constant 3 : index
    %c4_89 = arith.constant 4 : index
    %137 = vector.load %arg10[%c3_88, %c4_89] : memref<38x80xf32, #tpu.memory_space<vmem>>, vector<34x64xf32>
    %c3_90 = arith.constant 3 : index
    %c1_91 = arith.constant 1 : index
    %c0_92 = arith.constant 0 : index
    %138 = vector.load %arg3[%c3_90, %c1_91, %c0_92] : memref<5x5x64xf32, #tpu.memory_space<vmem>>, vector<1x1x64xf32>
    %139 = vector.shape_cast %138 : vector<1x1x64xf32> to vector<64xf32>
    %140 = vector.shape_cast %139 : vector<64xf32> to vector<1x64xf32>
    %141 = vector.broadcast %140 : vector<1x64xf32> to vector<34x64xf32>
    %142 = arith.mulf %137, %141 : vector<34x64xf32>
    %143 = arith.addf %136, %142 : vector<34x64xf32>
    %c3_93 = arith.constant 3 : index
    %c8_94 = arith.constant 8 : index
    %144 = vector.load %arg10[%c3_93, %c8_94] : memref<38x80xf32, #tpu.memory_space<vmem>>, vector<34x64xf32>
    %c3_95 = arith.constant 3 : index
    %c2_96 = arith.constant 2 : index
    %c0_97 = arith.constant 0 : index
    %145 = vector.load %arg3[%c3_95, %c2_96, %c0_97] : memref<5x5x64xf32, #tpu.memory_space<vmem>>, vector<1x1x64xf32>
    %146 = vector.shape_cast %145 : vector<1x1x64xf32> to vector<64xf32>
    %147 = vector.shape_cast %146 : vector<64xf32> to vector<1x64xf32>
    %148 = vector.broadcast %147 : vector<1x64xf32> to vector<34x64xf32>
    %149 = arith.mulf %144, %148 : vector<34x64xf32>
    %150 = arith.addf %143, %149 : vector<34x64xf32>
    %c3_98 = arith.constant 3 : index
    %c12_99 = arith.constant 12 : index
    %151 = vector.load %arg10[%c3_98, %c12_99] : memref<38x80xf32, #tpu.memory_space<vmem>>, vector<34x64xf32>
    %c3_100 = arith.constant 3 : index
    %c3_101 = arith.constant 3 : index
    %c0_102 = arith.constant 0 : index
    %152 = vector.load %arg3[%c3_100, %c3_101, %c0_102] : memref<5x5x64xf32, #tpu.memory_space<vmem>>, vector<1x1x64xf32>
    %153 = vector.shape_cast %152 : vector<1x1x64xf32> to vector<64xf32>
    %154 = vector.shape_cast %153 : vector<64xf32> to vector<1x64xf32>
    %155 = vector.broadcast %154 : vector<1x64xf32> to vector<34x64xf32>
    %156 = arith.mulf %151, %155 : vector<34x64xf32>
    %157 = arith.addf %150, %156 : vector<34x64xf32>
    %c3_103 = arith.constant 3 : index
    %c16_104 = arith.constant 16 : index
    %158 = vector.load %arg10[%c3_103, %c16_104] : memref<38x80xf32, #tpu.memory_space<vmem>>, vector<34x64xf32>
    %c3_105 = arith.constant 3 : index
    %c4_106 = arith.constant 4 : index
    %c0_107 = arith.constant 0 : index
    %159 = vector.load %arg3[%c3_105, %c4_106, %c0_107] : memref<5x5x64xf32, #tpu.memory_space<vmem>>, vector<1x1x64xf32>
    %160 = vector.shape_cast %159 : vector<1x1x64xf32> to vector<64xf32>
    %161 = vector.shape_cast %160 : vector<64xf32> to vector<1x64xf32>
    %162 = vector.broadcast %161 : vector<1x64xf32> to vector<34x64xf32>
    %163 = arith.mulf %158, %162 : vector<34x64xf32>
    %164 = arith.addf %157, %163 : vector<34x64xf32>
    %c4_108 = arith.constant 4 : index
    %c0_109 = arith.constant 0 : index
    %165 = vector.load %arg10[%c4_108, %c0_109] : memref<38x80xf32, #tpu.memory_space<vmem>>, vector<34x64xf32>
    %c4_110 = arith.constant 4 : index
    %c0_111 = arith.constant 0 : index
    %c0_112 = arith.constant 0 : index
    %166 = vector.load %arg3[%c4_110, %c0_111, %c0_112] : memref<5x5x64xf32, #tpu.memory_space<vmem>>, vector<1x1x64xf32>
    %167 = vector.shape_cast %166 : vector<1x1x64xf32> to vector<64xf32>
    %168 = vector.shape_cast %167 : vector<64xf32> to vector<1x64xf32>
    %169 = vector.broadcast %168 : vector<1x64xf32> to vector<34x64xf32>
    %170 = arith.mulf %165, %169 : vector<34x64xf32>
    %171 = arith.addf %164, %170 : vector<34x64xf32>
    %c4_113 = arith.constant 4 : index
    %c4_114 = arith.constant 4 : index
    %172 = vector.load %arg10[%c4_113, %c4_114] : memref<38x80xf32, #tpu.memory_space<vmem>>, vector<34x64xf32>
    %c4_115 = arith.constant 4 : index
    %c1_116 = arith.constant 1 : index
    %c0_117 = arith.constant 0 : index
    %173 = vector.load %arg3[%c4_115, %c1_116, %c0_117] : memref<5x5x64xf32, #tpu.memory_space<vmem>>, vector<1x1x64xf32>
    %174 = vector.shape_cast %173 : vector<1x1x64xf32> to vector<64xf32>
    %175 = vector.shape_cast %174 : vector<64xf32> to vector<1x64xf32>
    %176 = vector.broadcast %175 : vector<1x64xf32> to vector<34x64xf32>
    %177 = arith.mulf %172, %176 : vector<34x64xf32>
    %178 = arith.addf %171, %177 : vector<34x64xf32>
    %c4_118 = arith.constant 4 : index
    %c8_119 = arith.constant 8 : index
    %179 = vector.load %arg10[%c4_118, %c8_119] : memref<38x80xf32, #tpu.memory_space<vmem>>, vector<34x64xf32>
    %c4_120 = arith.constant 4 : index
    %c2_121 = arith.constant 2 : index
    %c0_122 = arith.constant 0 : index
    %180 = vector.load %arg3[%c4_120, %c2_121, %c0_122] : memref<5x5x64xf32, #tpu.memory_space<vmem>>, vector<1x1x64xf32>
    %181 = vector.shape_cast %180 : vector<1x1x64xf32> to vector<64xf32>
    %182 = vector.shape_cast %181 : vector<64xf32> to vector<1x64xf32>
    %183 = vector.broadcast %182 : vector<1x64xf32> to vector<34x64xf32>
    %184 = arith.mulf %179, %183 : vector<34x64xf32>
    %185 = arith.addf %178, %184 : vector<34x64xf32>
    %c4_123 = arith.constant 4 : index
    %c12_124 = arith.constant 12 : index
    %186 = vector.load %arg10[%c4_123, %c12_124] : memref<38x80xf32, #tpu.memory_space<vmem>>, vector<34x64xf32>
    %c4_125 = arith.constant 4 : index
    %c3_126 = arith.constant 3 : index
    %c0_127 = arith.constant 0 : index
    %187 = vector.load %arg3[%c4_125, %c3_126, %c0_127] : memref<5x5x64xf32, #tpu.memory_space<vmem>>, vector<1x1x64xf32>
    %188 = vector.shape_cast %187 : vector<1x1x64xf32> to vector<64xf32>
    %189 = vector.shape_cast %188 : vector<64xf32> to vector<1x64xf32>
    %190 = vector.broadcast %189 : vector<1x64xf32> to vector<34x64xf32>
    %191 = arith.mulf %186, %190 : vector<34x64xf32>
    %192 = arith.addf %185, %191 : vector<34x64xf32>
    %c4_128 = arith.constant 4 : index
    %c16_129 = arith.constant 16 : index
    %193 = vector.load %arg10[%c4_128, %c16_129] : memref<38x80xf32, #tpu.memory_space<vmem>>, vector<34x64xf32>
    %c4_130 = arith.constant 4 : index
    %c4_131 = arith.constant 4 : index
    %c0_132 = arith.constant 0 : index
    %194 = vector.load %arg3[%c4_130, %c4_131, %c0_132] : memref<5x5x64xf32, #tpu.memory_space<vmem>>, vector<1x1x64xf32>
    %195 = vector.shape_cast %194 : vector<1x1x64xf32> to vector<64xf32>
    %196 = vector.shape_cast %195 : vector<64xf32> to vector<1x64xf32>
    %197 = vector.broadcast %196 : vector<1x64xf32> to vector<34x64xf32>
    %198 = arith.mulf %193, %197 : vector<34x64xf32>
    %199 = arith.addf %192, %198 : vector<34x64xf32>
    %cst_133 = arith.constant 0.000000e+00 : f32
    %200 = vector.broadcast %cst_133 : f32 to vector<34x36xf32>
    %c0_134 = arith.constant 0 : index
    %c0_135 = arith.constant 0 : index
    %201 = vector.load %arg11[%c0_134, %c0_135] : memref<34x136xf32, #tpu.memory_space<vmem>>, vector<34x36xf32>
    tpu.vector_store %arg11[%c0_134, %c0_135], %200 {strides = array<i32>} : memref<34x136xf32, #tpu.memory_space<vmem>>, vector<34x36xf32>,
    %cst_136 = arith.constant 0.000000e+00 : f32
    %202 = vector.broadcast %cst_136 : f32 to vector<34x36xf32>
    %c0_137 = arith.constant 0 : index
    %c100 = arith.constant 100 : index
    %203 = vector.load %arg11[%c0_137, %c100] : memref<34x136xf32, #tpu.memory_space<vmem>>, vector<34x36xf32>
    tpu.vector_store %arg11[%c0_137, %c100], %202 {strides = array<i32>} : memref<34x136xf32, #tpu.memory_space<vmem>>, vector<34x36xf32>,
    %c0_138 = arith.constant 0 : index
    %c36 = arith.constant 36 : index
    %204 = vector.load %arg11[%c0_138, %c36] : memref<34x136xf32, #tpu.memory_space<vmem>>, vector<34x64xf32>
    tpu.vector_store %arg11[%c0_138, %c36], %199 {strides = array<i32>} : memref<34x136xf32, #tpu.memory_space<vmem>>, vector<34x64xf32>,
    %c0_i32_139 = arith.constant 0 : i32
    %205 = arith.cmpi eq, %arg1, %c0_i32_139 : i32
    %206 = arith.extui %205 : i1 to i32
    %c0_i32_140 = arith.constant 0 : i32
    %207 = arith.cmpi ne, %206, %c0_i32_140 : i32
    scf.if %207 {
      %cst_409 = arith.constant 0.000000e+00 : f32
      %627 = vector.broadcast %cst_409 : f32 to vector<9x64xf32>
      %c0_410 = arith.constant 0 : index
      %c36_411 = arith.constant 36 : index
      %628 = vector.load %arg11[%c0_410, %c36_411] : memref<34x136xf32, #tpu.memory_space<vmem>>, vector<9x64xf32>
      tpu.vector_store %arg11[%c0_410, %c36_411], %627 {strides = array<i32>} : memref<34x136xf32, #tpu.memory_space<vmem>>, vector<9x64xf32>,
    } else {
    }
    %c0_i32_141 = arith.constant 0 : i32
    %208 = arith.cmpi eq, %arg1, %c0_i32_141 : i32
    %209 = arith.extui %208 : i1 to i32
    %c0_i32_142 = arith.constant 0 : i32
    %210 = arith.cmpi ne, %209, %c0_i32_142 : i32
    scf.if %210 {
      %cst_409 = arith.constant 0.000000e+00 : f32
      %627 = vector.broadcast %cst_409 : f32 to vector<9x64xf32>
      %c25 = arith.constant 25 : index
      %c36_410 = arith.constant 36 : index
      %628 = vector.load %arg11[%c25, %c36_410] : memref<34x136xf32, #tpu.memory_space<vmem>>, vector<9x64xf32>
      tpu.vector_store %arg11[%c25, %c36_410], %627 {strides = array<i32>} : memref<34x136xf32, #tpu.memory_space<vmem>>, vector<9x64xf32>,
    } else {
    }
    %c0_143 = arith.constant 0 : index
    %c0_144 = arith.constant 0 : index
    %211 = vector.load %arg6[%c0_143, %c0_144] : memref<1x64xf32, #tpu.memory_space<vmem>>, vector<1x64xf32>
    %212 = vector.shape_cast %211 : vector<1x64xf32> to vector<1x64xf32>
    %213 = vector.broadcast %212 : vector<1x64xf32> to vector<16x64xf32>
    %c0_145 = arith.constant 0 : index
    %c0_146 = arith.constant 0 : index
    %214 = vector.load %arg11[%c0_145, %c0_146] : memref<34x136xf32, #tpu.memory_space<vmem>>, vector<16x64xf32>
    %c0_147 = arith.constant 0 : index
    %c0_148 = arith.constant 0 : index
    %c0_149 = arith.constant 0 : index
    %215 = vector.load %arg5[%c0_147, %c0_148, %c0_149] : memref<7x7x64xf32, #tpu.memory_space<vmem>>, vector<1x1x64xf32>
    %216 = vector.shape_cast %215 : vector<1x1x64xf32> to vector<64xf32>
    %217 = vector.shape_cast %216 : vector<64xf32> to vector<1x64xf32>
    %218 = vector.broadcast %217 : vector<1x64xf32> to vector<16x64xf32>
    %219 = arith.mulf %214, %218 : vector<16x64xf32>
    %220 = arith.addf %213, %219 : vector<16x64xf32>
    %c0_150 = arith.constant 0 : index
    %c12_151 = arith.constant 12 : index
    %221 = vector.load %arg11[%c0_150, %c12_151] : memref<34x136xf32, #tpu.memory_space<vmem>>, vector<16x64xf32>
    %c0_152 = arith.constant 0 : index
    %c1_153 = arith.constant 1 : index
    %c0_154 = arith.constant 0 : index
    %222 = vector.load %arg5[%c0_152, %c1_153, %c0_154] : memref<7x7x64xf32, #tpu.memory_space<vmem>>, vector<1x1x64xf32>
    %223 = vector.shape_cast %222 : vector<1x1x64xf32> to vector<64xf32>
    %224 = vector.shape_cast %223 : vector<64xf32> to vector<1x64xf32>
    %225 = vector.broadcast %224 : vector<1x64xf32> to vector<16x64xf32>
    %226 = arith.mulf %221, %225 : vector<16x64xf32>
    %227 = arith.addf %220, %226 : vector<16x64xf32>
    %c0_155 = arith.constant 0 : index
    %c24 = arith.constant 24 : index
    %228 = vector.load %arg11[%c0_155, %c24] : memref<34x136xf32, #tpu.memory_space<vmem>>, vector<16x64xf32>
    %c0_156 = arith.constant 0 : index
    %c2_157 = arith.constant 2 : index
    %c0_158 = arith.constant 0 : index
    %229 = vector.load %arg5[%c0_156, %c2_157, %c0_158] : memref<7x7x64xf32, #tpu.memory_space<vmem>>, vector<1x1x64xf32>
    %230 = vector.shape_cast %229 : vector<1x1x64xf32> to vector<64xf32>
    %231 = vector.shape_cast %230 : vector<64xf32> to vector<1x64xf32>
    %232 = vector.broadcast %231 : vector<1x64xf32> to vector<16x64xf32>
    %233 = arith.mulf %228, %232 : vector<16x64xf32>
    %234 = arith.addf %227, %233 : vector<16x64xf32>
    %c0_159 = arith.constant 0 : index
    %c36_160 = arith.constant 36 : index
    %235 = vector.load %arg11[%c0_159, %c36_160] : memref<34x136xf32, #tpu.memory_space<vmem>>, vector<16x64xf32>
    %c0_161 = arith.constant 0 : index
    %c3_162 = arith.constant 3 : index
    %c0_163 = arith.constant 0 : index
    %236 = vector.load %arg5[%c0_161, %c3_162, %c0_163] : memref<7x7x64xf32, #tpu.memory_space<vmem>>, vector<1x1x64xf32>
    %237 = vector.shape_cast %236 : vector<1x1x64xf32> to vector<64xf32>
    %238 = vector.shape_cast %237 : vector<64xf32> to vector<1x64xf32>
    %239 = vector.broadcast %238 : vector<1x64xf32> to vector<16x64xf32>
    %240 = arith.mulf %235, %239 : vector<16x64xf32>
    %241 = arith.addf %234, %240 : vector<16x64xf32>
    %c0_164 = arith.constant 0 : index
    %c48 = arith.constant 48 : index
    %242 = vector.load %arg11[%c0_164, %c48] : memref<34x136xf32, #tpu.memory_space<vmem>>, vector<16x64xf32>
    %c0_165 = arith.constant 0 : index
    %c4_166 = arith.constant 4 : index
    %c0_167 = arith.constant 0 : index
    %243 = vector.load %arg5[%c0_165, %c4_166, %c0_167] : memref<7x7x64xf32, #tpu.memory_space<vmem>>, vector<1x1x64xf32>
    %244 = vector.shape_cast %243 : vector<1x1x64xf32> to vector<64xf32>
    %245 = vector.shape_cast %244 : vector<64xf32> to vector<1x64xf32>
    %246 = vector.broadcast %245 : vector<1x64xf32> to vector<16x64xf32>
    %247 = arith.mulf %242, %246 : vector<16x64xf32>
    %248 = arith.addf %241, %247 : vector<16x64xf32>
    %c0_168 = arith.constant 0 : index
    %c60 = arith.constant 60 : index
    %249 = vector.load %arg11[%c0_168, %c60] : memref<34x136xf32, #tpu.memory_space<vmem>>, vector<16x64xf32>
    %c0_169 = arith.constant 0 : index
    %c5 = arith.constant 5 : index
    %c0_170 = arith.constant 0 : index
    %250 = vector.load %arg5[%c0_169, %c5, %c0_170] : memref<7x7x64xf32, #tpu.memory_space<vmem>>, vector<1x1x64xf32>
    %251 = vector.shape_cast %250 : vector<1x1x64xf32> to vector<64xf32>
    %252 = vector.shape_cast %251 : vector<64xf32> to vector<1x64xf32>
    %253 = vector.broadcast %252 : vector<1x64xf32> to vector<16x64xf32>
    %254 = arith.mulf %249, %253 : vector<16x64xf32>
    %255 = arith.addf %248, %254 : vector<16x64xf32>
    %c0_171 = arith.constant 0 : index
    %c72_172 = arith.constant 72 : index
    %256 = vector.load %arg11[%c0_171, %c72_172] : memref<34x136xf32, #tpu.memory_space<vmem>>, vector<16x64xf32>
    %c0_173 = arith.constant 0 : index
    %c6 = arith.constant 6 : index
    %c0_174 = arith.constant 0 : index
    %257 = vector.load %arg5[%c0_173, %c6, %c0_174] : memref<7x7x64xf32, #tpu.memory_space<vmem>>, vector<1x1x64xf32>
    %258 = vector.shape_cast %257 : vector<1x1x64xf32> to vector<64xf32>
    %259 = vector.shape_cast %258 : vector<64xf32> to vector<1x64xf32>
    %260 = vector.broadcast %259 : vector<1x64xf32> to vector<16x64xf32>
    %261 = arith.mulf %256, %260 : vector<16x64xf32>
    %262 = arith.addf %255, %261 : vector<16x64xf32>
    %c3_175 = arith.constant 3 : index
    %c0_176 = arith.constant 0 : index
    %263 = vector.load %arg11[%c3_175, %c0_176] : memref<34x136xf32, #tpu.memory_space<vmem>>, vector<16x64xf32>
    %c1_177 = arith.constant 1 : index
    %c0_178 = arith.constant 0 : index
    %c0_179 = arith.constant 0 : index
    %264 = vector.load %arg5[%c1_177, %c0_178, %c0_179] : memref<7x7x64xf32, #tpu.memory_space<vmem>>, vector<1x1x64xf32>
    %265 = vector.shape_cast %264 : vector<1x1x64xf32> to vector<64xf32>
    %266 = vector.shape_cast %265 : vector<64xf32> to vector<1x64xf32>
    %267 = vector.broadcast %266 : vector<1x64xf32> to vector<16x64xf32>
    %268 = arith.mulf %263, %267 : vector<16x64xf32>
    %269 = arith.addf %262, %268 : vector<16x64xf32>
    %c3_180 = arith.constant 3 : index
    %c12_181 = arith.constant 12 : index
    %270 = vector.load %arg11[%c3_180, %c12_181] : memref<34x136xf32, #tpu.memory_space<vmem>>, vector<16x64xf32>
    %c1_182 = arith.constant 1 : index
    %c1_183 = arith.constant 1 : index
    %c0_184 = arith.constant 0 : index
    %271 = vector.load %arg5[%c1_182, %c1_183, %c0_184] : memref<7x7x64xf32, #tpu.memory_space<vmem>>, vector<1x1x64xf32>
    %272 = vector.shape_cast %271 : vector<1x1x64xf32> to vector<64xf32>
    %273 = vector.shape_cast %272 : vector<64xf32> to vector<1x64xf32>
    %274 = vector.broadcast %273 : vector<1x64xf32> to vector<16x64xf32>
    %275 = arith.mulf %270, %274 : vector<16x64xf32>
    %276 = arith.addf %269, %275 : vector<16x64xf32>
    %c3_185 = arith.constant 3 : index
    %c24_186 = arith.constant 24 : index
    %277 = vector.load %arg11[%c3_185, %c24_186] : memref<34x136xf32, #tpu.memory_space<vmem>>, vector<16x64xf32>
    %c1_187 = arith.constant 1 : index
    %c2_188 = arith.constant 2 : index
    %c0_189 = arith.constant 0 : index
    %278 = vector.load %arg5[%c1_187, %c2_188, %c0_189] : memref<7x7x64xf32, #tpu.memory_space<vmem>>, vector<1x1x64xf32>
    %279 = vector.shape_cast %278 : vector<1x1x64xf32> to vector<64xf32>
    %280 = vector.shape_cast %279 : vector<64xf32> to vector<1x64xf32>
    %281 = vector.broadcast %280 : vector<1x64xf32> to vector<16x64xf32>
    %282 = arith.mulf %277, %281 : vector<16x64xf32>
    %283 = arith.addf %276, %282 : vector<16x64xf32>
    %c3_190 = arith.constant 3 : index
    %c36_191 = arith.constant 36 : index
    %284 = vector.load %arg11[%c3_190, %c36_191] : memref<34x136xf32, #tpu.memory_space<vmem>>, vector<16x64xf32>
    %c1_192 = arith.constant 1 : index
    %c3_193 = arith.constant 3 : index
    %c0_194 = arith.constant 0 : index
    %285 = vector.load %arg5[%c1_192, %c3_193, %c0_194] : memref<7x7x64xf32, #tpu.memory_space<vmem>>, vector<1x1x64xf32>
    %286 = vector.shape_cast %285 : vector<1x1x64xf32> to vector<64xf32>
    %287 = vector.shape_cast %286 : vector<64xf32> to vector<1x64xf32>
    %288 = vector.broadcast %287 : vector<1x64xf32> to vector<16x64xf32>
    %289 = arith.mulf %284, %288 : vector<16x64xf32>
    %290 = arith.addf %283, %289 : vector<16x64xf32>
    %c3_195 = arith.constant 3 : index
    %c48_196 = arith.constant 48 : index
    %291 = vector.load %arg11[%c3_195, %c48_196] : memref<34x136xf32, #tpu.memory_space<vmem>>, vector<16x64xf32>
    %c1_197 = arith.constant 1 : index
    %c4_198 = arith.constant 4 : index
    %c0_199 = arith.constant 0 : index
    %292 = vector.load %arg5[%c1_197, %c4_198, %c0_199] : memref<7x7x64xf32, #tpu.memory_space<vmem>>, vector<1x1x64xf32>
    %293 = vector.shape_cast %292 : vector<1x1x64xf32> to vector<64xf32>
    %294 = vector.shape_cast %293 : vector<64xf32> to vector<1x64xf32>
    %295 = vector.broadcast %294 : vector<1x64xf32> to vector<16x64xf32>
    %296 = arith.mulf %291, %295 : vector<16x64xf32>
    %297 = arith.addf %290, %296 : vector<16x64xf32>
    %c3_200 = arith.constant 3 : index
    %c60_201 = arith.constant 60 : index
    %298 = vector.load %arg11[%c3_200, %c60_201] : memref<34x136xf32, #tpu.memory_space<vmem>>, vector<16x64xf32>
    %c1_202 = arith.constant 1 : index
    %c5_203 = arith.constant 5 : index
    %c0_204 = arith.constant 0 : index
    %299 = vector.load %arg5[%c1_202, %c5_203, %c0_204] : memref<7x7x64xf32, #tpu.memory_space<vmem>>, vector<1x1x64xf32>
    %300 = vector.shape_cast %299 : vector<1x1x64xf32> to vector<64xf32>
    %301 = vector.shape_cast %300 : vector<64xf32> to vector<1x64xf32>
    %302 = vector.broadcast %301 : vector<1x64xf32> to vector<16x64xf32>
    %303 = arith.mulf %298, %302 : vector<16x64xf32>
    %304 = arith.addf %297, %303 : vector<16x64xf32>
    %c3_205 = arith.constant 3 : index
    %c72_206 = arith.constant 72 : index
    %305 = vector.load %arg11[%c3_205, %c72_206] : memref<34x136xf32, #tpu.memory_space<vmem>>, vector<16x64xf32>
    %c1_207 = arith.constant 1 : index
    %c6_208 = arith.constant 6 : index
    %c0_209 = arith.constant 0 : index
    %306 = vector.load %arg5[%c1_207, %c6_208, %c0_209] : memref<7x7x64xf32, #tpu.memory_space<vmem>>, vector<1x1x64xf32>
    %307 = vector.shape_cast %306 : vector<1x1x64xf32> to vector<64xf32>
    %308 = vector.shape_cast %307 : vector<64xf32> to vector<1x64xf32>
    %309 = vector.broadcast %308 : vector<1x64xf32> to vector<16x64xf32>
    %310 = arith.mulf %305, %309 : vector<16x64xf32>
    %311 = arith.addf %304, %310 : vector<16x64xf32>
    %c6_210 = arith.constant 6 : index
    %c0_211 = arith.constant 0 : index
    %312 = vector.load %arg11[%c6_210, %c0_211] : memref<34x136xf32, #tpu.memory_space<vmem>>, vector<16x64xf32>
    %c2_212 = arith.constant 2 : index
    %c0_213 = arith.constant 0 : index
    %c0_214 = arith.constant 0 : index
    %313 = vector.load %arg5[%c2_212, %c0_213, %c0_214] : memref<7x7x64xf32, #tpu.memory_space<vmem>>, vector<1x1x64xf32>
    %314 = vector.shape_cast %313 : vector<1x1x64xf32> to vector<64xf32>
    %315 = vector.shape_cast %314 : vector<64xf32> to vector<1x64xf32>
    %316 = vector.broadcast %315 : vector<1x64xf32> to vector<16x64xf32>
    %317 = arith.mulf %312, %316 : vector<16x64xf32>
    %318 = arith.addf %311, %317 : vector<16x64xf32>
    %c6_215 = arith.constant 6 : index
    %c12_216 = arith.constant 12 : index
    %319 = vector.load %arg11[%c6_215, %c12_216] : memref<34x136xf32, #tpu.memory_space<vmem>>, vector<16x64xf32>
    %c2_217 = arith.constant 2 : index
    %c1_218 = arith.constant 1 : index
    %c0_219 = arith.constant 0 : index
    %320 = vector.load %arg5[%c2_217, %c1_218, %c0_219] : memref<7x7x64xf32, #tpu.memory_space<vmem>>, vector<1x1x64xf32>
    %321 = vector.shape_cast %320 : vector<1x1x64xf32> to vector<64xf32>
    %322 = vector.shape_cast %321 : vector<64xf32> to vector<1x64xf32>
    %323 = vector.broadcast %322 : vector<1x64xf32> to vector<16x64xf32>
    %324 = arith.mulf %319, %323 : vector<16x64xf32>
    %325 = arith.addf %318, %324 : vector<16x64xf32>
    %c6_220 = arith.constant 6 : index
    %c24_221 = arith.constant 24 : index
    %326 = vector.load %arg11[%c6_220, %c24_221] : memref<34x136xf32, #tpu.memory_space<vmem>>, vector<16x64xf32>
    %c2_222 = arith.constant 2 : index
    %c2_223 = arith.constant 2 : index
    %c0_224 = arith.constant 0 : index
    %327 = vector.load %arg5[%c2_222, %c2_223, %c0_224] : memref<7x7x64xf32, #tpu.memory_space<vmem>>, vector<1x1x64xf32>
    %328 = vector.shape_cast %327 : vector<1x1x64xf32> to vector<64xf32>
    %329 = vector.shape_cast %328 : vector<64xf32> to vector<1x64xf32>
    %330 = vector.broadcast %329 : vector<1x64xf32> to vector<16x64xf32>
    %331 = arith.mulf %326, %330 : vector<16x64xf32>
    %332 = arith.addf %325, %331 : vector<16x64xf32>
    %c6_225 = arith.constant 6 : index
    %c36_226 = arith.constant 36 : index
    %333 = vector.load %arg11[%c6_225, %c36_226] : memref<34x136xf32, #tpu.memory_space<vmem>>, vector<16x64xf32>
    %c2_227 = arith.constant 2 : index
    %c3_228 = arith.constant 3 : index
    %c0_229 = arith.constant 0 : index
    %334 = vector.load %arg5[%c2_227, %c3_228, %c0_229] : memref<7x7x64xf32, #tpu.memory_space<vmem>>, vector<1x1x64xf32>
    %335 = vector.shape_cast %334 : vector<1x1x64xf32> to vector<64xf32>
    %336 = vector.shape_cast %335 : vector<64xf32> to vector<1x64xf32>
    %337 = vector.broadcast %336 : vector<1x64xf32> to vector<16x64xf32>
    %338 = arith.mulf %333, %337 : vector<16x64xf32>
    %339 = arith.addf %332, %338 : vector<16x64xf32>
    %c6_230 = arith.constant 6 : index
    %c48_231 = arith.constant 48 : index
    %340 = vector.load %arg11[%c6_230, %c48_231] : memref<34x136xf32, #tpu.memory_space<vmem>>, vector<16x64xf32>
    %c2_232 = arith.constant 2 : index
    %c4_233 = arith.constant 4 : index
    %c0_234 = arith.constant 0 : index
    %341 = vector.load %arg5[%c2_232, %c4_233, %c0_234] : memref<7x7x64xf32, #tpu.memory_space<vmem>>, vector<1x1x64xf32>
    %342 = vector.shape_cast %341 : vector<1x1x64xf32> to vector<64xf32>
    %343 = vector.shape_cast %342 : vector<64xf32> to vector<1x64xf32>
    %344 = vector.broadcast %343 : vector<1x64xf32> to vector<16x64xf32>
    %345 = arith.mulf %340, %344 : vector<16x64xf32>
    %346 = arith.addf %339, %345 : vector<16x64xf32>
    %c6_235 = arith.constant 6 : index
    %c60_236 = arith.constant 60 : index
    %347 = vector.load %arg11[%c6_235, %c60_236] : memref<34x136xf32, #tpu.memory_space<vmem>>, vector<16x64xf32>
    %c2_237 = arith.constant 2 : index
    %c5_238 = arith.constant 5 : index
    %c0_239 = arith.constant 0 : index
    %348 = vector.load %arg5[%c2_237, %c5_238, %c0_239] : memref<7x7x64xf32, #tpu.memory_space<vmem>>, vector<1x1x64xf32>
    %349 = vector.shape_cast %348 : vector<1x1x64xf32> to vector<64xf32>
    %350 = vector.shape_cast %349 : vector<64xf32> to vector<1x64xf32>
    %351 = vector.broadcast %350 : vector<1x64xf32> to vector<16x64xf32>
    %352 = arith.mulf %347, %351 : vector<16x64xf32>
    %353 = arith.addf %346, %352 : vector<16x64xf32>
    %c6_240 = arith.constant 6 : index
    %c72_241 = arith.constant 72 : index
    %354 = vector.load %arg11[%c6_240, %c72_241] : memref<34x136xf32, #tpu.memory_space<vmem>>, vector<16x64xf32>
    %c2_242 = arith.constant 2 : index
    %c6_243 = arith.constant 6 : index
    %c0_244 = arith.constant 0 : index
    %355 = vector.load %arg5[%c2_242, %c6_243, %c0_244] : memref<7x7x64xf32, #tpu.memory_space<vmem>>, vector<1x1x64xf32>
    %356 = vector.shape_cast %355 : vector<1x1x64xf32> to vector<64xf32>
    %357 = vector.shape_cast %356 : vector<64xf32> to vector<1x64xf32>
    %358 = vector.broadcast %357 : vector<1x64xf32> to vector<16x64xf32>
    %359 = arith.mulf %354, %358 : vector<16x64xf32>
    %360 = arith.addf %353, %359 : vector<16x64xf32>
    %c9 = arith.constant 9 : index
    %c0_245 = arith.constant 0 : index
    %361 = vector.load %arg11[%c9, %c0_245] : memref<34x136xf32, #tpu.memory_space<vmem>>, vector<16x64xf32>
    %c3_246 = arith.constant 3 : index
    %c0_247 = arith.constant 0 : index
    %c0_248 = arith.constant 0 : index
    %362 = vector.load %arg5[%c3_246, %c0_247, %c0_248] : memref<7x7x64xf32, #tpu.memory_space<vmem>>, vector<1x1x64xf32>
    %363 = vector.shape_cast %362 : vector<1x1x64xf32> to vector<64xf32>
    %364 = vector.shape_cast %363 : vector<64xf32> to vector<1x64xf32>
    %365 = vector.broadcast %364 : vector<1x64xf32> to vector<16x64xf32>
    %366 = arith.mulf %361, %365 : vector<16x64xf32>
    %367 = arith.addf %360, %366 : vector<16x64xf32>
    %c9_249 = arith.constant 9 : index
    %c12_250 = arith.constant 12 : index
    %368 = vector.load %arg11[%c9_249, %c12_250] : memref<34x136xf32, #tpu.memory_space<vmem>>, vector<16x64xf32>
    %c3_251 = arith.constant 3 : index
    %c1_252 = arith.constant 1 : index
    %c0_253 = arith.constant 0 : index
    %369 = vector.load %arg5[%c3_251, %c1_252, %c0_253] : memref<7x7x64xf32, #tpu.memory_space<vmem>>, vector<1x1x64xf32>
    %370 = vector.shape_cast %369 : vector<1x1x64xf32> to vector<64xf32>
    %371 = vector.shape_cast %370 : vector<64xf32> to vector<1x64xf32>
    %372 = vector.broadcast %371 : vector<1x64xf32> to vector<16x64xf32>
    %373 = arith.mulf %368, %372 : vector<16x64xf32>
    %374 = arith.addf %367, %373 : vector<16x64xf32>
    %c9_254 = arith.constant 9 : index
    %c24_255 = arith.constant 24 : index
    %375 = vector.load %arg11[%c9_254, %c24_255] : memref<34x136xf32, #tpu.memory_space<vmem>>, vector<16x64xf32>
    %c3_256 = arith.constant 3 : index
    %c2_257 = arith.constant 2 : index
    %c0_258 = arith.constant 0 : index
    %376 = vector.load %arg5[%c3_256, %c2_257, %c0_258] : memref<7x7x64xf32, #tpu.memory_space<vmem>>, vector<1x1x64xf32>
    %377 = vector.shape_cast %376 : vector<1x1x64xf32> to vector<64xf32>
    %378 = vector.shape_cast %377 : vector<64xf32> to vector<1x64xf32>
    %379 = vector.broadcast %378 : vector<1x64xf32> to vector<16x64xf32>
    %380 = arith.mulf %375, %379 : vector<16x64xf32>
    %381 = arith.addf %374, %380 : vector<16x64xf32>
    %c9_259 = arith.constant 9 : index
    %c36_260 = arith.constant 36 : index
    %382 = vector.load %arg11[%c9_259, %c36_260] : memref<34x136xf32, #tpu.memory_space<vmem>>, vector<16x64xf32>
    %c3_261 = arith.constant 3 : index
    %c3_262 = arith.constant 3 : index
    %c0_263 = arith.constant 0 : index
    %383 = vector.load %arg5[%c3_261, %c3_262, %c0_263] : memref<7x7x64xf32, #tpu.memory_space<vmem>>, vector<1x1x64xf32>
    %384 = vector.shape_cast %383 : vector<1x1x64xf32> to vector<64xf32>
    %385 = vector.shape_cast %384 : vector<64xf32> to vector<1x64xf32>
    %386 = vector.broadcast %385 : vector<1x64xf32> to vector<16x64xf32>
    %387 = arith.mulf %382, %386 : vector<16x64xf32>
    %388 = arith.addf %381, %387 : vector<16x64xf32>
    %c9_264 = arith.constant 9 : index
    %c48_265 = arith.constant 48 : index
    %389 = vector.load %arg11[%c9_264, %c48_265] : memref<34x136xf32, #tpu.memory_space<vmem>>, vector<16x64xf32>
    %c3_266 = arith.constant 3 : index
    %c4_267 = arith.constant 4 : index
    %c0_268 = arith.constant 0 : index
    %390 = vector.load %arg5[%c3_266, %c4_267, %c0_268] : memref<7x7x64xf32, #tpu.memory_space<vmem>>, vector<1x1x64xf32>
    %391 = vector.shape_cast %390 : vector<1x1x64xf32> to vector<64xf32>
    %392 = vector.shape_cast %391 : vector<64xf32> to vector<1x64xf32>
    %393 = vector.broadcast %392 : vector<1x64xf32> to vector<16x64xf32>
    %394 = arith.mulf %389, %393 : vector<16x64xf32>
    %395 = arith.addf %388, %394 : vector<16x64xf32>
    %c9_269 = arith.constant 9 : index
    %c60_270 = arith.constant 60 : index
    %396 = vector.load %arg11[%c9_269, %c60_270] : memref<34x136xf32, #tpu.memory_space<vmem>>, vector<16x64xf32>
    %c3_271 = arith.constant 3 : index
    %c5_272 = arith.constant 5 : index
    %c0_273 = arith.constant 0 : index
    %397 = vector.load %arg5[%c3_271, %c5_272, %c0_273] : memref<7x7x64xf32, #tpu.memory_space<vmem>>, vector<1x1x64xf32>
    %398 = vector.shape_cast %397 : vector<1x1x64xf32> to vector<64xf32>
    %399 = vector.shape_cast %398 : vector<64xf32> to vector<1x64xf32>
    %400 = vector.broadcast %399 : vector<1x64xf32> to vector<16x64xf32>
    %401 = arith.mulf %396, %400 : vector<16x64xf32>
    %402 = arith.addf %395, %401 : vector<16x64xf32>
    %c9_274 = arith.constant 9 : index
    %c72_275 = arith.constant 72 : index
    %403 = vector.load %arg11[%c9_274, %c72_275] : memref<34x136xf32, #tpu.memory_space<vmem>>, vector<16x64xf32>
    %c3_276 = arith.constant 3 : index
    %c6_277 = arith.constant 6 : index
    %c0_278 = arith.constant 0 : index
    %404 = vector.load %arg5[%c3_276, %c6_277, %c0_278] : memref<7x7x64xf32, #tpu.memory_space<vmem>>, vector<1x1x64xf32>
    %405 = vector.shape_cast %404 : vector<1x1x64xf32> to vector<64xf32>
    %406 = vector.shape_cast %405 : vector<64xf32> to vector<1x64xf32>
    %407 = vector.broadcast %406 : vector<1x64xf32> to vector<16x64xf32>
    %408 = arith.mulf %403, %407 : vector<16x64xf32>
    %409 = arith.addf %402, %408 : vector<16x64xf32>
    %c12_279 = arith.constant 12 : index
    %c0_280 = arith.constant 0 : index
    %410 = vector.load %arg11[%c12_279, %c0_280] : memref<34x136xf32, #tpu.memory_space<vmem>>, vector<16x64xf32>
    %c4_281 = arith.constant 4 : index
    %c0_282 = arith.constant 0 : index
    %c0_283 = arith.constant 0 : index
    %411 = vector.load %arg5[%c4_281, %c0_282, %c0_283] : memref<7x7x64xf32, #tpu.memory_space<vmem>>, vector<1x1x64xf32>
    %412 = vector.shape_cast %411 : vector<1x1x64xf32> to vector<64xf32>
    %413 = vector.shape_cast %412 : vector<64xf32> to vector<1x64xf32>
    %414 = vector.broadcast %413 : vector<1x64xf32> to vector<16x64xf32>
    %415 = arith.mulf %410, %414 : vector<16x64xf32>
    %416 = arith.addf %409, %415 : vector<16x64xf32>
    %c12_284 = arith.constant 12 : index
    %c12_285 = arith.constant 12 : index
    %417 = vector.load %arg11[%c12_284, %c12_285] : memref<34x136xf32, #tpu.memory_space<vmem>>, vector<16x64xf32>
    %c4_286 = arith.constant 4 : index
    %c1_287 = arith.constant 1 : index
    %c0_288 = arith.constant 0 : index
    %418 = vector.load %arg5[%c4_286, %c1_287, %c0_288] : memref<7x7x64xf32, #tpu.memory_space<vmem>>, vector<1x1x64xf32>
    %419 = vector.shape_cast %418 : vector<1x1x64xf32> to vector<64xf32>
    %420 = vector.shape_cast %419 : vector<64xf32> to vector<1x64xf32>
    %421 = vector.broadcast %420 : vector<1x64xf32> to vector<16x64xf32>
    %422 = arith.mulf %417, %421 : vector<16x64xf32>
    %423 = arith.addf %416, %422 : vector<16x64xf32>
    %c12_289 = arith.constant 12 : index
    %c24_290 = arith.constant 24 : index
    %424 = vector.load %arg11[%c12_289, %c24_290] : memref<34x136xf32, #tpu.memory_space<vmem>>, vector<16x64xf32>
    %c4_291 = arith.constant 4 : index
    %c2_292 = arith.constant 2 : index
    %c0_293 = arith.constant 0 : index
    %425 = vector.load %arg5[%c4_291, %c2_292, %c0_293] : memref<7x7x64xf32, #tpu.memory_space<vmem>>, vector<1x1x64xf32>
    %426 = vector.shape_cast %425 : vector<1x1x64xf32> to vector<64xf32>
    %427 = vector.shape_cast %426 : vector<64xf32> to vector<1x64xf32>
    %428 = vector.broadcast %427 : vector<1x64xf32> to vector<16x64xf32>
    %429 = arith.mulf %424, %428 : vector<16x64xf32>
    %430 = arith.addf %423, %429 : vector<16x64xf32>
    %c12_294 = arith.constant 12 : index
    %c36_295 = arith.constant 36 : index
    %431 = vector.load %arg11[%c12_294, %c36_295] : memref<34x136xf32, #tpu.memory_space<vmem>>, vector<16x64xf32>
    %c4_296 = arith.constant 4 : index
    %c3_297 = arith.constant 3 : index
    %c0_298 = arith.constant 0 : index
    %432 = vector.load %arg5[%c4_296, %c3_297, %c0_298] : memref<7x7x64xf32, #tpu.memory_space<vmem>>, vector<1x1x64xf32>
    %433 = vector.shape_cast %432 : vector<1x1x64xf32> to vector<64xf32>
    %434 = vector.shape_cast %433 : vector<64xf32> to vector<1x64xf32>
    %435 = vector.broadcast %434 : vector<1x64xf32> to vector<16x64xf32>
    %436 = arith.mulf %431, %435 : vector<16x64xf32>
    %437 = arith.addf %430, %436 : vector<16x64xf32>
    %c12_299 = arith.constant 12 : index
    %c48_300 = arith.constant 48 : index
    %438 = vector.load %arg11[%c12_299, %c48_300] : memref<34x136xf32, #tpu.memory_space<vmem>>, vector<16x64xf32>
    %c4_301 = arith.constant 4 : index
    %c4_302 = arith.constant 4 : index
    %c0_303 = arith.constant 0 : index
    %439 = vector.load %arg5[%c4_301, %c4_302, %c0_303] : memref<7x7x64xf32, #tpu.memory_space<vmem>>, vector<1x1x64xf32>
    %440 = vector.shape_cast %439 : vector<1x1x64xf32> to vector<64xf32>
    %441 = vector.shape_cast %440 : vector<64xf32> to vector<1x64xf32>
    %442 = vector.broadcast %441 : vector<1x64xf32> to vector<16x64xf32>
    %443 = arith.mulf %438, %442 : vector<16x64xf32>
    %444 = arith.addf %437, %443 : vector<16x64xf32>
    %c12_304 = arith.constant 12 : index
    %c60_305 = arith.constant 60 : index
    %445 = vector.load %arg11[%c12_304, %c60_305] : memref<34x136xf32, #tpu.memory_space<vmem>>, vector<16x64xf32>
    %c4_306 = arith.constant 4 : index
    %c5_307 = arith.constant 5 : index
    %c0_308 = arith.constant 0 : index
    %446 = vector.load %arg5[%c4_306, %c5_307, %c0_308] : memref<7x7x64xf32, #tpu.memory_space<vmem>>, vector<1x1x64xf32>
    %447 = vector.shape_cast %446 : vector<1x1x64xf32> to vector<64xf32>
    %448 = vector.shape_cast %447 : vector<64xf32> to vector<1x64xf32>
    %449 = vector.broadcast %448 : vector<1x64xf32> to vector<16x64xf32>
    %450 = arith.mulf %445, %449 : vector<16x64xf32>
    %451 = arith.addf %444, %450 : vector<16x64xf32>
    %c12_309 = arith.constant 12 : index
    %c72_310 = arith.constant 72 : index
    %452 = vector.load %arg11[%c12_309, %c72_310] : memref<34x136xf32, #tpu.memory_space<vmem>>, vector<16x64xf32>
    %c4_311 = arith.constant 4 : index
    %c6_312 = arith.constant 6 : index
    %c0_313 = arith.constant 0 : index
    %453 = vector.load %arg5[%c4_311, %c6_312, %c0_313] : memref<7x7x64xf32, #tpu.memory_space<vmem>>, vector<1x1x64xf32>
    %454 = vector.shape_cast %453 : vector<1x1x64xf32> to vector<64xf32>
    %455 = vector.shape_cast %454 : vector<64xf32> to vector<1x64xf32>
    %456 = vector.broadcast %455 : vector<1x64xf32> to vector<16x64xf32>
    %457 = arith.mulf %452, %456 : vector<16x64xf32>
    %458 = arith.addf %451, %457 : vector<16x64xf32>
    %c15 = arith.constant 15 : index
    %c0_314 = arith.constant 0 : index
    %459 = vector.load %arg11[%c15, %c0_314] : memref<34x136xf32, #tpu.memory_space<vmem>>, vector<16x64xf32>
    %c5_315 = arith.constant 5 : index
    %c0_316 = arith.constant 0 : index
    %c0_317 = arith.constant 0 : index
    %460 = vector.load %arg5[%c5_315, %c0_316, %c0_317] : memref<7x7x64xf32, #tpu.memory_space<vmem>>, vector<1x1x64xf32>
    %461 = vector.shape_cast %460 : vector<1x1x64xf32> to vector<64xf32>
    %462 = vector.shape_cast %461 : vector<64xf32> to vector<1x64xf32>
    %463 = vector.broadcast %462 : vector<1x64xf32> to vector<16x64xf32>
    %464 = arith.mulf %459, %463 : vector<16x64xf32>
    %465 = arith.addf %458, %464 : vector<16x64xf32>
    %c15_318 = arith.constant 15 : index
    %c12_319 = arith.constant 12 : index
    %466 = vector.load %arg11[%c15_318, %c12_319] : memref<34x136xf32, #tpu.memory_space<vmem>>, vector<16x64xf32>
    %c5_320 = arith.constant 5 : index
    %c1_321 = arith.constant 1 : index
    %c0_322 = arith.constant 0 : index
    %467 = vector.load %arg5[%c5_320, %c1_321, %c0_322] : memref<7x7x64xf32, #tpu.memory_space<vmem>>, vector<1x1x64xf32>
    %468 = vector.shape_cast %467 : vector<1x1x64xf32> to vector<64xf32>
    %469 = vector.shape_cast %468 : vector<64xf32> to vector<1x64xf32>
    %470 = vector.broadcast %469 : vector<1x64xf32> to vector<16x64xf32>
    %471 = arith.mulf %466, %470 : vector<16x64xf32>
    %472 = arith.addf %465, %471 : vector<16x64xf32>
    %c15_323 = arith.constant 15 : index
    %c24_324 = arith.constant 24 : index
    %473 = vector.load %arg11[%c15_323, %c24_324] : memref<34x136xf32, #tpu.memory_space<vmem>>, vector<16x64xf32>
    %c5_325 = arith.constant 5 : index
    %c2_326 = arith.constant 2 : index
    %c0_327 = arith.constant 0 : index
    %474 = vector.load %arg5[%c5_325, %c2_326, %c0_327] : memref<7x7x64xf32, #tpu.memory_space<vmem>>, vector<1x1x64xf32>
    %475 = vector.shape_cast %474 : vector<1x1x64xf32> to vector<64xf32>
    %476 = vector.shape_cast %475 : vector<64xf32> to vector<1x64xf32>
    %477 = vector.broadcast %476 : vector<1x64xf32> to vector<16x64xf32>
    %478 = arith.mulf %473, %477 : vector<16x64xf32>
    %479 = arith.addf %472, %478 : vector<16x64xf32>
    %c15_328 = arith.constant 15 : index
    %c36_329 = arith.constant 36 : index
    %480 = vector.load %arg11[%c15_328, %c36_329] : memref<34x136xf32, #tpu.memory_space<vmem>>, vector<16x64xf32>
    %c5_330 = arith.constant 5 : index
    %c3_331 = arith.constant 3 : index
    %c0_332 = arith.constant 0 : index
    %481 = vector.load %arg5[%c5_330, %c3_331, %c0_332] : memref<7x7x64xf32, #tpu.memory_space<vmem>>, vector<1x1x64xf32>
    %482 = vector.shape_cast %481 : vector<1x1x64xf32> to vector<64xf32>
    %483 = vector.shape_cast %482 : vector<64xf32> to vector<1x64xf32>
    %484 = vector.broadcast %483 : vector<1x64xf32> to vector<16x64xf32>
    %485 = arith.mulf %480, %484 : vector<16x64xf32>
    %486 = arith.addf %479, %485 : vector<16x64xf32>
    %c15_333 = arith.constant 15 : index
    %c48_334 = arith.constant 48 : index
    %487 = vector.load %arg11[%c15_333, %c48_334] : memref<34x136xf32, #tpu.memory_space<vmem>>, vector<16x64xf32>
    %c5_335 = arith.constant 5 : index
    %c4_336 = arith.constant 4 : index
    %c0_337 = arith.constant 0 : index
    %488 = vector.load %arg5[%c5_335, %c4_336, %c0_337] : memref<7x7x64xf32, #tpu.memory_space<vmem>>, vector<1x1x64xf32>
    %489 = vector.shape_cast %488 : vector<1x1x64xf32> to vector<64xf32>
    %490 = vector.shape_cast %489 : vector<64xf32> to vector<1x64xf32>
    %491 = vector.broadcast %490 : vector<1x64xf32> to vector<16x64xf32>
    %492 = arith.mulf %487, %491 : vector<16x64xf32>
    %493 = arith.addf %486, %492 : vector<16x64xf32>
    %c15_338 = arith.constant 15 : index
    %c60_339 = arith.constant 60 : index
    %494 = vector.load %arg11[%c15_338, %c60_339] : memref<34x136xf32, #tpu.memory_space<vmem>>, vector<16x64xf32>
    %c5_340 = arith.constant 5 : index
    %c5_341 = arith.constant 5 : index
    %c0_342 = arith.constant 0 : index
    %495 = vector.load %arg5[%c5_340, %c5_341, %c0_342] : memref<7x7x64xf32, #tpu.memory_space<vmem>>, vector<1x1x64xf32>
    %496 = vector.shape_cast %495 : vector<1x1x64xf32> to vector<64xf32>
    %497 = vector.shape_cast %496 : vector<64xf32> to vector<1x64xf32>
    %498 = vector.broadcast %497 : vector<1x64xf32> to vector<16x64xf32>
    %499 = arith.mulf %494, %498 : vector<16x64xf32>
    %500 = arith.addf %493, %499 : vector<16x64xf32>
    %c15_343 = arith.constant 15 : index
    %c72_344 = arith.constant 72 : index
    %501 = vector.load %arg11[%c15_343, %c72_344] : memref<34x136xf32, #tpu.memory_space<vmem>>, vector<16x64xf32>
    %c5_345 = arith.constant 5 : index
    %c6_346 = arith.constant 6 : index
    %c0_347 = arith.constant 0 : index
    %502 = vector.load %arg5[%c5_345, %c6_346, %c0_347] : memref<7x7x64xf32, #tpu.memory_space<vmem>>, vector<1x1x64xf32>
    %503 = vector.shape_cast %502 : vector<1x1x64xf32> to vector<64xf32>
    %504 = vector.shape_cast %503 : vector<64xf32> to vector<1x64xf32>
    %505 = vector.broadcast %504 : vector<1x64xf32> to vector<16x64xf32>
    %506 = arith.mulf %501, %505 : vector<16x64xf32>
    %507 = arith.addf %500, %506 : vector<16x64xf32>
    %c18 = arith.constant 18 : index
    %c0_348 = arith.constant 0 : index
    %508 = vector.load %arg11[%c18, %c0_348] : memref<34x136xf32, #tpu.memory_space<vmem>>, vector<16x64xf32>
    %c6_349 = arith.constant 6 : index
    %c0_350 = arith.constant 0 : index
    %c0_351 = arith.constant 0 : index
    %509 = vector.load %arg5[%c6_349, %c0_350, %c0_351] : memref<7x7x64xf32, #tpu.memory_space<vmem>>, vector<1x1x64xf32>
    %510 = vector.shape_cast %509 : vector<1x1x64xf32> to vector<64xf32>
    %511 = vector.shape_cast %510 : vector<64xf32> to vector<1x64xf32>
    %512 = vector.broadcast %511 : vector<1x64xf32> to vector<16x64xf32>
    %513 = arith.mulf %508, %512 : vector<16x64xf32>
    %514 = arith.addf %507, %513 : vector<16x64xf32>
    %c18_352 = arith.constant 18 : index
    %c12_353 = arith.constant 12 : index
    %515 = vector.load %arg11[%c18_352, %c12_353] : memref<34x136xf32, #tpu.memory_space<vmem>>, vector<16x64xf32>
    %c6_354 = arith.constant 6 : index
    %c1_355 = arith.constant 1 : index
    %c0_356 = arith.constant 0 : index
    %516 = vector.load %arg5[%c6_354, %c1_355, %c0_356] : memref<7x7x64xf32, #tpu.memory_space<vmem>>, vector<1x1x64xf32>
    %517 = vector.shape_cast %516 : vector<1x1x64xf32> to vector<64xf32>
    %518 = vector.shape_cast %517 : vector<64xf32> to vector<1x64xf32>
    %519 = vector.broadcast %518 : vector<1x64xf32> to vector<16x64xf32>
    %520 = arith.mulf %515, %519 : vector<16x64xf32>
    %521 = arith.addf %514, %520 : vector<16x64xf32>
    %c18_357 = arith.constant 18 : index
    %c24_358 = arith.constant 24 : index
    %522 = vector.load %arg11[%c18_357, %c24_358] : memref<34x136xf32, #tpu.memory_space<vmem>>, vector<16x64xf32>
    %c6_359 = arith.constant 6 : index
    %c2_360 = arith.constant 2 : index
    %c0_361 = arith.constant 0 : index
    %523 = vector.load %arg5[%c6_359, %c2_360, %c0_361] : memref<7x7x64xf32, #tpu.memory_space<vmem>>, vector<1x1x64xf32>
    %524 = vector.shape_cast %523 : vector<1x1x64xf32> to vector<64xf32>
    %525 = vector.shape_cast %524 : vector<64xf32> to vector<1x64xf32>
    %526 = vector.broadcast %525 : vector<1x64xf32> to vector<16x64xf32>
    %527 = arith.mulf %522, %526 : vector<16x64xf32>
    %528 = arith.addf %521, %527 : vector<16x64xf32>
    %c18_362 = arith.constant 18 : index
    %c36_363 = arith.constant 36 : index
    %529 = vector.load %arg11[%c18_362, %c36_363] : memref<34x136xf32, #tpu.memory_space<vmem>>, vector<16x64xf32>
    %c6_364 = arith.constant 6 : index
    %c3_365 = arith.constant 3 : index
    %c0_366 = arith.constant 0 : index
    %530 = vector.load %arg5[%c6_364, %c3_365, %c0_366] : memref<7x7x64xf32, #tpu.memory_space<vmem>>, vector<1x1x64xf32>
    %531 = vector.shape_cast %530 : vector<1x1x64xf32> to vector<64xf32>
    %532 = vector.shape_cast %531 : vector<64xf32> to vector<1x64xf32>
    %533 = vector.broadcast %532 : vector<1x64xf32> to vector<16x64xf32>
    %534 = arith.mulf %529, %533 : vector<16x64xf32>
    %535 = arith.addf %528, %534 : vector<16x64xf32>
    %c18_367 = arith.constant 18 : index
    %c48_368 = arith.constant 48 : index
    %536 = vector.load %arg11[%c18_367, %c48_368] : memref<34x136xf32, #tpu.memory_space<vmem>>, vector<16x64xf32>
    %c6_369 = arith.constant 6 : index
    %c4_370 = arith.constant 4 : index
    %c0_371 = arith.constant 0 : index
    %537 = vector.load %arg5[%c6_369, %c4_370, %c0_371] : memref<7x7x64xf32, #tpu.memory_space<vmem>>, vector<1x1x64xf32>
    %538 = vector.shape_cast %537 : vector<1x1x64xf32> to vector<64xf32>
    %539 = vector.shape_cast %538 : vector<64xf32> to vector<1x64xf32>
    %540 = vector.broadcast %539 : vector<1x64xf32> to vector<16x64xf32>
    %541 = arith.mulf %536, %540 : vector<16x64xf32>
    %542 = arith.addf %535, %541 : vector<16x64xf32>
    %c18_372 = arith.constant 18 : index
    %c60_373 = arith.constant 60 : index
    %543 = vector.load %arg11[%c18_372, %c60_373] : memref<34x136xf32, #tpu.memory_space<vmem>>, vector<16x64xf32>
    %c6_374 = arith.constant 6 : index
    %c5_375 = arith.constant 5 : index
    %c0_376 = arith.constant 0 : index
    %544 = vector.load %arg5[%c6_374, %c5_375, %c0_376] : memref<7x7x64xf32, #tpu.memory_space<vmem>>, vector<1x1x64xf32>
    %545 = vector.shape_cast %544 : vector<1x1x64xf32> to vector<64xf32>
    %546 = vector.shape_cast %545 : vector<64xf32> to vector<1x64xf32>
    %547 = vector.broadcast %546 : vector<1x64xf32> to vector<16x64xf32>
    %548 = arith.mulf %543, %547 : vector<16x64xf32>
    %549 = arith.addf %542, %548 : vector<16x64xf32>
    %c18_377 = arith.constant 18 : index
    %c72_378 = arith.constant 72 : index
    %550 = vector.load %arg11[%c18_377, %c72_378] : memref<34x136xf32, #tpu.memory_space<vmem>>, vector<16x64xf32>
    %c6_379 = arith.constant 6 : index
    %c6_380 = arith.constant 6 : index
    %c0_381 = arith.constant 0 : index
    %551 = vector.load %arg5[%c6_379, %c6_380, %c0_381] : memref<7x7x64xf32, #tpu.memory_space<vmem>>, vector<1x1x64xf32>
    %552 = vector.shape_cast %551 : vector<1x1x64xf32> to vector<64xf32>
    %553 = vector.shape_cast %552 : vector<64xf32> to vector<1x64xf32>
    %554 = vector.broadcast %553 : vector<1x64xf32> to vector<16x64xf32>
    %555 = arith.mulf %550, %554 : vector<16x64xf32>
    %556 = arith.addf %549, %555 : vector<16x64xf32>
    %c0_382 = arith.constant 0 : index
    %c0_383 = arith.constant 0 : index
    %557 = vector.load %arg8[%c0_382, %c0_383] : memref<1x64xf32, #tpu.memory_space<vmem>>, vector<1x64xf32>
    %558 = vector.shape_cast %557 : vector<1x64xf32> to vector<1x64xf32>
    %559 = vector.broadcast %558 : vector<1x64xf32> to vector<16x64xf32>
    %cst_384 = arith.constant 0.000000e+00 : f32
    %560 = vector.broadcast %cst_384 : f32 to vector<16x3xf32>
    %561 = vector.extract_strided_slice %556 {offsets = [0, 3], sizes = [16, 61], strides = [1, 1]} : vector<16x64xf32> to vector<16x61xf32>
    %562 = tpu.concatenate %561, %560 in 1 : vector<16x61xf32>, vector<16x3xf32> -> vector<16x64xf32>
    %c0_385 = arith.constant 0 : index
    %c0_386 = arith.constant 0 : index
    %563 = vector.load %arg7[%c0_385, %c0_386] : memref<7x64xf32, #tpu.memory_space<vmem>>, vector<1x64xf32>
    %564 = vector.shape_cast %563 : vector<1x64xf32> to vector<64xf32>
    %565 = vector.shape_cast %564 : vector<64xf32> to vector<1x64xf32>
    %566 = vector.broadcast %565 : vector<1x64xf32> to vector<16x64xf32>
    %567 = arith.mulf %562, %566 : vector<16x64xf32>
    %568 = arith.addf %559, %567 : vector<16x64xf32>
    %cst_387 = arith.constant 0.000000e+00 : f32
    %569 = vector.broadcast %cst_387 : f32 to vector<16x2xf32>
    %570 = vector.extract_strided_slice %556 {offsets = [0, 2], sizes = [16, 62], strides = [1, 1]} : vector<16x64xf32> to vector<16x62xf32>
    %571 = tpu.concatenate %570, %569 in 1 : vector<16x62xf32>, vector<16x2xf32> -> vector<16x64xf32>
    %c1_388 = arith.constant 1 : index
    %c0_389 = arith.constant 0 : index
    %572 = vector.load %arg7[%c1_388, %c0_389] : memref<7x64xf32, #tpu.memory_space<vmem>>, vector<1x64xf32>
    %573 = vector.shape_cast %572 : vector<1x64xf32> to vector<64xf32>
    %574 = vector.shape_cast %573 : vector<64xf32> to vector<1x64xf32>
    %575 = vector.broadcast %574 : vector<1x64xf32> to vector<16x64xf32>
    %576 = arith.mulf %571, %575 : vector<16x64xf32>
    %577 = arith.addf %568, %576 : vector<16x64xf32>
    %cst_390 = arith.constant 0.000000e+00 : f32
    %578 = vector.broadcast %cst_390 : f32 to vector<16x1xf32>
    %579 = vector.extract_strided_slice %556 {offsets = [0, 1], sizes = [16, 63], strides = [1, 1]} : vector<16x64xf32> to vector<16x63xf32>
    %580 = tpu.concatenate %579, %578 in 1 : vector<16x63xf32>, vector<16x1xf32> -> vector<16x64xf32>
    %c2_391 = arith.constant 2 : index
    %c0_392 = arith.constant 0 : index
    %581 = vector.load %arg7[%c2_391, %c0_392] : memref<7x64xf32, #tpu.memory_space<vmem>>, vector<1x64xf32>
    %582 = vector.shape_cast %581 : vector<1x64xf32> to vector<64xf32>
    %583 = vector.shape_cast %582 : vector<64xf32> to vector<1x64xf32>
    %584 = vector.broadcast %583 : vector<1x64xf32> to vector<16x64xf32>
    %585 = arith.mulf %580, %584 : vector<16x64xf32>
    %586 = arith.addf %577, %585 : vector<16x64xf32>
    %c3_393 = arith.constant 3 : index
    %c0_394 = arith.constant 0 : index
    %587 = vector.load %arg7[%c3_393, %c0_394] : memref<7x64xf32, #tpu.memory_space<vmem>>, vector<1x64xf32>
    %588 = vector.shape_cast %587 : vector<1x64xf32> to vector<64xf32>
    %589 = vector.shape_cast %588 : vector<64xf32> to vector<1x64xf32>
    %590 = vector.broadcast %589 : vector<1x64xf32> to vector<16x64xf32>
    %591 = arith.mulf %556, %590 : vector<16x64xf32>
    %592 = arith.addf %586, %591 : vector<16x64xf32>
    %cst_395 = arith.constant 0.000000e+00 : f32
    %593 = vector.broadcast %cst_395 : f32 to vector<16x1xf32>
    %594 = vector.extract_strided_slice %556 {offsets = [0, 0], sizes = [16, 63], strides = [1, 1]} : vector<16x64xf32> to vector<16x63xf32>
    %595 = tpu.concatenate %593, %594 in 1 : vector<16x1xf32>, vector<16x63xf32> -> vector<16x64xf32>
    %c4_396 = arith.constant 4 : index
    %c0_397 = arith.constant 0 : index
    %596 = vector.load %arg7[%c4_396, %c0_397] : memref<7x64xf32, #tpu.memory_space<vmem>>, vector<1x64xf32>
    %597 = vector.shape_cast %596 : vector<1x64xf32> to vector<64xf32>
    %598 = vector.shape_cast %597 : vector<64xf32> to vector<1x64xf32>
    %599 = vector.broadcast %598 : vector<1x64xf32> to vector<16x64xf32>
    %600 = arith.mulf %595, %599 : vector<16x64xf32>
    %601 = arith.addf %592, %600 : vector<16x64xf32>
    %cst_398 = arith.constant 0.000000e+00 : f32
    %602 = vector.broadcast %cst_398 : f32 to vector<16x2xf32>
    %603 = vector.extract_strided_slice %556 {offsets = [0, 0], sizes = [16, 62], strides = [1, 1]} : vector<16x64xf32> to vector<16x62xf32>
    %604 = tpu.concatenate %602, %603 in 1 : vector<16x2xf32>, vector<16x62xf32> -> vector<16x64xf32>
    %c5_399 = arith.constant 5 : index
    %c0_400 = arith.constant 0 : index
    %605 = vector.load %arg7[%c5_399, %c0_400] : memref<7x64xf32, #tpu.memory_space<vmem>>, vector<1x64xf32>
    %606 = vector.shape_cast %605 : vector<1x64xf32> to vector<64xf32>
    %607 = vector.shape_cast %606 : vector<64xf32> to vector<1x64xf32>
    %608 = vector.broadcast %607 : vector<1x64xf32> to vector<16x64xf32>
    %609 = arith.mulf %604, %608 : vector<16x64xf32>
    %610 = arith.addf %601, %609 : vector<16x64xf32>
    %cst_401 = arith.constant 0.000000e+00 : f32
    %611 = vector.broadcast %cst_401 : f32 to vector<16x3xf32>
    %612 = vector.extract_strided_slice %556 {offsets = [0, 0], sizes = [16, 61], strides = [1, 1]} : vector<16x64xf32> to vector<16x61xf32>
    %613 = tpu.concatenate %611, %612 in 1 : vector<16x3xf32>, vector<16x61xf32> -> vector<16x64xf32>
    %c6_402 = arith.constant 6 : index
    %c0_403 = arith.constant 0 : index
    %614 = vector.load %arg7[%c6_402, %c0_403] : memref<7x64xf32, #tpu.memory_space<vmem>>, vector<1x64xf32>
    %615 = vector.shape_cast %614 : vector<1x64xf32> to vector<64xf32>
    %616 = vector.shape_cast %615 : vector<64xf32> to vector<1x64xf32>
    %617 = vector.broadcast %616 : vector<1x64xf32> to vector<16x64xf32>
    %618 = arith.mulf %613, %617 : vector<16x64xf32>
    %619 = arith.addf %610, %618 : vector<16x64xf32>
    %c0_404 = arith.constant 0 : index
    %620 = arith.index_cast %1 : i32 to index
    %c0_405 = arith.constant 0 : index
    %621 = vector.load %arg2[%c0_404, %620, %c0_405] : memref<1x16x64xf32, #tpu.memory_space<vmem>>, vector<1x16x64xf32>
    %622 = vector.shape_cast %621 : vector<1x16x64xf32> to vector<16x64xf32>
    %623 = arith.mulf %622, %619 : vector<16x64xf32>
    %c0_406 = arith.constant 0 : index
    %c0_407 = arith.constant 0 : index
    %c0_408 = arith.constant 0 : index
    %624 = vector.load %arg9[%c0_406, %c0_407, %c0_408] : memref<1x16x64xf32, #tpu.memory_space<vmem>>, vector<1x16x64xf32>
    %625 = vector.shape_cast %624 : vector<1x16x64xf32> to vector<16x64xf32>
    %626 = vector.shape_cast %623 : vector<16x64xf32> to vector<1x16x64xf32>
    tpu.vector_store %arg9[%c0_406, %c0_407, %c0_408], %626 {strides = array<i32>} : memref<1x16x64xf32, #tpu.memory_space<vmem>>, vector<1x16x64xf32>,
    return
  }
  func.func @transform_0(%arg0: i32, %arg1: i32) -> (i32, i32, i32) {
    %c0_i32 = arith.constant 0 : i32
    %c0_i32_0 = arith.constant 0 : i32
    %c0_i32_1 = arith.constant 0 : i32
    return %arg0, %c0_i32, %c0_i32_0 : i32, i32, i32
  }
  func.func @transform_1(%arg0: i32, %arg1: i32) -> (i32, i32, i32) {
    %c0_i32 = arith.constant 0 : i32
    %c0_i32_0 = arith.constant 0 : i32
    %c0_i32_1 = arith.constant 0 : i32
    %c0_i32_2 = arith.constant 0 : i32
    return %c0_i32, %c0_i32_0, %c0_i32_1 : i32, i32, i32
  }
  func.func @transform_2(%arg0: i32, %arg1: i32) -> (i32, i32) {
    %c0_i32 = arith.constant 0 : i32
    %c0_i32_0 = arith.constant 0 : i32
    %c0_i32_1 = arith.constant 0 : i32
    return %c0_i32, %c0_i32_0 : i32, i32
  }
  func.func @transform_3(%arg0: i32, %arg1: i32) -> (i32, i32, i32) {
    %c0_i32 = arith.constant 0 : i32
    %c0_i32_0 = arith.constant 0 : i32
    %c0_i32_1 = arith.constant 0 : i32
    %c0_i32_2 = arith.constant 0 : i32
    return %c0_i32, %c0_i32_0, %c0_i32_1 : i32, i32, i32
  }
  func.func @transform_4(%arg0: i32, %arg1: i32) -> (i32, i32) {
    %c0_i32 = arith.constant 0 : i32
    %c0_i32_0 = arith.constant 0 : i32
    %c0_i32_1 = arith.constant 0 : i32
    return %c0_i32, %c0_i32_0 : i32, i32
  }
  func.func @transform_5(%arg0: i32, %arg1: i32) -> (i32, i32) {
    %c0_i32 = arith.constant 0 : i32
    %c0_i32_0 = arith.constant 0 : i32
    %c0_i32_1 = arith.constant 0 : i32
    return %c0_i32, %c0_i32_0 : i32, i32
  }
  func.func @transform_6(%arg0: i32, %arg1: i32) -> (i32, i32) {
    %c0_i32 = arith.constant 0 : i32
    %c0_i32_0 = arith.constant 0 : i32
    %c0_i32_1 = arith.constant 0 : i32
    return %c0_i32, %c0_i32_0 : i32, i32
  }
  func.func @transform_7(%arg0: i32, %arg1: i32) -> (i32, i32, i32) {
    %c0_i32 = arith.constant 0 : i32
    %c0_i32_0 = arith.constant 0 : i32
    return %arg0, %arg1, %c0_i32 : i32, i32, i32
  }
}

</mosaic_0001>

<llo_original>
// kernel: tpu_custom_call.1
$region0: #{tpu_custom_call.1}
  #allocation0 [shape = 'u32[]', space=smem, size = 0x4, offset = 0x4, fixed_abs, tag = 'smem constant byte address 0x4 - core index']
  #allocation1 [shape = 'u32[144,128]{1,0:T(1,128)}', space=vmem, size = 0x12000, scoped, tag = 'internal scratch']
  #allocation2 [shape = 'f32[38,80]{1,0:T(8,128)}', space=vmem, size = 0x5000, scoped, tag = 'scratch operand']
  #allocation3 [shape = 'f32[34,136]{1,0:T(8,128)}', space=vmem, size = 0xa000, scoped, tag = 'scratch operand']
  %s0 = inlined_call_operand.hbm [shape: f32[2,16,64], index: 0, kind: input, shape index: {}]
  %s1 = inlined_call_operand.hbm [shape: f32[5,5,64], index: 1, kind: input, shape index: {}]
  %s2 = inlined_call_operand.vmem [shape: f32[1,64], index: 2, kind: input, shape index: {}]
  %s3 = inlined_call_operand.hbm [shape: f32[7,7,64], index: 3, kind: input, shape index: {}]
  %s4 = inlined_call_operand.hbm [shape: f32[1,64], index: 4, kind: input, shape index: {}]
  %s5 = inlined_call_operand.vmem [shape: f32[7,64], index: 5, kind: input, shape index: {}]
  %s6 = inlined_call_operand.vmem [shape: f32[1,64], index: 6, kind: input, shape index: {}]
  %s7 = inlined_call_operand.hbm [shape: f32[2,16,64], index: 7, kind: output, shape index: {}]
  %s8 = sld [smem:[#allocation0]]
  $region97: #{tpu_custom_call.1} parent=0
    _
  %s10 = ssub.s32 1, %s8
  %s11 = scalar_select 0, %s10, %s8
  $region1: #{tpu_custom_call.1} parent=0
    #allocation4 [shape = 'u8[16384]{0}', space=vmem, size = 0x4000, scoped, tag = 'input window, operand 0']
    #allocation5 [shape = 's32[2]{0}', space=sflag, size = 0x8, scoped, tag = 'scoped memory for tpu_custom_call.1']
    #allocation6 [shape = 's32[2]{0}', space=sflag, size = 0x8, scoped, tag = 'scoped memory for tpu_custom_call.1']
    #allocation7 [shape = 'u8[20480]{0}', space=vmem, size = 0x5000, scoped, tag = 'input window, operand 1, single buffered']
    #allocation8 [shape = 's32[1]{0}', space=sflag, size = 0x4, scoped, tag = 'scoped memory for tpu_custom_call.1']
    #allocation9 [shape = 'u8[28672]{0}', space=vmem, size = 0x7000, scoped, tag = 'input window, operand 3, single buffered']
    #allocation10 [shape = 'u8[512]{0}', space=vmem, size = 0x400, scoped, tag = 'input window, operand 4, single buffered']
    #allocation11 [shape = 's32[1]{0}', space=sflag, size = 0x4, scoped, tag = 'scoped memory for tpu_custom_call.1']
    #allocation12 [shape = 'u8[16384]{0}', space=vmem, size = 0x4000, scoped, tag = 'output window, operand 0']
    %12 = vsyncpa [#allocation5], 0
    %s13 = scalar_lea.sflag [#allocation5], 1
    %14 = vsyncpa %s13, 0
    %15 = vsyncpa [#allocation8], 0
    %16 = vsyncpa [#allocation11], 0
    %17 = vsyncpa [#allocation6], 0
    %s18 = scalar_lea.sflag [#allocation6], 1
    %19 = vsyncpa %s18, 0
    loop: start=0, step=1, limit=4
    $region2: #{tpu_custom_call.1} parent=1 // loop_pre_header
      _
    $region3: #{tpu_custom_call.1} parent=1 // loop_header
      %s21 = sphi 0, %s25
      %p22 = scmp.ge.s32.totalorder %s21, 4
      %s28 = sphi 0, %s40
      %s29 = sphi 0, %s36
      %s30 = sphi 0, %s28
      %s31 = sphi 0, %s29
      %s32 = sphi 0, %s30
      %s33 = sphi 0, %s31
      %s43 = sphi 0, %s45
      %s46 = sphi 0, %s43
      %s47 = sphi 0, %s46
      %s63 = sphi 0, %s47
      %s67 = sphi 0, %s67
      %s69 = sphi 0, %s67
      %s70 = sphi 0, %s69
      %s84 = sphi 0, %s70
      %s88 = sphi 0, %s88
      %s90 = sphi 0, %s88
      %s91 = sphi 0, %s90
      %s105 = sphi 0, %s91
      %s109 = sphi 0, %s109
      %s111 = sphi 0, %s109
      %s112 = sphi 0, %s111
      %s126 = sphi 0, %s112
      %s130 = sphi 0, %s130
      %s132 = sphi 0, %s130
      %s133 = sphi 0, %s132
      %s147 = sphi 0, %s133
      %s151 = sphi 0, %s151
      %s153 = sphi 0, %s151
      %s154 = sphi 0, %s153
      %s168 = sphi 0, %s154
      %s172 = sphi 0, %s172
      %s174 = sphi 0, %s172
      %s175 = sphi 0, %s174
      %s189 = sphi 0, %s175
      %s197 = sphi 0, %s199
      %s200 = sphi 0, %s197
      %s201 = sphi 0, %s200
      %s217 = sphi 0, %s201
    $region4: #{tpu_custom_call.1} parent=1 // loop_header_branch
      %24 = sbr.rel (%p22) target = $region8
    $region5: #{tpu_custom_call.1} parent=1 // loop_body
      %s26 = ssub.s32 %s21, 1
      %s27 = ssub.s32 %s21, 2
      %s34 = sadd.s32 1, %s29
      %p35 = scmp.ge.s32.totalorder %s34, 1
      %s36 = scalar_select %p35, 0, %s34
      %s37 = sadd.s32 1, %s28
      %s38 = scalar_select %p35, %s37, %s28
      %p39 = scmp.ge.s32.totalorder %s38, 2
      %s40 = scalar_select %p39, 0, %s38
      %s41 = ssub.s32 %s28, %s40
      %p42 = scmp.eq.s32.totalorder %s41, 0
      %s44 = sadd.s32 %s43, 1
      %s45 = scalar_select %p42, %s43, %s44
      %p48 = pneg %p42
      %p49 = scmp.eq.s32.totalorder %s21, 1
      %p50 = por %p48, %p49
      %p51 = scmp.ne.s32.totalorder %s43, %s46
      %p52 = scmp.eq.s32.totalorder %s21, 0
      %p53 = por %p51, %p52
      %p54 = scmp.ne.s32.totalorder %s43, %s46
      %p55 = scmp.eq.s32.totalorder %s26, 1
      %p56 = por %p54, %p55
      %p57 = scmp.ne.s32.totalorder %s46, %s47
      %p58 = scmp.eq.s32.totalorder %s26, 0
      %p59 = por %p57, %p58
      %p60 = scmp.ne.s32.totalorder %s46, %s47
      %p61 = scmp.eq.s32.totalorder %s27, 1
      %p62 = por %p60, %p61
      %p64 = scmp.ne.s32.totalorder %s47, %s63
      %p65 = scmp.eq.s32.totalorder %s27, 0
      %p66 = por %p64, %p65
      %s68 = sadd.s32 %s67, 1
      %p71 = scmp.eq.s32.totalorder %s21, 1
      %p72 = scmp.ne.s32.totalorder %s67, %s69
      %p73 = scmp.eq.s32.totalorder %s21, 0
      %p74 = por %p72, %p73
      %p75 = scmp.ne.s32.totalorder %s67, %s69
      %p76 = scmp.eq.s32.totalorder %s26, 1
      %p77 = por %p75, %p76
      %p78 = scmp.ne.s32.totalorder %s69, %s70
      %p79 = scmp.eq.s32.totalorder %s26, 0
      %p80 = por %p78, %p79
      %p81 = scmp.ne.s32.totalorder %s69, %s70
      %p82 = scmp.eq.s32.totalorder %s27, 1
      %p83 = por %p81, %p82
      %p85 = scmp.ne.s32.totalorder %s70, %s84
      %p86 = scmp.eq.s32.totalorder %s27, 0
      %p87 = por %p85, %p86
      %s89 = sadd.s32 %s88, 1
      %p92 = scmp.eq.s32.totalorder %s21, 1
      %p93 = scmp.ne.s32.totalorder %s88, %s90
      %p94 = scmp.eq.s32.totalorder %s21, 0
      %p95 = por %p93, %p94
      %p96 = scmp.ne.s32.totalorder %s88, %s90
      %p97 = scmp.eq.s32.totalorder %s26, 1
      %p98 = por %p96, %p97
      %p99 = scmp.ne.s32.totalorder %s90, %s91
      %p100 = scmp.eq.s32.totalorder %s26, 0
      %p101 = por %p99, %p100
      %p102 = scmp.ne.s32.totalorder %s90, %s91
      %p103 = scmp.eq.s32.totalorder %s27, 1
      %p104 = por %p102, %p103
      %p106 = scmp.ne.s32.totalorder %s91, %s105
      %p107 = scmp.eq.s32.totalorder %s27, 0
      %p108 = por %p106, %p107
      %s110 = sadd.s32 %s109, 1
      %p113 = scmp.eq.s32.totalorder %s21, 1
      %p114 = scmp.ne.s32.totalorder %s109, %s111
      %p115 = scmp.eq.s32.totalorder %s21, 0
      %p116 = por %p114, %p115
      %p117 = scmp.ne.s32.totalorder %s109, %s111
      %p118 = scmp.eq.s32.totalorder %s26, 1
      %p119 = por %p117, %p118
      %p120 = scmp.ne.s32.totalorder %s111, %s112
      %p121 = scmp.eq.s32.totalorder %s26, 0
      %p122 = por %p120, %p121
      %p123 = scmp.ne.s32.totalorder %s111, %s112
      %p124 = scmp.eq.s32.totalorder %s27, 1
      %p125 = por %p123, %p124
      %p127 = scmp.ne.s32.totalorder %s112, %s126
      %p128 = scmp.eq.s32.totalorder %s27, 0
      %p129 = por %p127, %p128
      %s131 = sadd.s32 %s130, 1
      %p134 = scmp.eq.s32.totalorder %s21, 1
      %p135 = scmp.ne.s32.totalorder %s130, %s132
      %p136 = scmp.eq.s32.totalorder %s21, 0
      %p137 = por %p135, %p136
      %p138 = scmp.ne.s32.totalorder %s130, %s132
      %p139 = scmp.eq.s32.totalorder %s26, 1
      %p140 = por %p138, %p139
      %p141 = scmp.ne.s32.totalorder %s132, %s133
      %p142 = scmp.eq.s32.totalorder %s26, 0
      %p143 = por %p141, %p142
      %p144 = scmp.ne.s32.totalorder %s132, %s133
      %p145 = scmp.eq.s32.totalorder %s27, 1
      %p146 = por %p144, %p145
      %p148 = scmp.ne.s32.totalorder %s133, %s147
      %p149 = scmp.eq.s32.totalorder %s27, 0
      %p150 = por %p148, %p149
      %s152 = sadd.s32 %s151, 1
      %p155 = scmp.eq.s32.totalorder %s21, 1
      %p156 = scmp.ne.s32.totalorder %s151, %s153
      %p157 = scmp.eq.s32.totalorder %s21, 0
      %p158 = por %p156, %p157
      %p159 = scmp.ne.s32.totalorder %s151, %s153
      %p160 = scmp.eq.s32.totalorder %s26, 1
      %p161 = por %p159, %p160
      %p162 = scmp.ne.s32.totalorder %s153, %s154
      %p163 = scmp.eq.s32.totalorder %s26, 0
      %p164 = por %p162, %p163
      %p165 = scmp.ne.s32.totalorder %s153, %s154
      %p166 = scmp.eq.s32.totalorder %s27, 1
      %p167 = por %p165, %p166
      %p169 = scmp.ne.s32.totalorder %s154, %s168
      %p170 = scmp.eq.s32.totalorder %s27, 0
      %p171 = por %p169, %p170
      %s173 = sadd.s32 %s172, 1
      %p176 = scmp.eq.s32.totalorder %s21, 1
      %p177 = scmp.ne.s32.totalorder %s172, %s174
      %p178 = scmp.eq.s32.totalorder %s21, 0
      %p179 = por %p177, %p178
      %p180 = scmp.ne.s32.totalorder %s172, %s174
      %p181 = scmp.eq.s32.totalorder %s26, 1
      %p182 = por %p180, %p181
      %p183 = scmp.ne.s32.totalorder %s174, %s175
      %p184 = scmp.eq.s32.totalorder %s26, 0
      %p185 = por %p183, %p184
      %p186 = scmp.ne.s32.totalorder %s174, %s175
      %p187 = scmp.eq.s32.totalorder %s27, 1
      %p188 = por %p186, %p187
      %p190 = scmp.ne.s32.totalorder %s175, %s189
      %p191 = scmp.eq.s32.totalorder %s27, 0
      %p192 = por %p190, %p191
      %s193 = ssub.s32 %s28, %s40
      %s194 = ssub.s32 %s29, %s36
      %s195 = sor.u32 %s193, %s194
      %p196 = scmp.eq.s32.totalorder %s195, 0
      %s198 = sadd.s32 %s197, 1
      %s199 = scalar_select %p196, %s197, %s198
      %p202 = pneg %p196
      %p203 = scmp.eq.s32.totalorder %s21, 1
      %p204 = por %p202, %p203
      %p205 = scmp.ne.s32.totalorder %s197, %s200
      %p206 = scmp.eq.s32.totalorder %s21, 0
      %p207 = por %p205, %p206
      %p208 = scmp.ne.s32.totalorder %s197, %s200
      %p209 = scmp.eq.s32.totalorder %s26, 1
      %p210 = por %p208, %p209
      %p211 = scmp.ne.s32.totalorder %s200, %s201
      %p212 = scmp.eq.s32.totalorder %s26, 0
      %p213 = por %p211, %p212
      %p214 = scmp.ne.s32.totalorder %s200, %s201
      %p215 = scmp.eq.s32.totalorder %s27, 1
      %p216 = por %p214, %p215
      %p218 = scmp.ne.s32.totalorder %s201, %s217
      %p219 = scmp.eq.s32.totalorder %s27, 0
      %p220 = por %p218, %p219
      %p221 = scmp.le.s32.totalorder 1, %s21
      %p222 = scmp.lt.s32.totalorder %s21, 3
      %p223 = pnand %p221, %p222
      %p224 = pneg %p223
      // Predicated region
      $region9: #{tpu_custom_call.1} parent=5 // pred_check
        _
      $region10: #{tpu_custom_call.1} parent=5 // pred_check_branch
        %226 = sbr.rel (%p223) target = $region12
      $region11: #{tpu_custom_call.1} parent=5 // pred_region
        %s227 = ssub.s32 %s21, 1
        // Predicated region
        $region13: #{tpu_custom_call.1} parent=11 // pred_check
          %p228 = pneg %p80
        $region14: #{tpu_custom_call.1} parent=11 // pred_check_branch
          %230 = sbr.rel (%p228) target = $region16
        $region15: #{tpu_custom_call.1} parent=11 // pred_region
          %s232 = ssub.s32 640, 640
          %233 = vsyncadd [#allocation8], %s232
          %s234 = sshll.u32 [#allocation7], 4
          %s235 = int_to_ptr.vmem [resolvable:$true] %s234
          %240 = dma.hbm_to_vmem [thread:$0]  %s1, 640, %s235, [#allocation8], 128, 128, 8
        $region16: #{tpu_custom_call.1} parent=11 // pred_fallthru
          _
        // Predicated region
        $region17: #{tpu_custom_call.1} parent=11 // pred_check
          %p241 = pneg %p101
        $region18: #{tpu_custom_call.1} parent=11 // pred_check_branch
          %243 = sbr.rel (%p241) target = $region20
        $region19: #{tpu_custom_call.1} parent=11 // pred_region
          _
        $region20: #{tpu_custom_call.1} parent=11 // pred_fallthru
          _
        // Predicated region
        $region21: #{tpu_custom_call.1} parent=11 // pred_check
          %p244 = pneg %p122
        $region22: #{tpu_custom_call.1} parent=11 // pred_check_branch
          %246 = sbr.rel (%p244) target = $region24
        $region23: #{tpu_custom_call.1} parent=11 // pred_region
          %s248 = ssub.s32 896, 896
          %249 = vsyncadd [#allocation8], %s248
          %s250 = sshll.u32 [#allocation9], 4
          %s251 = int_to_ptr.vmem [resolvable:$true] %s250
          %256 = dma.hbm_to_vmem [thread:$0]  %s3, 896, %s251, [#allocation8], 128, 128, 8
        $region24: #{tpu_custom_call.1} parent=11 // pred_fallthru
          _
        // Predicated region
        $region25: #{tpu_custom_call.1} parent=11 // pred_check
          %p257 = pneg %p143
        $region26: #{tpu_custom_call.1} parent=11 // pred_check_branch
          %259 = sbr.rel (%p257) target = $region28
        $region27: #{tpu_custom_call.1} parent=11 // pred_region
          %s261 = ssub.s32 16, 16
          %262 = vsyncadd [#allocation11], %s261
          %s264 = sshll.u32 [#allocation10], 4
          %s265 = int_to_ptr.vmem [resolvable:$true] %s264
          %267 = dma.hbm_to_vmem [thread:$0]  %s4, 16, %s265, [#allocation11]
        $region28: #{tpu_custom_call.1} parent=11 // pred_fallthru
          _
        // Predicated region
        $region29: #{tpu_custom_call.1} parent=11 // pred_check
          %p268 = pneg %p164
        $region30: #{tpu_custom_call.1} parent=11 // pred_check_branch
          %270 = sbr.rel (%p268) target = $region32
        $region31: #{tpu_custom_call.1} parent=11 // pred_region
          _
        $region32: #{tpu_custom_call.1} parent=11 // pred_fallthru
          _
        // Predicated region
        $region33: #{tpu_custom_call.1} parent=11 // pred_check
          %p271 = pneg %p185
        $region34: #{tpu_custom_call.1} parent=11 // pred_check_branch
          %273 = sbr.rel (%p271) target = $region36
        $region35: #{tpu_custom_call.1} parent=11 // pred_region
          _
        $region36: #{tpu_custom_call.1} parent=11 // pred_fallthru
          _
      $region12: #{tpu_custom_call.1} parent=5 // pred_fallthru
        _
      %p274 = scmp.lt.s32.totalorder %s21, 2
      // Predicated region
      $region37: #{tpu_custom_call.1} parent=5 // pred_check
        %p275 = pneg %p274
      $region38: #{tpu_custom_call.1} parent=5 // pred_check_branch
        %277 = sbr.rel (%p275) target = $region40
      $region39: #{tpu_custom_call.1} parent=5 // pred_region
        // Predicated region
        $region41: #{tpu_custom_call.1} parent=39 // pred_check
          %p278 = pneg %p53
        $region42: #{tpu_custom_call.1} parent=39 // pred_check_branch
          %280 = sbr.rel (%p278) target = $region44
        $region43: #{tpu_custom_call.1} parent=39 // pred_region
          %s281 = sand.u32 %s43, 1
          %s282 = scalar_lea.sflag [#allocation5], %s281
          %s283 = sand.u32 %s43, 1
          %s284 = smul.addr %s283, 16
          %s285 = scalar_lea.vmem [#allocation4], %s284
          %s287 = ssub.s32 256, 256
          %288 = vsyncadd %s282, %s287
          %s289 = smul.addr %s28, 2
          %s290 = smul.addr %s289, 128
          %s291 = scalar_lea.hbm %s0, %s290
          %s292 = sshll.u32 %s285, 4
          %s293 = int_to_ptr.vmem [resolvable:$true] %s292
          %298 = dma.hbm_to_vmem [thread:$0]  %s291, 256, %s293, %s282, 128, 128, 8
        $region44: #{tpu_custom_call.1} parent=39 // pred_fallthru
          _
      $region40: #{tpu_custom_call.1} parent=5 // pred_fallthru
        _
      %p299 = scmp.le.s32.totalorder 1, %s21
      %p300 = scmp.lt.s32.totalorder %s21, 3
      %p301 = pnand %p299, %p300
      %p302 = pneg %p301
      // Predicated region
      $region45: #{tpu_custom_call.1} parent=5 // pred_check
        _
      $region46: #{tpu_custom_call.1} parent=5 // pred_check_branch
        %304 = sbr.rel (%p301) target = $region48
      $region47: #{tpu_custom_call.1} parent=5 // pred_region
        %s305 = ssub.s32 %s21, 1
        %s306 = sand.u32 %s46, 1
        %s307 = scalar_lea.sflag [#allocation5], %s306
        %s308 = sand.u32 %s46, 1
        %s309 = smul.addr %s308, 16
        %s310 = scalar_lea.vmem [#allocation4], %s309
        // Predicated region
        $region49: #{tpu_custom_call.1} parent=47 // pred_check
          %p311 = pneg %p59
        $region50: #{tpu_custom_call.1} parent=47 // pred_check_branch
          %313 = sbr.rel (%p311) target = $region52
        $region51: #{tpu_custom_call.1} parent=47 // pred_region
          %314 = dma.done %s307, 256
        $region52: #{tpu_custom_call.1} parent=47 // pred_fallthru
          _
        // Predicated region
        $region53: #{tpu_custom_call.1} parent=47 // pred_check
          %p315 = pneg %p80
        $region54: #{tpu_custom_call.1} parent=47 // pred_check_branch
          %317 = sbr.rel (%p315) target = $region56
        $region55: #{tpu_custom_call.1} parent=47 // pred_region
          %318 = dma.done [#allocation8], 640
        $region56: #{tpu_custom_call.1} parent=47 // pred_fallthru
          _
        // Predicated region
        $region57: #{tpu_custom_call.1} parent=47 // pred_check
          %p319 = pneg %p122
        $region58: #{tpu_custom_call.1} parent=47 // pred_check_branch
          %321 = sbr.rel (%p319) target = $region60
        $region59: #{tpu_custom_call.1} parent=47 // pred_region
          %322 = dma.done [#allocation8], 896
        $region60: #{tpu_custom_call.1} parent=47 // pred_fallthru
          _
        // Predicated region
        $region61: #{tpu_custom_call.1} parent=47 // pred_check
          %p323 = pneg %p143
        $region62: #{tpu_custom_call.1} parent=47 // pred_check_branch
          %325 = sbr.rel (%p323) target = $region64
        $region63: #{tpu_custom_call.1} parent=47 // pred_region
          %326 = dma.done [#allocation11], 16
        $region64: #{tpu_custom_call.1} parent=47 // pred_fallthru
          _
        %s327 = sand.u32 %s46, 1
        %s328 = scalar_lea.sflag [#allocation5], %s327
        %s329 = sand.u32 %s46, 1
        %s330 = smul.addr %s329, 16
        %s331 = scalar_lea.vmem [#allocation4], %s330
        %p332 = pneg %p59
        %p333 = pneg %p56
        %p334 = pneg %p80
        %p335 = pneg %p77
        %p336 = pneg %p101
        %p337 = pneg %p98
        %p338 = pneg %p122
        %p339 = pneg %p119
        %p340 = pneg %p143
        %p341 = pneg %p140
        %p342 = pneg %p164
        %p343 = pneg %p161
        %p344 = pneg %p185
        %p345 = pneg %p182
        %p346 = pneg %p213
        %p347 = pneg %p210
        %s348 = sand.u32 %s200, 1
        %s349 = scalar_lea.sflag [#allocation6], %s348
        %s350 = sand.u32 %s200, 1
        %s351 = smul.addr %s350, 16
        %s352 = scalar_lea.vmem [#allocation12], %s351
        %s353 = smul.u32 2, %s31
        %s354 = smul.u32 %s31, 16
        %vm355 = vcmask 64512
        %356 = vst.msk [vmem:[#allocation2] sm:$0xff] %vm355, 0.0
        %357 = vst.msk [vmem:[#allocation2 + $0x8] sm:$0xff] %vm355, 0.0
        %358 = vst.msk [vmem:[#allocation2 + $0x10] sm:$0xff] %vm355, 0.0
        %359 = vst.msk [vmem:[#allocation2 + $0x18] sm:$0xff] %vm355, 0.0
        %vm360 = vcmask 62464
        %361 = vst.msk [vmem:[#allocation2 + $0x20] sm:$0x3f] %vm360, 0.0
        %vm362 = vcmask 654912
        %363 = vst.msk [vmem:[#allocation2] sm:$0xff] %vm362, 0.0
        %364 = vst.msk [vmem:[#allocation2 + $0x8] sm:$0xff] %vm362, 0.0
        %365 = vst.msk [vmem:[#allocation2 + $0x10] sm:$0xff] %vm362, 0.0
        %366 = vst.msk [vmem:[#allocation2 + $0x18] sm:$0xff] %vm362, 0.0
        %vm367 = vcmask 652864
        %368 = vst.msk [vmem:[#allocation2 + $0x20] sm:$0x3f] %vm367, 0.0
        %s369 = scalar_lea.vmem %s310, %s354 [#allocation4]
        %v370 = vld [vmem:[%s369] sm:$0xff]
        %v371 = vld [vmem:[%s369 + $0x8] sm:$0xff]
        %374 = vrot.lane.b32.xlu0 %v370, 8
        %v375 = vpop.permute.xlu0 %374
        %376 = vrot.lane.b32.xlu0 %v371, 8
        %v377 = vpop.permute.xlu0 %376
        %vm380 = vcmask 588864
        %381 = vst.msk [vmem:[#allocation2 + $0xb] sm:$0xff] %vm380, %v375
        %382 = vst.msk [vmem:[#allocation2 + $0x13] sm:$0xff] %vm380, %v377
        %p383 = scmp.eq.s32.totalorder %s31, 0
        // Predicated region
        $region65: #{tpu_custom_call.1} parent=47 // pred_check
          %p384 = pneg %p383
        $region66: #{tpu_custom_call.1} parent=47 // pred_check_branch
          %386 = sbr.rel (%p384) target = $region68
        $region67: #{tpu_custom_call.1} parent=47 // pred_region
          %387 = vst.msk [vmem:[#allocation2] sm:$0xff] %vm380, 0.0
          %vm388 = vcmask 583744
          %389 = vst.msk [vmem:[#allocation2 + $0x8] sm:$0x7] %vm388, 0.0
        $region68: #{tpu_custom_call.1} parent=47 // pred_fallthru
          _
        %p390 = scmp.gt.s32.totalorder %s31, 0
        // Predicated region
        $region69: #{tpu_custom_call.1} parent=47 // pred_check
          %p391 = pneg %p390
        $region70: #{tpu_custom_call.1} parent=47 // pred_check_branch
          %393 = sbr.rel (%p391) target = $region72
        $region71: #{tpu_custom_call.1} parent=47 // pred_region
          %s394 = ssub.s32 %s354, 11
          %s395 = scalar_lea.vmem %s310, %s394 [#allocation4]
          %v396 = vld [vmem:[%s395] sm:$0xff]
          %v397 = vld [vmem:[%s395 + $0x8] sm:$0x7]
          %400 = vrot.lane.b32.xlu0 %v396, 8
          %v401 = vpop.permute.xlu0 %400
          %402 = vrot.lane.b32.xlu0 %v397, 8
          %v403 = vpop.permute.xlu0 %402
          %406 = vst.msk [vmem:[#allocation2] sm:$0xff] %vm380, %v401
          %vm407 = vcmask 583744
          %408 = vst.msk [vmem:[#allocation2 + $0x8] sm:$0x7] %vm407, %v403
        $region72: #{tpu_custom_call.1} parent=47 // pred_fallthru
          _
        // Predicated region
        $region73: #{tpu_custom_call.1} parent=47 // pred_check
          %p409 = pneg %p383
        $region74: #{tpu_custom_call.1} parent=47 // pred_check_branch
          %411 = sbr.rel (%p409) target = $region76
        $region75: #{tpu_custom_call.1} parent=47 // pred_region
          %412 = vst.msk [vmem:[#allocation2 + $0x1b] sm:$0xff] %vm380, 0.0
          %vm413 = vcmask 583744
          %414 = vst.msk [vmem:[#allocation2 + $0x23] sm:$0x7] %vm413, 0.0
        $region76: #{tpu_custom_call.1} parent=47 // pred_fallthru
          _
        %p415 = scmp.lt.s32.totalorder %s31, 0
        // Predicated region
        $region77: #{tpu_custom_call.1} parent=47 // pred_check
          %p416 = pneg %p415
        $region78: #{tpu_custom_call.1} parent=47 // pred_check_branch
          %418 = sbr.rel (%p416) target = $region80
        $region79: #{tpu_custom_call.1} parent=47 // pred_region
          %s419 = sadd.s32 %s354, 16
          %s420 = scalar_lea.vmem %s310, %s419 [#allocation4]
          %v421 = vld [vmem:[%s420] sm:$0xff]
          %v422 = vld [vmem:[%s420 + $0x8] sm:$0x7]
          %425 = vrot.lane.b32.xlu0 %v421, 8
          %v426 = vpop.permute.xlu0 %425
          %427 = vrot.lane.b32.xlu0 %v422, 8
          %v428 = vpop.permute.xlu0 %427
          %431 = vst.msk [vmem:[#allocation2 + $0x1b] sm:$0xff] %vm380, %v426
          %vm432 = vcmask 583744
          %433 = vst.msk [vmem:[#allocation2 + $0x23] sm:$0x7] %vm432, %v428
        $region80: #{tpu_custom_call.1} parent=47 // pred_fallthru
          _
        %v434 = vld [vmem:[%s2] sm:$0x1]
        %v436 = vlaneseq
        %v437 = vshrl.u32 %v436, 7
        %v438 = vsub.s32 0, %v437
        %v439 = vrot.slane %v434, %v438
        %v441 = vld [vmem:[#allocation2] sm:$0xff]
        %v442 = vld [vmem:[#allocation2 + $0x8] sm:$0xff]
        %v443 = vld [vmem:[#allocation2 + $0x10] sm:$0xff]
        %v444 = vld [vmem:[#allocation2 + $0x18] sm:$0xff]
        %v445 = vld [vmem:[#allocation2 + $0x20] sm:$0x3]
        %v446 = vld [vmem:[#allocation7] sm:$0x1]
        %v447 = vlaneseq
        %v448 = vshrl.u32 %v447, 7
        %v449 = vsub.s32 0, %v448
        %v450 = vrot.slane %v446, %v449
        %v451 = vmul.f32 %v441, %v450
        %v452 = vmul.f32 %v442, %v450
        %v453 = vmul.f32 %v443, %v450
        %v454 = vmul.f32 %v444, %v450
        %v455 = vmul.f32 %v445, %v450
        %v456 = vadd.f32 %v439, %v451
        %v457 = vadd.f32 %v439, %v452
        %v458 = vadd.f32 %v439, %v453
        %v459 = vadd.f32 %v439, %v454
        %v460 = vadd.f32 %v439, %v455
        %v461 = vld [vmem:[#allocation7 + $0x1] sm:$0x1]
        %v462 = vlaneseq
        %v463 = vshrl.u32 %v462, 7
        %v464 = vsub.s32 0, %v463
        %v465 = vrot.slane %v461, %v464
        %467 = vrot.lane.b32.xlu0 %v465, 4
        %v468 = vpop.permute.xlu0 %467
        %v470 = vmul.f32 %v441, %v468
        %v471 = vmul.f32 %v442, %v468
        %v472 = vmul.f32 %v443, %v468
        %v473 = vmul.f32 %v444, %v468
        %v474 = vmul.f32 %v445, %v468
        %480 = vrot.lane.b32.xlu0 %v470, 124
        %v481 = vpop.permute.xlu0 %480
        %482 = vrot.lane.b32.xlu0 %v471, 124
        %v483 = vpop.permute.xlu0 %482
        %484 = vrot.lane.b32.xlu0 %v472, 124
        %v485 = vpop.permute.xlu0 %484
        %486 = vrot.lane.b32.xlu0 %v473, 124
        %v487 = vpop.permute.xlu0 %486
        %488 = vrot.lane.b32.xlu0 %v474, 124
        %v489 = vpop.permute.xlu0 %488
        %v495 = vadd.f32 %v456, %v481
        %v496 = vadd.f32 %v457, %v483
        %v497 = vadd.f32 %v458, %v485
        %v498 = vadd.f32 %v459, %v487
        %v499 = vadd.f32 %v460, %v489
        %v500 = vld [vmem:[#allocation7 + $0x2] sm:$0x1]
        %v501 = vlaneseq
        %v502 = vshrl.u32 %v501, 7
        %v503 = vsub.s32 0, %v502
        %v504 = vrot.slane %v500, %v503
        %506 = vrot.lane.b32.xlu0 %v504, 8
        %v507 = vpop.permute.xlu0 %506
        %v509 = vmul.f32 %v441, %v507
        %v510 = vmul.f32 %v442, %v507
        %v511 = vmul.f32 %v443, %v507
        %v512 = vmul.f32 %v444, %v507
        %v513 = vmul.f32 %v445, %v507
        %519 = vrot.lane.b32.xlu0 %v509, 120
        %v520 = vpop.permute.xlu0 %519
        %521 = vrot.lane.b32.xlu0 %v510, 120
        %v522 = vpop.permute.xlu0 %521
        %523 = vrot.lane.b32.xlu0 %v511, 120
        %v524 = vpop.permute.xlu0 %523
        %525 = vrot.lane.b32.xlu0 %v512, 120
        %v526 = vpop.permute.xlu0 %525
        %527 = vrot.lane.b32.xlu0 %v513, 120
        %v528 = vpop.permute.xlu0 %527
        %v534 = vadd.f32 %v495, %v520
        %v535 = vadd.f32 %v496, %v522
        %v536 = vadd.f32 %v497, %v524
        %v537 = vadd.f32 %v498, %v526
        %v538 = vadd.f32 %v499, %v528
        %v539 = vld [vmem:[#allocation7 + $0x3] sm:$0x1]
        %v540 = vlaneseq
        %v541 = vshrl.u32 %v540, 7
        %v542 = vsub.s32 0, %v541
        %v543 = vrot.slane %v539, %v542
        %545 = vrot.lane.b32.xlu0 %v543, 12
        %v546 = vpop.permute.xlu0 %545
        %v548 = vmul.f32 %v441, %v546
        %v549 = vmul.f32 %v442, %v546
        %v550 = vmul.f32 %v443, %v546
        %v551 = vmul.f32 %v444, %v546
        %v552 = vmul.f32 %v445, %v546
        %558 = vrot.lane.b32.xlu0 %v548, 116
        %v559 = vpop.permute.xlu0 %558
        %560 = vrot.lane.b32.xlu0 %v549, 116
        %v561 = vpop.permute.xlu0 %560
        %562 = vrot.lane.b32.xlu0 %v550, 116
        %v563 = vpop.permute.xlu0 %562
        %564 = vrot.lane.b32.xlu0 %v551, 116
        %v565 = vpop.permute.xlu0 %564
        %566 = vrot.lane.b32.xlu0 %v552, 116
        %v567 = vpop.permute.xlu0 %566
        %v573 = vadd.f32 %v534, %v559
        %v574 = vadd.f32 %v535, %v561
        %v575 = vadd.f32 %v536, %v563
        %v576 = vadd.f32 %v537, %v565
        %v577 = vadd.f32 %v538, %v567
        %v578 = vld [vmem:[#allocation7 + $0x4] sm:$0x1]
        %v579 = vlaneseq
        %v580 = vshrl.u32 %v579, 7
        %v581 = vsub.s32 0, %v580
        %v582 = vrot.slane %v578, %v581
        %584 = vrot.lane.b32.xlu0 %v582, 16
        %v585 = vpop.permute.xlu0 %584
        %v587 = vmul.f32 %v441, %v585
        %v588 = vmul.f32 %v442, %v585
        %v589 = vmul.f32 %v443, %v585
        %v590 = vmul.f32 %v444, %v585
        %v591 = vmul.f32 %v445, %v585
        %597 = vrot.lane.b32.xlu0 %v587, 112
        %v598 = vpop.permute.xlu0 %597
        %599 = vrot.lane.b32.xlu0 %v588, 112
        %v600 = vpop.permute.xlu0 %599
        %601 = vrot.lane.b32.xlu0 %v589, 112
        %v602 = vpop.permute.xlu0 %601
        %603 = vrot.lane.b32.xlu0 %v590, 112
        %v604 = vpop.permute.xlu0 %603
        %605 = vrot.lane.b32.xlu0 %v591, 112
        %v606 = vpop.permute.xlu0 %605
        %v612 = vadd.f32 %v573, %v598
        %v613 = vadd.f32 %v574, %v600
        %v614 = vadd.f32 %v575, %v602
        %v615 = vadd.f32 %v576, %v604
        %v616 = vadd.f32 %v577, %v606
        %v617 = vld [vmem:[#allocation2 + $0x1] sm:$0xff]
        %v618 = vld [vmem:[#allocation2 + $0x9] sm:$0xff]
        %v619 = vld [vmem:[#allocation2 + $0x11] sm:$0xff]
        %v620 = vld [vmem:[#allocation2 + $0x19] sm:$0xff]
        %v621 = vld [vmem:[#allocation2 + $0x21] sm:$0x3]
        %s622 = scalar_lea.vmem [#allocation7], 8
        %v623 = vld [vmem:[%s622] sm:$0x1]
        %v624 = vlaneseq
        %v625 = vshrl.u32 %v624, 7
        %v626 = vsub.s32 0, %v625
        %v627 = vrot.slane %v623, %v626
        %v628 = vmul.f32 %v617, %v627
        %v629 = vmul.f32 %v618, %v627
        %v630 = vmul.f32 %v619, %v627
        %v631 = vmul.f32 %v620, %v627
        %v632 = vmul.f32 %v621, %v627
        %v633 = vadd.f32 %v612, %v628
        %v634 = vadd.f32 %v613, %v629
        %v635 = vadd.f32 %v614, %v630
        %v636 = vadd.f32 %v615, %v631
        %v637 = vadd.f32 %v616, %v632
        %v638 = vld [vmem:[%s622 + $0x1] sm:$0x1]
        %v639 = vlaneseq
        %v640 = vshrl.u32 %v639, 7
        %v641 = vsub.s32 0, %v640
        %v642 = vrot.slane %v638, %v641
        %644 = vrot.lane.b32.xlu0 %v642, 4
        %v645 = vpop.permute.xlu0 %644
        %v647 = vmul.f32 %v617, %v645
        %v648 = vmul.f32 %v618, %v645
        %v649 = vmul.f32 %v619, %v645
        %v650 = vmul.f32 %v620, %v645
        %v651 = vmul.f32 %v621, %v645
        %657 = vrot.lane.b32.xlu0 %v647, 124
        %v658 = vpop.permute.xlu0 %657
        %659 = vrot.lane.b32.xlu0 %v648, 124
        %v660 = vpop.permute.xlu0 %659
        %661 = vrot.lane.b32.xlu0 %v649, 124
        %v662 = vpop.permute.xlu0 %661
        %663 = vrot.lane.b32.xlu0 %v650, 124
        %v664 = vpop.permute.xlu0 %663
        %665 = vrot.lane.b32.xlu0 %v651, 124
        %v666 = vpop.permute.xlu0 %665
        %v672 = vadd.f32 %v633, %v658
        %v673 = vadd.f32 %v634, %v660
        %v674 = vadd.f32 %v635, %v662
        %v675 = vadd.f32 %v636, %v664
        %v676 = vadd.f32 %v637, %v666
        %v677 = vld [vmem:[%s622 + $0x2] sm:$0x1]
        %v678 = vlaneseq
        %v679 = vshrl.u32 %v678, 7
        %v680 = vsub.s32 0, %v679
        %v681 = vrot.slane %v677, %v680
        %683 = vrot.lane.b32.xlu0 %v681, 8
        %v684 = vpop.permute.xlu0 %683
        %v686 = vmul.f32 %v617, %v684
        %v687 = vmul.f32 %v618, %v684
        %v688 = vmul.f32 %v619, %v684
        %v689 = vmul.f32 %v620, %v684
        %v690 = vmul.f32 %v621, %v684
        %696 = vrot.lane.b32.xlu0 %v686, 120
        %v697 = vpop.permute.xlu0 %696
        %698 = vrot.lane.b32.xlu0 %v687, 120
        %v699 = vpop.permute.xlu0 %698
        %700 = vrot.lane.b32.xlu0 %v688, 120
        %v701 = vpop.permute.xlu0 %700
        %702 = vrot.lane.b32.xlu0 %v689, 120
        %v703 = vpop.permute.xlu0 %702
        %704 = vrot.lane.b32.xlu0 %v690, 120
        %v705 = vpop.permute.xlu0 %704
        %v711 = vadd.f32 %v672, %v697
        %v712 = vadd.f32 %v673, %v699
        %v713 = vadd.f32 %v674, %v701
        %v714 = vadd.f32 %v675, %v703
        %v715 = vadd.f32 %v676, %v705
        %v716 = vld [vmem:[%s622 + $0x3] sm:$0x1]
        %v717 = vlaneseq
        %v718 = vshrl.u32 %v717, 7
        %v719 = vsub.s32 0, %v718
        %v720 = vrot.slane %v716, %v719
        %722 = vrot.lane.b32.xlu0 %v720, 12
        %v723 = vpop.permute.xlu0 %722
        %v725 = vmul.f32 %v617, %v723
        %v726 = vmul.f32 %v618, %v723
        %v727 = vmul.f32 %v619, %v723
        %v728 = vmul.f32 %v620, %v723
        %v729 = vmul.f32 %v621, %v723
        %735 = vrot.lane.b32.xlu0 %v725, 116
        %v736 = vpop.permute.xlu0 %735
        %737 = vrot.lane.b32.xlu0 %v726, 116
        %v738 = vpop.permute.xlu0 %737
        %739 = vrot.lane.b32.xlu0 %v727, 116
        %v740 = vpop.permute.xlu0 %739
        %741 = vrot.lane.b32.xlu0 %v728, 116
        %v742 = vpop.permute.xlu0 %741
        %743 = vrot.lane.b32.xlu0 %v729, 116
        %v744 = vpop.permute.xlu0 %743
        %v750 = vadd.f32 %v711, %v736
        %v751 = vadd.f32 %v712, %v738
        %v752 = vadd.f32 %v713, %v740
        %v753 = vadd.f32 %v714, %v742
        %v754 = vadd.f32 %v715, %v744
        %v755 = vld [vmem:[%s622 + $0x4] sm:$0x1]
        %v756 = vlaneseq
        %v757 = vshrl.u32 %v756, 7
        %v758 = vsub.s32 0, %v757
        %v759 = vrot.slane %v755, %v758
        %761 = vrot.lane.b32.xlu0 %v759, 16
        %v762 = vpop.permute.xlu0 %761
        %v764 = vmul.f32 %v617, %v762
        %v765 = vmul.f32 %v618, %v762
        %v766 = vmul.f32 %v619, %v762
        %v767 = vmul.f32 %v620, %v762
        %v768 = vmul.f32 %v621, %v762
        %774 = vrot.lane.b32.xlu0 %v764, 112
        %v775 = vpop.permute.xlu0 %774
        %776 = vrot.lane.b32.xlu0 %v765, 112
        %v777 = vpop.permute.xlu0 %776
        %778 = vrot.lane.b32.xlu0 %v766, 112
        %v779 = vpop.permute.xlu0 %778
        %780 = vrot.lane.b32.xlu0 %v767, 112
        %v781 = vpop.permute.xlu0 %780
        %782 = vrot.lane.b32.xlu0 %v768, 112
        %v783 = vpop.permute.xlu0 %782
        %v789 = vadd.f32 %v750, %v775
        %v790 = vadd.f32 %v751, %v777
        %v791 = vadd.f32 %v752, %v779
        %v792 = vadd.f32 %v753, %v781
        %v793 = vadd.f32 %v754, %v783
        %v794 = vld [vmem:[#allocation2 + $0x2] sm:$0xff]
        %v795 = vld [vmem:[#allocation2 + $0xa] sm:$0xff]
        %v796 = vld [vmem:[#allocation2 + $0x12] sm:$0xff]
        %v797 = vld [vmem:[#allocation2 + $0x1a] sm:$0xff]
        %v798 = vld [vmem:[#allocation2 + $0x22] sm:$0x3]
        %s799 = scalar_lea.vmem [#allocation7], 16
        %v800 = vld [vmem:[%s799] sm:$0x1]
        %v801 = vlaneseq
        %v802 = vshrl.u32 %v801, 7
        %v803 = vsub.s32 0, %v802
        %v804 = vrot.slane %v800, %v803
        %v805 = vmul.f32 %v794, %v804
        %v806 = vmul.f32 %v795, %v804
        %v807 = vmul.f32 %v796, %v804
        %v808 = vmul.f32 %v797, %v804
        %v809 = vmul.f32 %v798, %v804
        %v810 = vadd.f32 %v789, %v805
        %v811 = vadd.f32 %v790, %v806
        %v812 = vadd.f32 %v791, %v807
        %v813 = vadd.f32 %v792, %v808
        %v814 = vadd.f32 %v793, %v809
        %v815 = vld [vmem:[%s799 + $0x1] sm:$0x1]
        %v816 = vlaneseq
        %v817 = vshrl.u32 %v816, 7
        %v818 = vsub.s32 0, %v817
        %v819 = vrot.slane %v815, %v818
        %821 = vrot.lane.b32.xlu0 %v819, 4
        %v822 = vpop.permute.xlu0 %821
        %v824 = vmul.f32 %v794, %v822
        %v825 = vmul.f32 %v795, %v822
        %v826 = vmul.f32 %v796, %v822
        %v827 = vmul.f32 %v797, %v822
        %v828 = vmul.f32 %v798, %v822
        %834 = vrot.lane.b32.xlu0 %v824, 124
        %v835 = vpop.permute.xlu0 %834
        %836 = vrot.lane.b32.xlu0 %v825, 124
        %v837 = vpop.permute.xlu0 %836
        %838 = vrot.lane.b32.xlu0 %v826, 124
        %v839 = vpop.permute.xlu0 %838
        %840 = vrot.lane.b32.xlu0 %v827, 124
        %v841 = vpop.permute.xlu0 %840
        %842 = vrot.lane.b32.xlu0 %v828, 124
        %v843 = vpop.permute.xlu0 %842
        %v849 = vadd.f32 %v810, %v835
        %v850 = vadd.f32 %v811, %v837
        %v851 = vadd.f32 %v812, %v839
        %v852 = vadd.f32 %v813, %v841
        %v853 = vadd.f32 %v814, %v843
        %v854 = vld [vmem:[%s799 + $0x2] sm:$0x1]
        %v855 = vlaneseq
        %v856 = vshrl.u32 %v855, 7
        %v857 = vsub.s32 0, %v856
        %v858 = vrot.slane %v854, %v857
        %860 = vrot.lane.b32.xlu0 %v858, 8
        %v861 = vpop.permute.xlu0 %860
        %v863 = vmul.f32 %v794, %v861
        %v864 = vmul.f32 %v795, %v861
        %v865 = vmul.f32 %v796, %v861
        %v866 = vmul.f32 %v797, %v861
        %v867 = vmul.f32 %v798, %v861
        %873 = vrot.lane.b32.xlu0 %v863, 120
        %v874 = vpop.permute.xlu0 %873
        %875 = vrot.lane.b32.xlu0 %v864, 120
        %v876 = vpop.permute.xlu0 %875
        %877 = vrot.lane.b32.xlu0 %v865, 120
        %v878 = vpop.permute.xlu0 %877
        %879 = vrot.lane.b32.xlu0 %v866, 120
        %v880 = vpop.permute.xlu0 %879
        %881 = vrot.lane.b32.xlu0 %v867, 120
        %v882 = vpop.permute.xlu0 %881
        %v888 = vadd.f32 %v849, %v874
        %v889 = vadd.f32 %v850, %v876
        %v890 = vadd.f32 %v851, %v878
        %v891 = vadd.f32 %v852, %v880
        %v892 = vadd.f32 %v853, %v882
        %v893 = vld [vmem:[%s799 + $0x3] sm:$0x1]
        %v894 = vlaneseq
        %v895 = vshrl.u32 %v894, 7
        %v896 = vsub.s32 0, %v895
        %v897 = vrot.slane %v893, %v896
        %899 = vrot.lane.b32.xlu0 %v897, 12
        %v900 = vpop.permute.xlu0 %899
        %v902 = vmul.f32 %v794, %v900
        %v903 = vmul.f32 %v795, %v900
        %v904 = vmul.f32 %v796, %v900
        %v905 = vmul.f32 %v797, %v900
        %v906 = vmul.f32 %v798, %v900
        %912 = vrot.lane.b32.xlu0 %v902, 116
        %v913 = vpop.permute.xlu0 %912
        %914 = vrot.lane.b32.xlu0 %v903, 116
        %v915 = vpop.permute.xlu0 %914
        %916 = vrot.lane.b32.xlu0 %v904, 116
        %v917 = vpop.permute.xlu0 %916
        %918 = vrot.lane.b32.xlu0 %v905, 116
        %v919 = vpop.permute.xlu0 %918
        %920 = vrot.lane.b32.xlu0 %v906, 116
        %v921 = vpop.permute.xlu0 %920
        %v927 = vadd.f32 %v888, %v913
        %v928 = vadd.f32 %v889, %v915
        %v929 = vadd.f32 %v890, %v917
        %v930 = vadd.f32 %v891, %v919
        %v931 = vadd.f32 %v892, %v921
        %v932 = vld [vmem:[%s799 + $0x4] sm:$0x1]
        %v933 = vlaneseq
        %v934 = vshrl.u32 %v933, 7
        %v935 = vsub.s32 0, %v934
        %v936 = vrot.slane %v932, %v935
        %938 = vrot.lane.b32.xlu0 %v936, 16
        %v939 = vpop.permute.xlu0 %938
        %v941 = vmul.f32 %v794, %v939
        %v942 = vmul.f32 %v795, %v939
        %v943 = vmul.f32 %v796, %v939
        %v944 = vmul.f32 %v797, %v939
        %v945 = vmul.f32 %v798, %v939
        %951 = vrot.lane.b32.xlu0 %v941, 112
        %v952 = vpop.permute.xlu0 %951
        %953 = vrot.lane.b32.xlu0 %v942, 112
        %v954 = vpop.permute.xlu0 %953
        %955 = vrot.lane.b32.xlu0 %v943, 112
        %v956 = vpop.permute.xlu0 %955
        %957 = vrot.lane.b32.xlu0 %v944, 112
        %v958 = vpop.permute.xlu0 %957
        %959 = vrot.lane.b32.xlu0 %v945, 112
        %v960 = vpop.permute.xlu0 %959
        %v966 = vadd.f32 %v927, %v952
        %v967 = vadd.f32 %v928, %v954
        %v968 = vadd.f32 %v929, %v956
        %v969 = vadd.f32 %v930, %v958
        %v970 = vadd.f32 %v931, %v960
        %v971 = vld [vmem:[#allocation2 + $0x3] sm:$0xff]
        %v972 = vld [vmem:[#allocation2 + $0xb] sm:$0xff]
        %v973 = vld [vmem:[#allocation2 + $0x13] sm:$0xff]
        %v974 = vld [vmem:[#allocation2 + $0x1b] sm:$0xff]
        %v975 = vld [vmem:[#allocation2 + $0x23] sm:$0x3]
        %s976 = scalar_lea.vmem [#allocation7], 24
        %v977 = vld [vmem:[%s976] sm:$0x1]
        %v978 = vlaneseq
        %v979 = vshrl.u32 %v978, 7
        %v980 = vsub.s32 0, %v979
        %v981 = vrot.slane %v977, %v980
        %v982 = vmul.f32 %v971, %v981
        %v983 = vmul.f32 %v972, %v981
        %v984 = vmul.f32 %v973, %v981
        %v985 = vmul.f32 %v974, %v981
        %v986 = vmul.f32 %v975, %v981
        %v987 = vadd.f32 %v966, %v982
        %v988 = vadd.f32 %v967, %v983
        %v989 = vadd.f32 %v968, %v984
        %v990 = vadd.f32 %v969, %v985
        %v991 = vadd.f32 %v970, %v986
        %v992 = vld [vmem:[%s976 + $0x1] sm:$0x1]
        %v993 = vlaneseq
        %v994 = vshrl.u32 %v993, 7
        %v995 = vsub.s32 0, %v994
        %v996 = vrot.slane %v992, %v995
        %998 = vrot.lane.b32.xlu0 %v996, 4
        %v999 = vpop.permute.xlu0 %998
        %v1001 = vmul.f32 %v971, %v999
        %v1002 = vmul.f32 %v972, %v999
        %v1003 = vmul.f32 %v973, %v999
        %v1004 = vmul.f32 %v974, %v999
        %v1005 = vmul.f32 %v975, %v999
        %1011 = vrot.lane.b32.xlu0 %v1001, 124
        %v1012 = vpop.permute.xlu0 %1011
        %1013 = vrot.lane.b32.xlu0 %v1002, 124
        %v1014 = vpop.permute.xlu0 %1013
        %1015 = vrot.lane.b32.xlu0 %v1003, 124
        %v1016 = vpop.permute.xlu0 %1015
        %1017 = vrot.lane.b32.xlu0 %v1004, 124
        %v1018 = vpop.permute.xlu0 %1017
        %1019 = vrot.lane.b32.xlu0 %v1005, 124
        %v1020 = vpop.permute.xlu0 %1019
        %v1026 = vadd.f32 %v987, %v1012
        %v1027 = vadd.f32 %v988, %v1014
        %v1028 = vadd.f32 %v989, %v1016
        %v1029 = vadd.f32 %v990, %v1018
        %v1030 = vadd.f32 %v991, %v1020
        %v1031 = vld [vmem:[%s976 + $0x2] sm:$0x1]
        %v1032 = vlaneseq
        %v1033 = vshrl.u32 %v1032, 7
        %v1034 = vsub.s32 0, %v1033
        %v1035 = vrot.slane %v1031, %v1034
        %1037 = vrot.lane.b32.xlu0 %v1035, 8
        %v1038 = vpop.permute.xlu0 %1037
        %v1040 = vmul.f32 %v971, %v1038
        %v1041 = vmul.f32 %v972, %v1038
        %v1042 = vmul.f32 %v973, %v1038
        %v1043 = vmul.f32 %v974, %v1038
        %v1044 = vmul.f32 %v975, %v1038
        %1050 = vrot.lane.b32.xlu0 %v1040, 120
        %v1051 = vpop.permute.xlu0 %1050
        %1052 = vrot.lane.b32.xlu0 %v1041, 120
        %v1053 = vpop.permute.xlu0 %1052
        %1054 = vrot.lane.b32.xlu0 %v1042, 120
        %v1055 = vpop.permute.xlu0 %1054
        %1056 = vrot.lane.b32.xlu0 %v1043, 120
        %v1057 = vpop.permute.xlu0 %1056
        %1058 = vrot.lane.b32.xlu0 %v1044, 120
        %v1059 = vpop.permute.xlu0 %1058
        %v1065 = vadd.f32 %v1026, %v1051
        %v1066 = vadd.f32 %v1027, %v1053
        %v1067 = vadd.f32 %v1028, %v1055
        %v1068 = vadd.f32 %v1029, %v1057
        %v1069 = vadd.f32 %v1030, %v1059
        %v1070 = vld [vmem:[%s976 + $0x3] sm:$0x1]
        %v1071 = vlaneseq
        %v1072 = vshrl.u32 %v1071, 7
        %v1073 = vsub.s32 0, %v1072
        %v1074 = vrot.slane %v1070, %v1073
        %1076 = vrot.lane.b32.xlu0 %v1074, 12
        %v1077 = vpop.permute.xlu0 %1076
        %v1079 = vmul.f32 %v971, %v1077
        %v1080 = vmul.f32 %v972, %v1077
        %v1081 = vmul.f32 %v973, %v1077
        %v1082 = vmul.f32 %v974, %v1077
        %v1083 = vmul.f32 %v975, %v1077
        %1089 = vrot.lane.b32.xlu0 %v1079, 116
        %v1090 = vpop.permute.xlu0 %1089
        %1091 = vrot.lane.b32.xlu0 %v1080, 116
        %v1092 = vpop.permute.xlu0 %1091
        %1093 = vrot.lane.b32.xlu0 %v1081, 116
        %v1094 = vpop.permute.xlu0 %1093
        %1095 = vrot.lane.b32.xlu0 %v1082, 116
        %v1096 = vpop.permute.xlu0 %1095
        %1097 = vrot.lane.b32.xlu0 %v1083, 116
        %v1098 = vpop.permute.xlu0 %1097
        %v1104 = vadd.f32 %v1065, %v1090
        %v1105 = vadd.f32 %v1066, %v1092
        %v1106 = vadd.f32 %v1067, %v1094
        %v1107 = vadd.f32 %v1068, %v1096
        %v1108 = vadd.f32 %v1069, %v1098
        %v1109 = vld [vmem:[%s976 + $0x4] sm:$0x1]
        %v1110 = vlaneseq
        %v1111 = vshrl.u32 %v1110, 7
        %v1112 = vsub.s32 0, %v1111
        %v1113 = vrot.slane %v1109, %v1112
        %1115 = vrot.lane.b32.xlu0 %v1113, 16
        %v1116 = vpop.permute.xlu0 %1115
        %v1118 = vmul.f32 %v971, %v1116
        %v1119 = vmul.f32 %v972, %v1116
        %v1120 = vmul.f32 %v973, %v1116
        %v1121 = vmul.f32 %v974, %v1116
        %v1122 = vmul.f32 %v975, %v1116
        %1128 = vrot.lane.b32.xlu0 %v1118, 112
        %v1129 = vpop.permute.xlu0 %1128
        %1130 = vrot.lane.b32.xlu0 %v1119, 112
        %v1131 = vpop.permute.xlu0 %1130
        %1132 = vrot.lane.b32.xlu0 %v1120, 112
        %v1133 = vpop.permute.xlu0 %1132
        %1134 = vrot.lane.b32.xlu0 %v1121, 112
        %v1135 = vpop.permute.xlu0 %1134
        %1136 = vrot.lane.b32.xlu0 %v1122, 112
        %v1137 = vpop.permute.xlu0 %1136
        %v1143 = vadd.f32 %v1104, %v1129
        %v1144 = vadd.f32 %v1105, %v1131
        %v1145 = vadd.f32 %v1106, %v1133
        %v1146 = vadd.f32 %v1107, %v1135
        %v1147 = vadd.f32 %v1108, %v1137
        %v1148 = vld [vmem:[#allocation2 + $0x4] sm:$0xff]
        %v1149 = vld [vmem:[#allocation2 + $0xc] sm:$0xff]
        %v1150 = vld [vmem:[#allocation2 + $0x14] sm:$0xff]
        %v1151 = vld [vmem:[#allocation2 + $0x1c] sm:$0xff]
        %v1152 = vld [vmem:[#allocation2 + $0x24] sm:$0x3]
        %s1153 = scalar_lea.vmem [#allocation7], 32
        %v1154 = vld [vmem:[%s1153] sm:$0x1]
        %v1155 = vlaneseq
        %v1156 = vshrl.u32 %v1155, 7
        %v1157 = vsub.s32 0, %v1156
        %v1158 = vrot.slane %v1154, %v1157
        %v1159 = vmul.f32 %v1148, %v1158
        %v1160 = vmul.f32 %v1149, %v1158
        %v1161 = vmul.f32 %v1150, %v1158
        %v1162 = vmul.f32 %v1151, %v1158
        %v1163 = vmul.f32 %v1152, %v1158
        %v1164 = vadd.f32 %v1143, %v1159
        %v1165 = vadd.f32 %v1144, %v1160
        %v1166 = vadd.f32 %v1145, %v1161
        %v1167 = vadd.f32 %v1146, %v1162
        %v1168 = vadd.f32 %v1147, %v1163
        %v1169 = vld [vmem:[%s1153 + $0x1] sm:$0x1]
        %v1170 = vlaneseq
        %v1171 = vshrl.u32 %v1170, 7
        %v1172 = vsub.s32 0, %v1171
        %v1173 = vrot.slane %v1169, %v1172
        %1175 = vrot.lane.b32.xlu0 %v1173, 4
        %v1176 = vpop.permute.xlu0 %1175
        %v1178 = vmul.f32 %v1148, %v1176
        %v1179 = vmul.f32 %v1149, %v1176
        %v1180 = vmul.f32 %v1150, %v1176
        %v1181 = vmul.f32 %v1151, %v1176
        %v1182 = vmul.f32 %v1152, %v1176
        %1188 = vrot.lane.b32.xlu0 %v1178, 124
        %v1189 = vpop.permute.xlu0 %1188
        %1190 = vrot.lane.b32.xlu0 %v1179, 124
        %v1191 = vpop.permute.xlu0 %1190
        %1192 = vrot.lane.b32.xlu0 %v1180, 124
        %v1193 = vpop.permute.xlu0 %1192
        %1194 = vrot.lane.b32.xlu0 %v1181, 124
        %v1195 = vpop.permute.xlu0 %1194
        %1196 = vrot.lane.b32.xlu0 %v1182, 124
        %v1197 = vpop.permute.xlu0 %1196
        %v1203 = vadd.f32 %v1164, %v1189
        %v1204 = vadd.f32 %v1165, %v1191
        %v1205 = vadd.f32 %v1166, %v1193
        %v1206 = vadd.f32 %v1167, %v1195
        %v1207 = vadd.f32 %v1168, %v1197
        %v1208 = vld [vmem:[%s1153 + $0x2] sm:$0x1]
        %v1209 = vlaneseq
        %v1210 = vshrl.u32 %v1209, 7
        %v1211 = vsub.s32 0, %v1210
        %v1212 = vrot.slane %v1208, %v1211
        %1214 = vrot.lane.b32.xlu0 %v1212, 8
        %v1215 = vpop.permute.xlu0 %1214
        %v1217 = vmul.f32 %v1148, %v1215
        %v1218 = vmul.f32 %v1149, %v1215
        %v1219 = vmul.f32 %v1150, %v1215
        %v1220 = vmul.f32 %v1151, %v1215
        %v1221 = vmul.f32 %v1152, %v1215
        %1227 = vrot.lane.b32.xlu0 %v1217, 120
        %v1228 = vpop.permute.xlu0 %1227
        %1229 = vrot.lane.b32.xlu0 %v1218, 120
        %v1230 = vpop.permute.xlu0 %1229
        %1231 = vrot.lane.b32.xlu0 %v1219, 120
        %v1232 = vpop.permute.xlu0 %1231
        %1233 = vrot.lane.b32.xlu0 %v1220, 120
        %v1234 = vpop.permute.xlu0 %1233
        %1235 = vrot.lane.b32.xlu0 %v1221, 120
        %v1236 = vpop.permute.xlu0 %1235
        %v1242 = vadd.f32 %v1203, %v1228
        %v1243 = vadd.f32 %v1204, %v1230
        %v1244 = vadd.f32 %v1205, %v1232
        %v1245 = vadd.f32 %v1206, %v1234
        %v1246 = vadd.f32 %v1207, %v1236
        %v1247 = vld [vmem:[%s1153 + $0x3] sm:$0x1]
        %v1248 = vlaneseq
        %v1249 = vshrl.u32 %v1248, 7
        %v1250 = vsub.s32 0, %v1249
        %v1251 = vrot.slane %v1247, %v1250
        %1253 = vrot.lane.b32.xlu0 %v1251, 12
        %v1254 = vpop.permute.xlu0 %1253
        %v1256 = vmul.f32 %v1148, %v1254
        %v1257 = vmul.f32 %v1149, %v1254
        %v1258 = vmul.f32 %v1150, %v1254
        %v1259 = vmul.f32 %v1151, %v1254
        %v1260 = vmul.f32 %v1152, %v1254
        %1266 = vrot.lane.b32.xlu0 %v1256, 116
        %v1267 = vpop.permute.xlu0 %1266
        %1268 = vrot.lane.b32.xlu0 %v1257, 116
        %v1269 = vpop.permute.xlu0 %1268
        %1270 = vrot.lane.b32.xlu0 %v1258, 116
        %v1271 = vpop.permute.xlu0 %1270
        %1272 = vrot.lane.b32.xlu0 %v1259, 116
        %v1273 = vpop.permute.xlu0 %1272
        %1274 = vrot.lane.b32.xlu0 %v1260, 116
        %v1275 = vpop.permute.xlu0 %1274
        %v1281 = vadd.f32 %v1242, %v1267
        %v1282 = vadd.f32 %v1243, %v1269
        %v1283 = vadd.f32 %v1244, %v1271
        %v1284 = vadd.f32 %v1245, %v1273
        %v1285 = vadd.f32 %v1246, %v1275
        %v1286 = vld [vmem:[%s1153 + $0x4] sm:$0x1]
        %v1287 = vlaneseq
        %v1288 = vshrl.u32 %v1287, 7
        %v1289 = vsub.s32 0, %v1288
        %v1290 = vrot.slane %v1286, %v1289
        %1292 = vrot.lane.b32.xlu0 %v1290, 16
        %v1293 = vpop.permute.xlu0 %1292
        %v1295 = vmul.f32 %v1148, %v1293
        %v1296 = vmul.f32 %v1149, %v1293
        %v1297 = vmul.f32 %v1150, %v1293
        %v1298 = vmul.f32 %v1151, %v1293
        %v1299 = vmul.f32 %v1152, %v1293
        %1305 = vrot.lane.b32.xlu0 %v1295, 112
        %v1306 = vpop.permute.xlu0 %1305
        %1307 = vrot.lane.b32.xlu0 %v1296, 112
        %v1308 = vpop.permute.xlu0 %1307
        %1309 = vrot.lane.b32.xlu0 %v1297, 112
        %v1310 = vpop.permute.xlu0 %1309
        %1311 = vrot.lane.b32.xlu0 %v1298, 112
        %v1312 = vpop.permute.xlu0 %1311
        %1313 = vrot.lane.b32.xlu0 %v1299, 112
        %v1314 = vpop.permute.xlu0 %1313
        %v1320 = vadd.f32 %v1281, %v1306
        %v1321 = vadd.f32 %v1282, %v1308
        %v1322 = vadd.f32 %v1283, %v1310
        %v1323 = vadd.f32 %v1284, %v1312
        %v1324 = vadd.f32 %v1285, %v1314
        %vm1325 = vcmask 293888
        %1326 = vst.msk [vmem:[#allocation3] sm:$0xff] %vm1325, 0.0
        %1327 = vst.msk [vmem:[#allocation3 + $0x10] sm:$0xff] %vm1325, 0.0
        %1328 = vst.msk [vmem:[#allocation3 + $0x20] sm:$0xff] %vm1325, 0.0
        %1329 = vst.msk [vmem:[#allocation3 + $0x30] sm:$0xff] %vm1325, 0.0
        %vm1330 = vcmask 287744
        %1331 = vst.msk [vmem:[#allocation3 + $0x40] sm:$0x3] %vm1330, 0.0
        %vm1332 = vcmask 1048352
        %1333 = vst.msk [vmem:[#allocation3] sm:$0xff] %vm1332, 0.0
        %1334 = vst.msk [vmem:[#allocation3 + $0x8] sm:$0xff] %vm355, 0.0
        %1335 = vst.msk [vmem:[#allocation3 + $0x10] sm:$0xff] %vm1332, 0.0
        %1336 = vst.msk [vmem:[#allocation3 + $0x18] sm:$0xff] %vm355, 0.0
        %1337 = vst.msk [vmem:[#allocation3 + $0x20] sm:$0xff] %vm1332, 0.0
        %1338 = vst.msk [vmem:[#allocation3 + $0x28] sm:$0xff] %vm355, 0.0
        %1339 = vst.msk [vmem:[#allocation3 + $0x30] sm:$0xff] %vm1332, 0.0
        %1340 = vst.msk [vmem:[#allocation3 + $0x38] sm:$0xff] %vm355, 0.0
        %vm1341 = vcmask 1042208
        %1342 = vst.msk [vmem:[#allocation3 + $0x40] sm:$0x3] %vm1341, 0.0
        %vm1343 = vcmask 58368
        %1344 = vst.msk [vmem:[#allocation3 + $0x48] sm:$0x3] %vm1343, 0.0
        %1350 = vrot.lane.b32.xlu0 %v1320, 36
        %v1351 = vpop.permute.xlu0 %1350
        %1352 = vrot.lane.b32.xlu0 %v1321, 36
        %v1353 = vpop.permute.xlu0 %1352
        %1354 = vrot.lane.b32.xlu0 %v1322, 36
        %v1355 = vpop.permute.xlu0 %1354
        %1356 = vrot.lane.b32.xlu0 %v1323, 36
        %v1357 = vpop.permute.xlu0 %1356
        %1358 = vrot.lane.b32.xlu0 %v1324, 36
        %v1359 = vpop.permute.xlu0 %1358
        %vm1365 = vcmask 818464
        %1366 = vst.msk [vmem:[#allocation3] sm:$0xff] %vm1365, %v1351
        %1367 = vst.msk [vmem:[#allocation3 + $0x10] sm:$0xff] %vm1365, %v1353
        %1368 = vst.msk [vmem:[#allocation3 + $0x20] sm:$0xff] %vm1365, %v1355
        %1369 = vst.msk [vmem:[#allocation3 + $0x30] sm:$0xff] %vm1365, %v1357
        %vm1370 = vcmask 812320
        %1371 = vst.msk [vmem:[#allocation3 + $0x40] sm:$0x3] %vm1370, %v1359
        // Predicated region
        $region81: #{tpu_custom_call.1} parent=47 // pred_check
          %p1372 = pneg %p383
        $region82: #{tpu_custom_call.1} parent=47 // pred_check_branch
          %1374 = sbr.rel (%p1372) target = $region84
        $region83: #{tpu_custom_call.1} parent=47 // pred_region
          %1375 = vst.msk [vmem:[#allocation3] sm:$0xff] %vm1365, 0.0
          %vm1376 = vcmask 811296
          %1377 = vst.msk [vmem:[#allocation3 + $0x10] sm:$0x1] %vm1376, 0.0
          %vm1378 = vcmask 818465
          %1379 = vst.msk [vmem:[#allocation3 + $0x30] sm:$0xfe] %vm1378, 0.0
          %1380 = vst.msk [vmem:[#allocation3 + $0x40] sm:$0x3] %vm1370, 0.0
        $region84: #{tpu_custom_call.1} parent=47 // pred_fallthru
          _
        %v1381 = vld [vmem:[#allocation10] sm:$0x1]
        %v1383 = vlaneseq
        %v1384 = vshrl.u32 %v1383, 7
        %v1385 = vsub.s32 0, %v1384
        %v1386 = vrot.slane %v1381, %v1385
        %v1388 = vld [vmem:[#allocation3] sm:$0xff]
        %v1389 = vld [vmem:[#allocation3 + $0x10] sm:$0xff]
        %v1390 = vld [vmem:[#allocation9] sm:$0x1]
        %v1391 = vlaneseq
        %v1392 = vshrl.u32 %v1391, 7
        %v1393 = vsub.s32 0, %v1392
        %v1394 = vrot.slane %v1390, %v1393
        %v1395 = vmul.f32 %v1388, %v1394
        %v1396 = vmul.f32 %v1389, %v1394
        %v1397 = vadd.f32 %v1386, %v1395
        %v1398 = vadd.f32 %v1386, %v1396
        %v1399 = vld [vmem:[#allocation9 + $0x1] sm:$0x1]
        %v1400 = vlaneseq
        %v1401 = vshrl.u32 %v1400, 7
        %v1402 = vsub.s32 0, %v1401
        %v1403 = vrot.slane %v1399, %v1402
        %1405 = vrot.lane.b32.xlu0 %v1403, 12
        %v1406 = vpop.permute.xlu0 %1405
        %v1408 = vmul.f32 %v1388, %v1406
        %v1409 = vmul.f32 %v1389, %v1406
        %1412 = vrot.lane.b32.xlu0 %v1408, 116
        %v1413 = vpop.permute.xlu0 %1412
        %1414 = vrot.lane.b32.xlu0 %v1409, 116
        %v1415 = vpop.permute.xlu0 %1414
        %v1418 = vadd.f32 %v1397, %v1413
        %v1419 = vadd.f32 %v1398, %v1415
        %v1420 = vld [vmem:[#allocation9 + $0x2] sm:$0x1]
        %v1421 = vlaneseq
        %v1422 = vshrl.u32 %v1421, 7
        %v1423 = vsub.s32 0, %v1422
        %v1424 = vrot.slane %v1420, %v1423
        %1426 = vrot.lane.b32.xlu0 %v1424, 24
        %v1427 = vpop.permute.xlu0 %1426
        %v1429 = vmul.f32 %v1388, %v1427
        %v1430 = vmul.f32 %v1389, %v1427
        %1433 = vrot.lane.b32.xlu0 %v1429, 104
        %v1434 = vpop.permute.xlu0 %1433
        %1435 = vrot.lane.b32.xlu0 %v1430, 104
        %v1436 = vpop.permute.xlu0 %1435
        %v1439 = vadd.f32 %v1418, %v1434
        %v1440 = vadd.f32 %v1419, %v1436
        %v1441 = vld [vmem:[#allocation9 + $0x3] sm:$0x1]
        %v1442 = vlaneseq
        %v1443 = vshrl.u32 %v1442, 7
        %v1444 = vsub.s32 0, %v1443
        %v1445 = vrot.slane %v1441, %v1444
        %1447 = vrot.lane.b32.xlu0 %v1445, 36
        %v1448 = vpop.permute.xlu0 %1447
        %v1450 = vmul.f32 %v1388, %v1448
        %v1451 = vmul.f32 %v1389, %v1448
        %1454 = vrot.lane.b32.xlu0 %v1450, 92
        %v1455 = vpop.permute.xlu0 %1454
        %1456 = vrot.lane.b32.xlu0 %v1451, 92
        %v1457 = vpop.permute.xlu0 %1456
        %v1460 = vadd.f32 %v1439, %v1455
        %v1461 = vadd.f32 %v1440, %v1457
        %v1462 = vld [vmem:[#allocation9 + $0x4] sm:$0x1]
        %v1463 = vlaneseq
        %v1464 = vshrl.u32 %v1463, 7
        %v1465 = vsub.s32 0, %v1464
        %v1466 = vrot.slane %v1462, %v1465
        %1468 = vrot.lane.b32.xlu0 %v1466, 48
        %v1469 = vpop.permute.xlu0 %1468
        %v1471 = vmul.f32 %v1388, %v1469
        %v1472 = vmul.f32 %v1389, %v1469
        %1475 = vrot.lane.b32.xlu0 %v1471, 80
        %v1476 = vpop.permute.xlu0 %1475
        %1477 = vrot.lane.b32.xlu0 %v1472, 80
        %v1478 = vpop.permute.xlu0 %1477
        %v1481 = vadd.f32 %v1460, %v1476
        %v1482 = vadd.f32 %v1461, %v1478
        %v1483 = vld [vmem:[#allocation9 + $0x5] sm:$0x1]
        %v1484 = vlaneseq
        %v1485 = vshrl.u32 %v1484, 7
        %v1486 = vsub.s32 0, %v1485
        %v1487 = vrot.slane %v1483, %v1486
        %1489 = vrot.lane.b32.xlu0 %v1487, 60
        %v1490 = vpop.permute.xlu0 %1489
        %v1492 = vmul.f32 %v1388, %v1490
        %v1493 = vmul.f32 %v1389, %v1490
        %1496 = vrot.lane.b32.xlu0 %v1492, 68
        %v1497 = vpop.permute.xlu0 %1496
        %1498 = vrot.lane.b32.xlu0 %v1493, 68
        %v1499 = vpop.permute.xlu0 %1498
        %v1502 = vadd.f32 %v1481, %v1497
        %v1503 = vadd.f32 %v1482, %v1499
        %v1504 = vld [vmem:[#allocation3 + $0x8] sm:$0xff]
        %v1505 = vld [vmem:[#allocation3 + $0x18] sm:$0xff]
        %v1506 = vld [vmem:[#allocation9 + $0x6] sm:$0x1]
        %v1507 = vlaneseq
        %v1508 = vshrl.u32 %v1507, 7
        %v1509 = vsub.s32 0, %v1508
        %v1510 = vrot.slane %v1506, %v1509
        %1512 = vrot.lane.b32.xlu0 %v1510, 72
        %v1513 = vpop.permute.xlu0 %1512
        %v1515 = vmul.f32 %v1388, %v1513
        %v1516 = vmul.f32 %v1504, %v1513
        %v1517 = vmul.f32 %v1389, %v1513
        %v1518 = vmul.f32 %v1505, %v1513
        %1523 = vrot.lane.b32.xlu0 %v1515, 56
        %v1524 = vpop.permute.xlu0 %1523
        %1525 = vrot.lane.b32.xlu0 %v1516, 56
        %v1526 = vpop.permute.xlu0 %1525
        %1527 = vrot.lane.b32.xlu0 %v1517, 56
        %v1528 = vpop.permute.xlu0 %1527
        %1529 = vrot.lane.b32.xlu0 %v1518, 56
        %v1530 = vpop.permute.xlu0 %1529
        %vm1531 = vcmask 457728
        %v1532 = vsel %vm1531, %v1524, %v1526
        %v1533 = vsel %vm1531, %v1528, %v1530
        %v1536 = vadd.f32 %v1502, %v1532
        %v1537 = vadd.f32 %v1503, %v1533
        %v1538 = vld [vmem:[#allocation3] sm:$0xf8]
        %v1539 = vld [vmem:[#allocation3 + $0x20] sm:$0x7]
        %s1540 = scalar_lea.vmem [#allocation9], 8
        %v1541 = vld [vmem:[%s1540] sm:$0x1]
        %v1542 = vlaneseq
        %v1543 = vshrl.u32 %v1542, 7
        %v1544 = vsub.s32 0, %v1543
        %v1545 = vrot.slane %v1541, %v1544
        %v1546 = vmul.f32 %v1538, %v1545
        %v1547 = vmul.f32 %v1389, %v1545
        %v1548 = vmul.f32 %v1539, %v1545
        %vm1552 = vcmask 1044480
        %v1553 = vrot.slane %v1546, 3
        %v1554 = vrot.slane %v1547, 3
        %v1555 = vsel %vm1552, %v1553, %v1554
        %v1556 = vrot.slane %v1548, 3
        %v1557 = vsel %vm1552, %v1554, %v1556
        %v1560 = vadd.f32 %v1536, %v1555
        %v1561 = vadd.f32 %v1537, %v1557
        %v1562 = vld [vmem:[%s1540 + $0x1] sm:$0x1]
        %v1563 = vlaneseq
        %v1564 = vshrl.u32 %v1563, 7
        %v1565 = vsub.s32 0, %v1564
        %v1566 = vrot.slane %v1562, %v1565
        %1568 = vrot.lane.b32.xlu0 %v1566, 12
        %v1569 = vpop.permute.xlu0 %1568
        %v1571 = vmul.f32 %v1538, %v1569
        %v1572 = vmul.f32 %v1389, %v1569
        %v1573 = vmul.f32 %v1539, %v1569
        %v1577 = vrot.slane %v1571, 3
        %v1578 = vrot.slane %v1572, 3
        %v1579 = vsel %vm1552, %v1577, %v1578
        %v1580 = vrot.slane %v1573, 3
        %v1581 = vsel %vm1552, %v1578, %v1580
        %1582 = vrot.lane.b32.xlu0 %v1579, 116
        %v1583 = vpop.permute.xlu0 %1582
        %1584 = vrot.lane.b32.xlu0 %v1581, 116
        %v1585 = vpop.permute.xlu0 %1584
        %v1588 = vadd.f32 %v1560, %v1583
        %v1589 = vadd.f32 %v1561, %v1585
        %v1590 = vld [vmem:[%s1540 + $0x2] sm:$0x1]
        %v1591 = vlaneseq
        %v1592 = vshrl.u32 %v1591, 7
        %v1593 = vsub.s32 0, %v1592
        %v1594 = vrot.slane %v1590, %v1593
        %1596 = vrot.lane.b32.xlu0 %v1594, 24
        %v1597 = vpop.permute.xlu0 %1596
        %v1599 = vmul.f32 %v1538, %v1597
        %v1600 = vmul.f32 %v1389, %v1597
        %v1601 = vmul.f32 %v1539, %v1597
        %v1605 = vrot.slane %v1599, 3
        %v1606 = vrot.slane %v1600, 3
        %v1607 = vsel %vm1552, %v1605, %v1606
        %v1608 = vrot.slane %v1601, 3
        %v1609 = vsel %vm1552, %v1606, %v1608
        %1610 = vrot.lane.b32.xlu0 %v1607, 104
        %v1611 = vpop.permute.xlu0 %1610
        %1612 = vrot.lane.b32.xlu0 %v1609, 104
        %v1613 = vpop.permute.xlu0 %1612
        %v1616 = vadd.f32 %v1588, %v1611
        %v1617 = vadd.f32 %v1589, %v1613
        %v1618 = vld [vmem:[%s1540 + $0x3] sm:$0x1]
        %v1619 = vlaneseq
        %v1620 = vshrl.u32 %v1619, 7
        %v1621 = vsub.s32 0, %v1620
        %v1622 = vrot.slane %v1618, %v1621
        %1624 = vrot.lane.b32.xlu0 %v1622, 36
        %v1625 = vpop.permute.xlu0 %1624
        %v1627 = vmul.f32 %v1538, %v1625
        %v1628 = vmul.f32 %v1389, %v1625
        %v1629 = vmul.f32 %v1539, %v1625
        %v1633 = vrot.slane %v1627, 3
        %v1634 = vrot.slane %v1628, 3
        %v1635 = vsel %vm1552, %v1633, %v1634
        %v1636 = vrot.slane %v1629, 3
        %v1637 = vsel %vm1552, %v1634, %v1636
        %1638 = vrot.lane.b32.xlu0 %v1635, 92
        %v1639 = vpop.permute.xlu0 %1638
        %1640 = vrot.lane.b32.xlu0 %v1637, 92
        %v1641 = vpop.permute.xlu0 %1640
        %v1644 = vadd.f32 %v1616, %v1639
        %v1645 = vadd.f32 %v1617, %v1641
        %v1646 = vld [vmem:[%s1540 + $0x4] sm:$0x1]
        %v1647 = vlaneseq
        %v1648 = vshrl.u32 %v1647, 7
        %v1649 = vsub.s32 0, %v1648
        %v1650 = vrot.slane %v1646, %v1649
        %1652 = vrot.lane.b32.xlu0 %v1650, 48
        %v1653 = vpop.permute.xlu0 %1652
        %v1655 = vmul.f32 %v1538, %v1653
        %v1656 = vmul.f32 %v1389, %v1653
        %v1657 = vmul.f32 %v1539, %v1653
        %v1661 = vrot.slane %v1655, 3
        %v1662 = vrot.slane %v1656, 3
        %v1663 = vsel %vm1552, %v1661, %v1662
        %v1664 = vrot.slane %v1657, 3
        %v1665 = vsel %vm1552, %v1662, %v1664
        %1666 = vrot.lane.b32.xlu0 %v1663, 80
        %v1667 = vpop.permute.xlu0 %1666
        %1668 = vrot.lane.b32.xlu0 %v1665, 80
        %v1669 = vpop.permute.xlu0 %1668
        %v1672 = vadd.f32 %v1644, %v1667
        %v1673 = vadd.f32 %v1645, %v1669
        %v1674 = vld [vmem:[%s1540 + $0x5] sm:$0x1]
        %v1675 = vlaneseq
        %v1676 = vshrl.u32 %v1675, 7
        %v1677 = vsub.s32 0, %v1676
        %v1678 = vrot.slane %v1674, %v1677
        %1680 = vrot.lane.b32.xlu0 %v1678, 60
        %v1681 = vpop.permute.xlu0 %1680
        %v1683 = vmul.f32 %v1538, %v1681
        %v1684 = vmul.f32 %v1389, %v1681
        %v1685 = vmul.f32 %v1539, %v1681
        %v1689 = vrot.slane %v1683, 3
        %v1690 = vrot.slane %v1684, 3
        %v1691 = vsel %vm1552, %v1689, %v1690
        %v1692 = vrot.slane %v1685, 3
        %v1693 = vsel %vm1552, %v1690, %v1692
        %1694 = vrot.lane.b32.xlu0 %v1691, 68
        %v1695 = vpop.permute.xlu0 %1694
        %1696 = vrot.lane.b32.xlu0 %v1693, 68
        %v1697 = vpop.permute.xlu0 %1696
        %v1700 = vadd.f32 %v1672, %v1695
        %v1701 = vadd.f32 %v1673, %v1697
        %v1702 = vld [vmem:[#allocation3 + $0x8] sm:$0xf8]
        %v1703 = vld [vmem:[#allocation3 + $0x28] sm:$0x7]
        %v1704 = vld [vmem:[%s1540 + $0x6] sm:$0x1]
        %v1705 = vlaneseq
        %v1706 = vshrl.u32 %v1705, 7
        %v1707 = vsub.s32 0, %v1706
        %v1708 = vrot.slane %v1704, %v1707
        %1710 = vrot.lane.b32.xlu0 %v1708, 72
        %v1711 = vpop.permute.xlu0 %1710
        %v1713 = vmul.f32 %v1538, %v1711
        %v1714 = vmul.f32 %v1702, %v1711
        %v1715 = vmul.f32 %v1389, %v1711
        %v1716 = vmul.f32 %v1505, %v1711
        %v1717 = vmul.f32 %v1539, %v1711
        %v1718 = vmul.f32 %v1703, %v1711
        %v1725 = vrot.slane %v1713, 3
        %v1726 = vrot.slane %v1715, 3
        %v1727 = vsel %vm1552, %v1725, %v1726
        %v1728 = vrot.slane %v1714, 3
        %v1729 = vrot.slane %v1716, 3
        %v1730 = vsel %vm1552, %v1728, %v1729
        %v1731 = vrot.slane %v1717, 3
        %v1732 = vsel %vm1552, %v1726, %v1731
        %v1733 = vrot.slane %v1718, 3
        %v1734 = vsel %vm1552, %v1729, %v1733
        %1735 = vrot.lane.b32.xlu0 %v1727, 56
        %v1736 = vpop.permute.xlu0 %1735
        %1737 = vrot.lane.b32.xlu0 %v1730, 56
        %v1738 = vpop.permute.xlu0 %1737
        %1739 = vrot.lane.b32.xlu0 %v1732, 56
        %v1740 = vpop.permute.xlu0 %1739
        %1741 = vrot.lane.b32.xlu0 %v1734, 56
        %v1742 = vpop.permute.xlu0 %1741
        %v1743 = vsel %vm1531, %v1736, %v1738
        %v1744 = vsel %vm1531, %v1740, %v1742
        %v1747 = vadd.f32 %v1700, %v1743
        %v1748 = vadd.f32 %v1701, %v1744
        %v1749 = vld [vmem:[#allocation3] sm:$0xc0]
        %v1750 = vld [vmem:[#allocation3 + $0x20] sm:$0x3f]
        %s1751 = scalar_lea.vmem [#allocation9], 16
        %v1752 = vld [vmem:[%s1751] sm:$0x1]
        %v1753 = vlaneseq
        %v1754 = vshrl.u32 %v1753, 7
        %v1755 = vsub.s32 0, %v1754
        %v1756 = vrot.slane %v1752, %v1755
        %v1757 = vmul.f32 %v1749, %v1756
        %v1758 = vmul.f32 %v1389, %v1756
        %v1759 = vmul.f32 %v1750, %v1756
        %vm1763 = vcmask 1041408
        %v1764 = vrot.slane %v1757, 6
        %v1765 = vrot.slane %v1758, 6
        %v1766 = vsel %vm1763, %v1764, %v1765
        %v1767 = vrot.slane %v1759, 6
        %v1768 = vsel %vm1763, %v1765, %v1767
        %v1771 = vadd.f32 %v1747, %v1766
        %v1772 = vadd.f32 %v1748, %v1768
        %v1773 = vld [vmem:[%s1751 + $0x1] sm:$0x1]
        %v1774 = vlaneseq
        %v1775 = vshrl.u32 %v1774, 7
        %v1776 = vsub.s32 0, %v1775
        %v1777 = vrot.slane %v1773, %v1776
        %1779 = vrot.lane.b32.xlu0 %v1777, 12
        %v1780 = vpop.permute.xlu0 %1779
        %v1782 = vmul.f32 %v1749, %v1780
        %v1783 = vmul.f32 %v1389, %v1780
        %v1784 = vmul.f32 %v1750, %v1780
        %v1788 = vrot.slane %v1782, 6
        %v1789 = vrot.slane %v1783, 6
        %v1790 = vsel %vm1763, %v1788, %v1789
        %v1791 = vrot.slane %v1784, 6
        %v1792 = vsel %vm1763, %v1789, %v1791
        %1793 = vrot.lane.b32.xlu0 %v1790, 116
        %v1794 = vpop.permute.xlu0 %1793
        %1795 = vrot.lane.b32.xlu0 %v1792, 116
        %v1796 = vpop.permute.xlu0 %1795
        %v1799 = vadd.f32 %v1771, %v1794
        %v1800 = vadd.f32 %v1772, %v1796
        %v1801 = vld [vmem:[%s1751 + $0x2] sm:$0x1]
        %v1802 = vlaneseq
        %v1803 = vshrl.u32 %v1802, 7
        %v1804 = vsub.s32 0, %v1803
        %v1805 = vrot.slane %v1801, %v1804
        %1807 = vrot.lane.b32.xlu0 %v1805, 24
        %v1808 = vpop.permute.xlu0 %1807
        %v1810 = vmul.f32 %v1749, %v1808
        %v1811 = vmul.f32 %v1389, %v1808
        %v1812 = vmul.f32 %v1750, %v1808
        %v1816 = vrot.slane %v1810, 6
        %v1817 = vrot.slane %v1811, 6
        %v1818 = vsel %vm1763, %v1816, %v1817
        %v1819 = vrot.slane %v1812, 6
        %v1820 = vsel %vm1763, %v1817, %v1819
        %1821 = vrot.lane.b32.xlu0 %v1818, 104
        %v1822 = vpop.permute.xlu0 %1821
        %1823 = vrot.lane.b32.xlu0 %v1820, 104
        %v1824 = vpop.permute.xlu0 %1823
        %v1827 = vadd.f32 %v1799, %v1822
        %v1828 = vadd.f32 %v1800, %v1824
        %v1829 = vld [vmem:[%s1751 + $0x3] sm:$0x1]
        %v1830 = vlaneseq
        %v1831 = vshrl.u32 %v1830, 7
        %v1832 = vsub.s32 0, %v1831
        %v1833 = vrot.slane %v1829, %v1832
        %1835 = vrot.lane.b32.xlu0 %v1833, 36
        %v1836 = vpop.permute.xlu0 %1835
        %v1838 = vmul.f32 %v1749, %v1836
        %v1839 = vmul.f32 %v1389, %v1836
        %v1840 = vmul.f32 %v1750, %v1836
        %v1844 = vrot.slane %v1838, 6
        %v1845 = vrot.slane %v1839, 6
        %v1846 = vsel %vm1763, %v1844, %v1845
        %v1847 = vrot.slane %v1840, 6
        %v1848 = vsel %vm1763, %v1845, %v1847
        %1849 = vrot.lane.b32.xlu0 %v1846, 92
        %v1850 = vpop.permute.xlu0 %1849
        %1851 = vrot.lane.b32.xlu0 %v1848, 92
        %v1852 = vpop.permute.xlu0 %1851
        %v1855 = vadd.f32 %v1827, %v1850
        %v1856 = vadd.f32 %v1828, %v1852
        %v1857 = vld [vmem:[%s1751 + $0x4] sm:$0x1]
        %v1858 = vlaneseq
        %v1859 = vshrl.u32 %v1858, 7
        %v1860 = vsub.s32 0, %v1859
        %v1861 = vrot.slane %v1857, %v1860
        %1863 = vrot.lane.b32.xlu0 %v1861, 48
        %v1864 = vpop.permute.xlu0 %1863
        %v1866 = vmul.f32 %v1749, %v1864
        %v1867 = vmul.f32 %v1389, %v1864
        %v1868 = vmul.f32 %v1750, %v1864
        %v1872 = vrot.slane %v1866, 6
        %v1873 = vrot.slane %v1867, 6
        %v1874 = vsel %vm1763, %v1872, %v1873
        %v1875 = vrot.slane %v1868, 6
        %v1876 = vsel %vm1763, %v1873, %v1875
        %1877 = vrot.lane.b32.xlu0 %v1874, 80
        %v1878 = vpop.permute.xlu0 %1877
        %1879 = vrot.lane.b32.xlu0 %v1876, 80
        %v1880 = vpop.permute.xlu0 %1879
        %v1883 = vadd.f32 %v1855, %v1878
        %v1884 = vadd.f32 %v1856, %v1880
        %v1885 = vld [vmem:[%s1751 + $0x5] sm:$0x1]
        %v1886 = vlaneseq
        %v1887 = vshrl.u32 %v1886, 7
        %v1888 = vsub.s32 0, %v1887
        %v1889 = vrot.slane %v1885, %v1888
        %1891 = vrot.lane.b32.xlu0 %v1889, 60
        %v1892 = vpop.permute.xlu0 %1891
        %v1894 = vmul.f32 %v1749, %v1892
        %v1895 = vmul.f32 %v1389, %v1892
        %v1896 = vmul.f32 %v1750, %v1892
        %v1900 = vrot.slane %v1894, 6
        %v1901 = vrot.slane %v1895, 6
        %v1902 = vsel %vm1763, %v1900, %v1901
        %v1903 = vrot.slane %v1896, 6
        %v1904 = vsel %vm1763, %v1901, %v1903
        %1905 = vrot.lane.b32.xlu0 %v1902, 68
        %v1906 = vpop.permute.xlu0 %1905
        %1907 = vrot.lane.b32.xlu0 %v1904, 68
        %v1908 = vpop.permute.xlu0 %1907
        %v1911 = vadd.f32 %v1883, %v1906
        %v1912 = vadd.f32 %v1884, %v1908
        %v1913 = vld [vmem:[#allocation3 + $0x8] sm:$0xc0]
        %v1914 = vld [vmem:[#allocation3 + $0x28] sm:$0x3f]
        %v1915 = vld [vmem:[%s1751 + $0x6] sm:$0x1]
        %v1916 = vlaneseq
        %v1917 = vshrl.u32 %v1916, 7
        %v1918 = vsub.s32 0, %v1917
        %v1919 = vrot.slane %v1915, %v1918
        %1921 = vrot.lane.b32.xlu0 %v1919, 72
        %v1922 = vpop.permute.xlu0 %1921
        %v1924 = vmul.f32 %v1749, %v1922
        %v1925 = vmul.f32 %v1913, %v1922
        %v1926 = vmul.f32 %v1389, %v1922
        %v1927 = vmul.f32 %v1505, %v1922
        %v1928 = vmul.f32 %v1750, %v1922
        %v1929 = vmul.f32 %v1914, %v1922
        %v1936 = vrot.slane %v1924, 6
        %v1937 = vrot.slane %v1926, 6
        %v1938 = vsel %vm1763, %v1936, %v1937
        %v1939 = vrot.slane %v1925, 6
        %v1940 = vrot.slane %v1927, 6
        %v1941 = vsel %vm1763, %v1939, %v1940
        %v1942 = vrot.slane %v1928, 6
        %v1943 = vsel %vm1763, %v1937, %v1942
        %v1944 = vrot.slane %v1929, 6
        %v1945 = vsel %vm1763, %v1940, %v1944
        %1946 = vrot.lane.b32.xlu0 %v1938, 56
        %v1947 = vpop.permute.xlu0 %1946
        %1948 = vrot.lane.b32.xlu0 %v1941, 56
        %v1949 = vpop.permute.xlu0 %1948
        %1950 = vrot.lane.b32.xlu0 %v1943, 56
        %v1951 = vpop.permute.xlu0 %1950
        %1952 = vrot.lane.b32.xlu0 %v1945, 56
        %v1953 = vpop.permute.xlu0 %1952
        %v1954 = vsel %vm1531, %v1947, %v1949
        %v1955 = vsel %vm1531, %v1951, %v1953
        %v1958 = vadd.f32 %v1911, %v1954
        %v1959 = vadd.f32 %v1912, %v1955
        %v1960 = vld [vmem:[#allocation3 + $0x10] sm:$0xfe]
        %v1961 = vld [vmem:[#allocation3 + $0x20] sm:$0xff]
        %v1962 = vld [vmem:[#allocation3 + $0x30] sm:$0x1]
        %s1963 = scalar_lea.vmem [#allocation9], 24
        %v1964 = vld [vmem:[%s1963] sm:$0x1]
        %v1965 = vlaneseq
        %v1966 = vshrl.u32 %v1965, 7
        %v1967 = vsub.s32 0, %v1966
        %v1968 = vrot.slane %v1964, %v1967
        %v1969 = vmul.f32 %v1960, %v1968
        %v1970 = vmul.f32 %v1961, %v1968
        %v1971 = vmul.f32 %v1962, %v1968
        %vm1975 = vcmask 1046528
        %v1976 = vrot.slane %v1969, 1
        %v1977 = vrot.slane %v1970, 1
        %v1978 = vsel %vm1975, %v1976, %v1977
        %v1979 = vrot.slane %v1971, 1
        %v1980 = vsel %vm1975, %v1977, %v1979
        %v1983 = vadd.f32 %v1958, %v1978
        %v1984 = vadd.f32 %v1959, %v1980
        %v1985 = vld [vmem:[%s1963 + $0x1] sm:$0x1]
        %v1986 = vlaneseq
        %v1987 = vshrl.u32 %v1986, 7
        %v1988 = vsub.s32 0, %v1987
        %v1989 = vrot.slane %v1985, %v1988
        %1991 = vrot.lane.b32.xlu0 %v1989, 12
        %v1992 = vpop.permute.xlu0 %1991
        %v1994 = vmul.f32 %v1960, %v1992
        %v1995 = vmul.f32 %v1961, %v1992
        %v1996 = vmul.f32 %v1962, %v1992
        %v2000 = vrot.slane %v1994, 1
        %v2001 = vrot.slane %v1995, 1
        %v2002 = vsel %vm1975, %v2000, %v2001
        %v2003 = vrot.slane %v1996, 1
        %v2004 = vsel %vm1975, %v2001, %v2003
        %2005 = vrot.lane.b32.xlu0 %v2002, 116
        %v2006 = vpop.permute.xlu0 %2005
        %2007 = vrot.lane.b32.xlu0 %v2004, 116
        %v2008 = vpop.permute.xlu0 %2007
        %v2011 = vadd.f32 %v1983, %v2006
        %v2012 = vadd.f32 %v1984, %v2008
        %v2013 = vld [vmem:[%s1963 + $0x2] sm:$0x1]
        %v2014 = vlaneseq
        %v2015 = vshrl.u32 %v2014, 7
        %v2016 = vsub.s32 0, %v2015
        %v2017 = vrot.slane %v2013, %v2016
        %2019 = vrot.lane.b32.xlu0 %v2017, 24
        %v2020 = vpop.permute.xlu0 %2019
        %v2022 = vmul.f32 %v1960, %v2020
        %v2023 = vmul.f32 %v1961, %v2020
        %v2024 = vmul.f32 %v1962, %v2020
        %v2028 = vrot.slane %v2022, 1
        %v2029 = vrot.slane %v2023, 1
        %v2030 = vsel %vm1975, %v2028, %v2029
        %v2031 = vrot.slane %v2024, 1
        %v2032 = vsel %vm1975, %v2029, %v2031
        %2033 = vrot.lane.b32.xlu0 %v2030, 104
        %v2034 = vpop.permute.xlu0 %2033
        %2035 = vrot.lane.b32.xlu0 %v2032, 104
        %v2036 = vpop.permute.xlu0 %2035
        %v2039 = vadd.f32 %v2011, %v2034
        %v2040 = vadd.f32 %v2012, %v2036
        %v2041 = vld [vmem:[%s1963 + $0x3] sm:$0x1]
        %v2042 = vlaneseq
        %v2043 = vshrl.u32 %v2042, 7
        %v2044 = vsub.s32 0, %v2043
        %v2045 = vrot.slane %v2041, %v2044
        %2047 = vrot.lane.b32.xlu0 %v2045, 36
        %v2048 = vpop.permute.xlu0 %2047
        %v2050 = vmul.f32 %v1960, %v2048
        %v2051 = vmul.f32 %v1961, %v2048
        %v2052 = vmul.f32 %v1962, %v2048
        %v2056 = vrot.slane %v2050, 1
        %v2057 = vrot.slane %v2051, 1
        %v2058 = vsel %vm1975, %v2056, %v2057
        %v2059 = vrot.slane %v2052, 1
        %v2060 = vsel %vm1975, %v2057, %v2059
        %2061 = vrot.lane.b32.xlu0 %v2058, 92
        %v2062 = vpop.permute.xlu0 %2061
        %2063 = vrot.lane.b32.xlu0 %v2060, 92
        %v2064 = vpop.permute.xlu0 %2063
        %v2067 = vadd.f32 %v2039, %v2062
        %v2068 = vadd.f32 %v2040, %v2064
        %v2069 = vld [vmem:[%s1963 + $0x4] sm:$0x1]
        %v2070 = vlaneseq
        %v2071 = vshrl.u32 %v2070, 7
        %v2072 = vsub.s32 0, %v2071
        %v2073 = vrot.slane %v2069, %v2072
        %2075 = vrot.lane.b32.xlu0 %v2073, 48
        %v2076 = vpop.permute.xlu0 %2075
        %v2078 = vmul.f32 %v1960, %v2076
        %v2079 = vmul.f32 %v1961, %v2076
        %v2080 = vmul.f32 %v1962, %v2076
        %v2084 = vrot.slane %v2078, 1
        %v2085 = vrot.slane %v2079, 1
        %v2086 = vsel %vm1975, %v2084, %v2085
        %v2087 = vrot.slane %v2080, 1
        %v2088 = vsel %vm1975, %v2085, %v2087
        %2089 = vrot.lane.b32.xlu0 %v2086, 80
        %v2090 = vpop.permute.xlu0 %2089
        %2091 = vrot.lane.b32.xlu0 %v2088, 80
        %v2092 = vpop.permute.xlu0 %2091
        %v2095 = vadd.f32 %v2067, %v2090
        %v2096 = vadd.f32 %v2068, %v2092
        %v2097 = vld [vmem:[%s1963 + $0x5] sm:$0x1]
        %v2098 = vlaneseq
        %v2099 = vshrl.u32 %v2098, 7
        %v2100 = vsub.s32 0, %v2099
        %v2101 = vrot.slane %v2097, %v2100
        %2103 = vrot.lane.b32.xlu0 %v2101, 60
        %v2104 = vpop.permute.xlu0 %2103
        %v2106 = vmul.f32 %v1960, %v2104
        %v2107 = vmul.f32 %v1961, %v2104
        %v2108 = vmul.f32 %v1962, %v2104
        %v2112 = vrot.slane %v2106, 1
        %v2113 = vrot.slane %v2107, 1
        %v2114 = vsel %vm1975, %v2112, %v2113
        %v2115 = vrot.slane %v2108, 1
        %v2116 = vsel %vm1975, %v2113, %v2115
        %2117 = vrot.lane.b32.xlu0 %v2114, 68
        %v2118 = vpop.permute.xlu0 %2117
        %2119 = vrot.lane.b32.xlu0 %v2116, 68
        %v2120 = vpop.permute.xlu0 %2119
        %v2123 = vadd.f32 %v2095, %v2118
        %v2124 = vadd.f32 %v2096, %v2120
        %v2125 = vld [vmem:[#allocation3 + $0x18] sm:$0xfe]
        %v2126 = vld [vmem:[#allocation3 + $0x28] sm:$0xff]
        %v2127 = vld [vmem:[#allocation3 + $0x38] sm:$0x1]
        %v2128 = vld [vmem:[%s1963 + $0x6] sm:$0x1]
        %v2129 = vlaneseq
        %v2130 = vshrl.u32 %v2129, 7
        %v2131 = vsub.s32 0, %v2130
        %v2132 = vrot.slane %v2128, %v2131
        %2134 = vrot.lane.b32.xlu0 %v2132, 72
        %v2135 = vpop.permute.xlu0 %2134
        %v2137 = vmul.f32 %v1960, %v2135
        %v2138 = vmul.f32 %v2125, %v2135
        %v2139 = vmul.f32 %v1961, %v2135
        %v2140 = vmul.f32 %v2126, %v2135
        %v2141 = vmul.f32 %v1962, %v2135
        %v2142 = vmul.f32 %v2127, %v2135
        %v2149 = vrot.slane %v2137, 1
        %v2150 = vrot.slane %v2139, 1
        %v2151 = vsel %vm1975, %v2149, %v2150
        %v2152 = vrot.slane %v2138, 1
        %v2153 = vrot.slane %v2140, 1
        %v2154 = vsel %vm1975, %v2152, %v2153
        %v2155 = vrot.slane %v2141, 1
        %v2156 = vsel %vm1975, %v2150, %v2155
        %v2157 = vrot.slane %v2142, 1
        %v2158 = vsel %vm1975, %v2153, %v2157
        %2159 = vrot.lane.b32.xlu0 %v2151, 56
        %v2160 = vpop.permute.xlu0 %2159
        %2161 = vrot.lane.b32.xlu0 %v2154, 56
        %v2162 = vpop.permute.xlu0 %2161
        %2163 = vrot.lane.b32.xlu0 %v2156, 56
        %v2164 = vpop.permute.xlu0 %2163
        %2165 = vrot.lane.b32.xlu0 %v2158, 56
        %v2166 = vpop.permute.xlu0 %2165
        %v2167 = vsel %vm1531, %v2160, %v2162
        %v2168 = vsel %vm1531, %v2164, %v2166
        %v2171 = vadd.f32 %v2123, %v2167
        %v2172 = vadd.f32 %v2124, %v2168
        %v2173 = vld [vmem:[#allocation3 + $0x10] sm:$0xf0]
        %v2174 = vld [vmem:[#allocation3 + $0x30] sm:$0xf]
        %s2175 = scalar_lea.vmem [#allocation9], 32
        %v2176 = vld [vmem:[%s2175] sm:$0x1]
        %v2177 = vlaneseq
        %v2178 = vshrl.u32 %v2177, 7
        %v2179 = vsub.s32 0, %v2178
        %v2180 = vrot.slane %v2176, %v2179
        %v2181 = vmul.f32 %v2173, %v2180
        %v2182 = vmul.f32 %v1961, %v2180
        %v2183 = vmul.f32 %v2174, %v2180
        %vm2187 = vcmask 1043456
        %v2188 = vrot.slane %v2181, 4
        %v2189 = vrot.slane %v2182, 4
        %v2190 = vsel %vm2187, %v2188, %v2189
        %v2191 = vrot.slane %v2183, 4
        %v2192 = vsel %vm2187, %v2189, %v2191
        %v2195 = vadd.f32 %v2171, %v2190
        %v2196 = vadd.f32 %v2172, %v2192
        %v2197 = vld [vmem:[%s2175 + $0x1] sm:$0x1]
        %v2198 = vlaneseq
        %v2199 = vshrl.u32 %v2198, 7
        %v2200 = vsub.s32 0, %v2199
        %v2201 = vrot.slane %v2197, %v2200
        %2203 = vrot.lane.b32.xlu0 %v2201, 12
        %v2204 = vpop.permute.xlu0 %2203
        %v2206 = vmul.f32 %v2173, %v2204
        %v2207 = vmul.f32 %v1961, %v2204
        %v2208 = vmul.f32 %v2174, %v2204
        %v2212 = vrot.slane %v2206, 4
        %v2213 = vrot.slane %v2207, 4
        %v2214 = vsel %vm2187, %v2212, %v2213
        %v2215 = vrot.slane %v2208, 4
        %v2216 = vsel %vm2187, %v2213, %v2215
        %2217 = vrot.lane.b32.xlu0 %v2214, 116
        %v2218 = vpop.permute.xlu0 %2217
        %2219 = vrot.lane.b32.xlu0 %v2216, 116
        %v2220 = vpop.permute.xlu0 %2219
        %v2223 = vadd.f32 %v2195, %v2218
        %v2224 = vadd.f32 %v2196, %v2220
        %v2225 = vld [vmem:[%s2175 + $0x2] sm:$0x1]
        %v2226 = vlaneseq
        %v2227 = vshrl.u32 %v2226, 7
        %v2228 = vsub.s32 0, %v2227
        %v2229 = vrot.slane %v2225, %v2228
        %2231 = vrot.lane.b32.xlu0 %v2229, 24
        %v2232 = vpop.permute.xlu0 %2231
        %v2234 = vmul.f32 %v2173, %v2232
        %v2235 = vmul.f32 %v1961, %v2232
        %v2236 = vmul.f32 %v2174, %v2232
        %v2240 = vrot.slane %v2234, 4
        %v2241 = vrot.slane %v2235, 4
        %v2242 = vsel %vm2187, %v2240, %v2241
        %v2243 = vrot.slane %v2236, 4
        %v2244 = vsel %vm2187, %v2241, %v2243
        %2245 = vrot.lane.b32.xlu0 %v2242, 104
        %v2246 = vpop.permute.xlu0 %2245
        %2247 = vrot.lane.b32.xlu0 %v2244, 104
        %v2248 = vpop.permute.xlu0 %2247
        %v2251 = vadd.f32 %v2223, %v2246
        %v2252 = vadd.f32 %v2224, %v2248
        %v2253 = vld [vmem:[%s2175 + $0x3] sm:$0x1]
        %v2254 = vlaneseq
        %v2255 = vshrl.u32 %v2254, 7
        %v2256 = vsub.s32 0, %v2255
        %v2257 = vrot.slane %v2253, %v2256
        %2259 = vrot.lane.b32.xlu0 %v2257, 36
        %v2260 = vpop.permute.xlu0 %2259
        %v2262 = vmul.f32 %v2173, %v2260
        %v2263 = vmul.f32 %v1961, %v2260
        %v2264 = vmul.f32 %v2174, %v2260
        %v2268 = vrot.slane %v2262, 4
        %v2269 = vrot.slane %v2263, 4
        %v2270 = vsel %vm2187, %v2268, %v2269
        %v2271 = vrot.slane %v2264, 4
        %v2272 = vsel %vm2187, %v2269, %v2271
        %2273 = vrot.lane.b32.xlu0 %v2270, 92
        %v2274 = vpop.permute.xlu0 %2273
        %2275 = vrot.lane.b32.xlu0 %v2272, 92
        %v2276 = vpop.permute.xlu0 %2275
        %v2279 = vadd.f32 %v2251, %v2274
        %v2280 = vadd.f32 %v2252, %v2276
        %v2281 = vld [vmem:[%s2175 + $0x4] sm:$0x1]
        %v2282 = vlaneseq
        %v2283 = vshrl.u32 %v2282, 7
        %v2284 = vsub.s32 0, %v2283
        %v2285 = vrot.slane %v2281, %v2284
        %2287 = vrot.lane.b32.xlu0 %v2285, 48
        %v2288 = vpop.permute.xlu0 %2287
        %v2290 = vmul.f32 %v2173, %v2288
        %v2291 = vmul.f32 %v1961, %v2288
        %v2292 = vmul.f32 %v2174, %v2288
        %v2296 = vrot.slane %v2290, 4
        %v2297 = vrot.slane %v2291, 4
        %v2298 = vsel %vm2187, %v2296, %v2297
        %v2299 = vrot.slane %v2292, 4
        %v2300 = vsel %vm2187, %v2297, %v2299
        %2301 = vrot.lane.b32.xlu0 %v2298, 80
        %v2302 = vpop.permute.xlu0 %2301
        %2303 = vrot.lane.b32.xlu0 %v2300, 80
        %v2304 = vpop.permute.xlu0 %2303
        %v2307 = vadd.f32 %v2279, %v2302
        %v2308 = vadd.f32 %v2280, %v2304
        %v2309 = vld [vmem:[%s2175 + $0x5] sm:$0x1]
        %v2310 = vlaneseq
        %v2311 = vshrl.u32 %v2310, 7
        %v2312 = vsub.s32 0, %v2311
        %v2313 = vrot.slane %v2309, %v2312
        %2315 = vrot.lane.b32.xlu0 %v2313, 60
        %v2316 = vpop.permute.xlu0 %2315
        %v2318 = vmul.f32 %v2173, %v2316
        %v2319 = vmul.f32 %v1961, %v2316
        %v2320 = vmul.f32 %v2174, %v2316
        %v2324 = vrot.slane %v2318, 4
        %v2325 = vrot.slane %v2319, 4
        %v2326 = vsel %vm2187, %v2324, %v2325
        %v2327 = vrot.slane %v2320, 4
        %v2328 = vsel %vm2187, %v2325, %v2327
        %2329 = vrot.lane.b32.xlu0 %v2326, 68
        %v2330 = vpop.permute.xlu0 %2329
        %2331 = vrot.lane.b32.xlu0 %v2328, 68
        %v2332 = vpop.permute.xlu0 %2331
        %v2335 = vadd.f32 %v2307, %v2330
        %v2336 = vadd.f32 %v2308, %v2332
        %v2337 = vld [vmem:[#allocation3 + $0x18] sm:$0xf0]
        %v2338 = vld [vmem:[#allocation3 + $0x38] sm:$0xf]
        %v2339 = vld [vmem:[%s2175 + $0x6] sm:$0x1]
        %v2340 = vlaneseq
        %v2341 = vshrl.u32 %v2340, 7
        %v2342 = vsub.s32 0, %v2341
        %v2343 = vrot.slane %v2339, %v2342
        %2345 = vrot.lane.b32.xlu0 %v2343, 72
        %v2346 = vpop.permute.xlu0 %2345
        %v2348 = vmul.f32 %v2173, %v2346
        %v2349 = vmul.f32 %v2337, %v2346
        %v2350 = vmul.f32 %v1961, %v2346
        %v2351 = vmul.f32 %v2126, %v2346
        %v2352 = vmul.f32 %v2174, %v2346
        %v2353 = vmul.f32 %v2338, %v2346
        %v2360 = vrot.slane %v2348, 4
        %v2361 = vrot.slane %v2350, 4
        %v2362 = vsel %vm2187, %v2360, %v2361
        %v2363 = vrot.slane %v2349, 4
        %v2364 = vrot.slane %v2351, 4
        %v2365 = vsel %vm2187, %v2363, %v2364
        %v2366 = vrot.slane %v2352, 4
        %v2367 = vsel %vm2187, %v2361, %v2366
        %v2368 = vrot.slane %v2353, 4
        %v2369 = vsel %vm2187, %v2364, %v2368
        %2370 = vrot.lane.b32.xlu0 %v2362, 56
        %v2371 = vpop.permute.xlu0 %2370
        %2372 = vrot.lane.b32.xlu0 %v2365, 56
        %v2373 = vpop.permute.xlu0 %2372
        %2374 = vrot.lane.b32.xlu0 %v2367, 56
        %v2375 = vpop.permute.xlu0 %2374
        %2376 = vrot.lane.b32.xlu0 %v2369, 56
        %v2377 = vpop.permute.xlu0 %2376
        %v2378 = vsel %vm1531, %v2371, %v2373
        %v2379 = vsel %vm1531, %v2375, %v2377
        %v2382 = vadd.f32 %v2335, %v2378
        %v2383 = vadd.f32 %v2336, %v2379
        %v2384 = vld [vmem:[#allocation3 + $0x10] sm:$0x80]
        %v2385 = vld [vmem:[#allocation3 + $0x30] sm:$0x7f]
        %s2386 = scalar_lea.vmem [#allocation9], 40
        %v2387 = vld [vmem:[%s2386] sm:$0x1]
        %v2388 = vlaneseq
        %v2389 = vshrl.u32 %v2388, 7
        %v2390 = vsub.s32 0, %v2389
        %v2391 = vrot.slane %v2387, %v2390
        %v2392 = vmul.f32 %v2384, %v2391
        %v2393 = vmul.f32 %v1961, %v2391
        %v2394 = vmul.f32 %v2385, %v2391
        %vm2398 = vcmask 1040384
        %v2399 = vrot.slane %v2392, 7
        %v2400 = vrot.slane %v2393, 7
        %v2401 = vsel %vm2398, %v2399, %v2400
        %v2402 = vrot.slane %v2394, 7
        %v2403 = vsel %vm2398, %v2400, %v2402
        %v2406 = vadd.f32 %v2382, %v2401
        %v2407 = vadd.f32 %v2383, %v2403
        %v2408 = vld [vmem:[%s2386 + $0x1] sm:$0x1]
        %v2409 = vlaneseq
        %v2410 = vshrl.u32 %v2409, 7
        %v2411 = vsub.s32 0, %v2410
        %v2412 = vrot.slane %v2408, %v2411
        %2414 = vrot.lane.b32.xlu0 %v2412, 12
        %v2415 = vpop.permute.xlu0 %2414
        %v2417 = vmul.f32 %v2384, %v2415
        %v2418 = vmul.f32 %v1961, %v2415
        %v2419 = vmul.f32 %v2385, %v2415
        %v2423 = vrot.slane %v2417, 7
        %v2424 = vrot.slane %v2418, 7
        %v2425 = vsel %vm2398, %v2423, %v2424
        %v2426 = vrot.slane %v2419, 7
        %v2427 = vsel %vm2398, %v2424, %v2426
        %2428 = vrot.lane.b32.xlu0 %v2425, 116
        %v2429 = vpop.permute.xlu0 %2428
        %2430 = vrot.lane.b32.xlu0 %v2427, 116
        %v2431 = vpop.permute.xlu0 %2430
        %v2434 = vadd.f32 %v2406, %v2429
        %v2435 = vadd.f32 %v2407, %v2431
        %v2436 = vld [vmem:[%s2386 + $0x2] sm:$0x1]
        %v2437 = vlaneseq
        %v2438 = vshrl.u32 %v2437, 7
        %v2439 = vsub.s32 0, %v2438
        %v2440 = vrot.slane %v2436, %v2439
        %2442 = vrot.lane.b32.xlu0 %v2440, 24
        %v2443 = vpop.permute.xlu0 %2442
        %v2445 = vmul.f32 %v2384, %v2443
        %v2446 = vmul.f32 %v1961, %v2443
        %v2447 = vmul.f32 %v2385, %v2443
        %v2451 = vrot.slane %v2445, 7
        %v2452 = vrot.slane %v2446, 7
        %v2453 = vsel %vm2398, %v2451, %v2452
        %v2454 = vrot.slane %v2447, 7
        %v2455 = vsel %vm2398, %v2452, %v2454
        %2456 = vrot.lane.b32.xlu0 %v2453, 104
        %v2457 = vpop.permute.xlu0 %2456
        %2458 = vrot.lane.b32.xlu0 %v2455, 104
        %v2459 = vpop.permute.xlu0 %2458
        %v2462 = vadd.f32 %v2434, %v2457
        %v2463 = vadd.f32 %v2435, %v2459
        %v2464 = vld [vmem:[%s2386 + $0x3] sm:$0x1]
        %v2465 = vlaneseq
        %v2466 = vshrl.u32 %v2465, 7
        %v2467 = vsub.s32 0, %v2466
        %v2468 = vrot.slane %v2464, %v2467
        %2470 = vrot.lane.b32.xlu0 %v2468, 36
        %v2471 = vpop.permute.xlu0 %2470
        %v2473 = vmul.f32 %v2384, %v2471
        %v2474 = vmul.f32 %v1961, %v2471
        %v2475 = vmul.f32 %v2385, %v2471
        %v2479 = vrot.slane %v2473, 7
        %v2480 = vrot.slane %v2474, 7
        %v2481 = vsel %vm2398, %v2479, %v2480
        %v2482 = vrot.slane %v2475, 7
        %v2483 = vsel %vm2398, %v2480, %v2482
        %2484 = vrot.lane.b32.xlu0 %v2481, 92
        %v2485 = vpop.permute.xlu0 %2484
        %2486 = vrot.lane.b32.xlu0 %v2483, 92
        %v2487 = vpop.permute.xlu0 %2486
        %v2490 = vadd.f32 %v2462, %v2485
        %v2491 = vadd.f32 %v2463, %v2487
        %v2492 = vld [vmem:[%s2386 + $0x4] sm:$0x1]
        %v2493 = vlaneseq
        %v2494 = vshrl.u32 %v2493, 7
        %v2495 = vsub.s32 0, %v2494
        %v2496 = vrot.slane %v2492, %v2495
        %2498 = vrot.lane.b32.xlu0 %v2496, 48
        %v2499 = vpop.permute.xlu0 %2498
        %v2501 = vmul.f32 %v2384, %v2499
        %v2502 = vmul.f32 %v1961, %v2499
        %v2503 = vmul.f32 %v2385, %v2499
        %v2507 = vrot.slane %v2501, 7
        %v2508 = vrot.slane %v2502, 7
        %v2509 = vsel %vm2398, %v2507, %v2508
        %v2510 = vrot.slane %v2503, 7
        %v2511 = vsel %vm2398, %v2508, %v2510
        %2512 = vrot.lane.b32.xlu0 %v2509, 80
        %v2513 = vpop.permute.xlu0 %2512
        %2514 = vrot.lane.b32.xlu0 %v2511, 80
        %v2515 = vpop.permute.xlu0 %2514
        %v2518 = vadd.f32 %v2490, %v2513
        %v2519 = vadd.f32 %v2491, %v2515
        %v2520 = vld [vmem:[%s2386 + $0x5] sm:$0x1]
        %v2521 = vlaneseq
        %v2522 = vshrl.u32 %v2521, 7
        %v2523 = vsub.s32 0, %v2522
        %v2524 = vrot.slane %v2520, %v2523
        %2526 = vrot.lane.b32.xlu0 %v2524, 60
        %v2527 = vpop.permute.xlu0 %2526
        %v2529 = vmul.f32 %v2384, %v2527
        %v2530 = vmul.f32 %v1961, %v2527
        %v2531 = vmul.f32 %v2385, %v2527
        %v2535 = vrot.slane %v2529, 7
        %v2536 = vrot.slane %v2530, 7
        %v2537 = vsel %vm2398, %v2535, %v2536
        %v2538 = vrot.slane %v2531, 7
        %v2539 = vsel %vm2398, %v2536, %v2538
        %2540 = vrot.lane.b32.xlu0 %v2537, 68
        %v2541 = vpop.permute.xlu0 %2540
        %2542 = vrot.lane.b32.xlu0 %v2539, 68
        %v2543 = vpop.permute.xlu0 %2542
        %v2546 = vadd.f32 %v2518, %v2541
        %v2547 = vadd.f32 %v2519, %v2543
        %v2548 = vld [vmem:[#allocation3 + $0x18] sm:$0x80]
        %v2549 = vld [vmem:[#allocation3 + $0x38] sm:$0x7f]
        %v2550 = vld [vmem:[%s2386 + $0x6] sm:$0x1]
        %v2551 = vlaneseq
        %v2552 = vshrl.u32 %v2551, 7
        %v2553 = vsub.s32 0, %v2552
        %v2554 = vrot.slane %v2550, %v2553
        %2556 = vrot.lane.b32.xlu0 %v2554, 72
        %v2557 = vpop.permute.xlu0 %2556
        %v2559 = vmul.f32 %v2384, %v2557
        %v2560 = vmul.f32 %v2548, %v2557
        %v2561 = vmul.f32 %v1961, %v2557
        %v2562 = vmul.f32 %v2126, %v2557
        %v2563 = vmul.f32 %v2385, %v2557
        %v2564 = vmul.f32 %v2549, %v2557
        %v2571 = vrot.slane %v2559, 7
        %v2572 = vrot.slane %v2561, 7
        %v2573 = vsel %vm2398, %v2571, %v2572
        %v2574 = vrot.slane %v2560, 7
        %v2575 = vrot.slane %v2562, 7
        %v2576 = vsel %vm2398, %v2574, %v2575
        %v2577 = vrot.slane %v2563, 7
        %v2578 = vsel %vm2398, %v2572, %v2577
        %v2579 = vrot.slane %v2564, 7
        %v2580 = vsel %vm2398, %v2575, %v2579
        %2581 = vrot.lane.b32.xlu0 %v2573, 56
        %v2582 = vpop.permute.xlu0 %2581
        %2583 = vrot.lane.b32.xlu0 %v2576, 56
        %v2584 = vpop.permute.xlu0 %2583
        %2585 = vrot.lane.b32.xlu0 %v2578, 56
        %v2586 = vpop.permute.xlu0 %2585
        %2587 = vrot.lane.b32.xlu0 %v2580, 56
        %v2588 = vpop.permute.xlu0 %2587
        %v2589 = vsel %vm1531, %v2582, %v2584
        %v2590 = vsel %vm1531, %v2586, %v2588
        %v2593 = vadd.f32 %v2546, %v2589
        %v2594 = vadd.f32 %v2547, %v2590
        %v2595 = vld [vmem:[#allocation3 + $0x20] sm:$0xfc]
        %v2596 = vld [vmem:[#allocation3 + $0x30] sm:$0xff]
        %v2597 = vld [vmem:[#allocation3 + $0x40] sm:$0x3]
        %s2598 = scalar_lea.vmem [#allocation9], 48
        %v2599 = vld [vmem:[%s2598] sm:$0x1]
        %v2600 = vlaneseq
        %v2601 = vshrl.u32 %v2600, 7
        %v2602 = vsub.s32 0, %v2601
        %v2603 = vrot.slane %v2599, %v2602
        %v2604 = vmul.f32 %v2595, %v2603
        %v2605 = vmul.f32 %v2596, %v2603
        %v2606 = vmul.f32 %v2597, %v2603
        %vm2610 = vcmask 1045504
        %v2611 = vrot.slane %v2604, 2
        %v2612 = vrot.slane %v2605, 2
        %v2613 = vsel %vm2610, %v2611, %v2612
        %v2614 = vrot.slane %v2606, 2
        %v2615 = vsel %vm2610, %v2612, %v2614
        %v2618 = vadd.f32 %v2593, %v2613
        %v2619 = vadd.f32 %v2594, %v2615
        %v2620 = vld [vmem:[%s2598 + $0x1] sm:$0x1]
        %v2621 = vlaneseq
        %v2622 = vshrl.u32 %v2621, 7
        %v2623 = vsub.s32 0, %v2622
        %v2624 = vrot.slane %v2620, %v2623
        %2626 = vrot.lane.b32.xlu0 %v2624, 12
        %v2627 = vpop.permute.xlu0 %2626
        %v2629 = vmul.f32 %v2595, %v2627
        %v2630 = vmul.f32 %v2596, %v2627
        %v2631 = vmul.f32 %v2597, %v2627
        %v2635 = vrot.slane %v2629, 2
        %v2636 = vrot.slane %v2630, 2
        %v2637 = vsel %vm2610, %v2635, %v2636
        %v2638 = vrot.slane %v2631, 2
        %v2639 = vsel %vm2610, %v2636, %v2638
        %2640 = vrot.lane.b32.xlu0 %v2637, 116
        %v2641 = vpop.permute.xlu0 %2640
        %2642 = vrot.lane.b32.xlu0 %v2639, 116
        %v2643 = vpop.permute.xlu0 %2642
        %v2646 = vadd.f32 %v2618, %v2641
        %v2647 = vadd.f32 %v2619, %v2643
        %v2648 = vld [vmem:[%s2598 + $0x2] sm:$0x1]
        %v2649 = vlaneseq
        %v2650 = vshrl.u32 %v2649, 7
        %v2651 = vsub.s32 0, %v2650
        %v2652 = vrot.slane %v2648, %v2651
        %2654 = vrot.lane.b32.xlu0 %v2652, 24
        %v2655 = vpop.permute.xlu0 %2654
        %v2657 = vmul.f32 %v2595, %v2655
        %v2658 = vmul.f32 %v2596, %v2655
        %v2659 = vmul.f32 %v2597, %v2655
        %v2663 = vrot.slane %v2657, 2
        %v2664 = vrot.slane %v2658, 2
        %v2665 = vsel %vm2610, %v2663, %v2664
        %v2666 = vrot.slane %v2659, 2
        %v2667 = vsel %vm2610, %v2664, %v2666
        %2668 = vrot.lane.b32.xlu0 %v2665, 104
        %v2669 = vpop.permute.xlu0 %2668
        %2670 = vrot.lane.b32.xlu0 %v2667, 104
        %v2671 = vpop.permute.xlu0 %2670
        %v2674 = vadd.f32 %v2646, %v2669
        %v2675 = vadd.f32 %v2647, %v2671
        %v2676 = vld [vmem:[%s2598 + $0x3] sm:$0x1]
        %v2677 = vlaneseq
        %v2678 = vshrl.u32 %v2677, 7
        %v2679 = vsub.s32 0, %v2678
        %v2680 = vrot.slane %v2676, %v2679
        %2682 = vrot.lane.b32.xlu0 %v2680, 36
        %v2683 = vpop.permute.xlu0 %2682
        %v2685 = vmul.f32 %v2595, %v2683
        %v2686 = vmul.f32 %v2596, %v2683
        %v2687 = vmul.f32 %v2597, %v2683
        %v2691 = vrot.slane %v2685, 2
        %v2692 = vrot.slane %v2686, 2
        %v2693 = vsel %vm2610, %v2691, %v2692
        %v2694 = vrot.slane %v2687, 2
        %v2695 = vsel %vm2610, %v2692, %v2694
        %2696 = vrot.lane.b32.xlu0 %v2693, 92
        %v2697 = vpop.permute.xlu0 %2696
        %2698 = vrot.lane.b32.xlu0 %v2695, 92
        %v2699 = vpop.permute.xlu0 %2698
        %v2702 = vadd.f32 %v2674, %v2697
        %v2703 = vadd.f32 %v2675, %v2699
        %v2704 = vld [vmem:[%s2598 + $0x4] sm:$0x1]
        %v2705 = vlaneseq
        %v2706 = vshrl.u32 %v2705, 7
        %v2707 = vsub.s32 0, %v2706
        %v2708 = vrot.slane %v2704, %v2707
        %2710 = vrot.lane.b32.xlu0 %v2708, 48
        %v2711 = vpop.permute.xlu0 %2710
        %v2713 = vmul.f32 %v2595, %v2711
        %v2714 = vmul.f32 %v2596, %v2711
        %v2715 = vmul.f32 %v2597, %v2711
        %v2719 = vrot.slane %v2713, 2
        %v2720 = vrot.slane %v2714, 2
        %v2721 = vsel %vm2610, %v2719, %v2720
        %v2722 = vrot.slane %v2715, 2
        %v2723 = vsel %vm2610, %v2720, %v2722
        %2724 = vrot.lane.b32.xlu0 %v2721, 80
        %v2725 = vpop.permute.xlu0 %2724
        %2726 = vrot.lane.b32.xlu0 %v2723, 80
        %v2727 = vpop.permute.xlu0 %2726
        %v2730 = vadd.f32 %v2702, %v2725
        %v2731 = vadd.f32 %v2703, %v2727
        %v2732 = vld [vmem:[%s2598 + $0x5] sm:$0x1]
        %v2733 = vlaneseq
        %v2734 = vshrl.u32 %v2733, 7
        %v2735 = vsub.s32 0, %v2734
        %v2736 = vrot.slane %v2732, %v2735
        %2738 = vrot.lane.b32.xlu0 %v2736, 60
        %v2739 = vpop.permute.xlu0 %2738
        %v2741 = vmul.f32 %v2595, %v2739
        %v2742 = vmul.f32 %v2596, %v2739
        %v2743 = vmul.f32 %v2597, %v2739
        %v2747 = vrot.slane %v2741, 2
        %v2748 = vrot.slane %v2742, 2
        %v2749 = vsel %vm2610, %v2747, %v2748
        %v2750 = vrot.slane %v2743, 2
        %v2751 = vsel %vm2610, %v2748, %v2750
        %2752 = vrot.lane.b32.xlu0 %v2749, 68
        %v2753 = vpop.permute.xlu0 %2752
        %2754 = vrot.lane.b32.xlu0 %v2751, 68
        %v2755 = vpop.permute.xlu0 %2754
        %v2758 = vadd.f32 %v2730, %v2753
        %v2759 = vadd.f32 %v2731, %v2755
        %v2760 = vld [vmem:[#allocation3 + $0x28] sm:$0xfc]
        %v2761 = vld [vmem:[#allocation3 + $0x38] sm:$0xff]
        %v2762 = vld [vmem:[#allocation3 + $0x48] sm:$0x3]
        %v2763 = vld [vmem:[%s2598 + $0x6] sm:$0x1]
        %v2764 = vlaneseq
        %v2765 = vshrl.u32 %v2764, 7
        %v2766 = vsub.s32 0, %v2765
        %v2767 = vrot.slane %v2763, %v2766
        %2769 = vrot.lane.b32.xlu0 %v2767, 72
        %v2770 = vpop.permute.xlu0 %2769
        %v2772 = vmul.f32 %v2595, %v2770
        %v2773 = vmul.f32 %v2760, %v2770
        %v2774 = vmul.f32 %v2596, %v2770
        %v2775 = vmul.f32 %v2761, %v2770
        %v2776 = vmul.f32 %v2597, %v2770
        %v2777 = vmul.f32 %v2762, %v2770
        %v2784 = vrot.slane %v2772, 2
        %v2785 = vrot.slane %v2774, 2
        %v2786 = vsel %vm2610, %v2784, %v2785
        %v2787 = vrot.slane %v2773, 2
        %v2788 = vrot.slane %v2775, 2
        %v2789 = vsel %vm2610, %v2787, %v2788
        %v2790 = vrot.slane %v2776, 2
        %v2791 = vsel %vm2610, %v2785, %v2790
        %v2792 = vrot.slane %v2777, 2
        %v2793 = vsel %vm2610, %v2788, %v2792
        %2794 = vrot.lane.b32.xlu0 %v2786, 56
        %v2795 = vpop.permute.xlu0 %2794
        %2796 = vrot.lane.b32.xlu0 %v2789, 56
        %v2797 = vpop.permute.xlu0 %2796
        %2798 = vrot.lane.b32.xlu0 %v2791, 56
        %v2799 = vpop.permute.xlu0 %2798
        %2800 = vrot.lane.b32.xlu0 %v2793, 56
        %v2801 = vpop.permute.xlu0 %2800
        %v2802 = vsel %vm1531, %v2795, %v2797
        %v2803 = vsel %vm1531, %v2799, %v2801
        %v2806 = vadd.f32 %v2758, %v2802
        %v2807 = vadd.f32 %v2759, %v2803
        %v2808 = vld [vmem:[%s6] sm:$0x1]
        %v2810 = vlaneseq
        %v2811 = vshrl.u32 %v2810, 7
        %v2812 = vsub.s32 0, %v2811
        %v2813 = vrot.slane %v2808, %v2812
        %2817 = vrot.lane.b32.xlu0 %v2806, 125
        %v2818 = vpop.permute.xlu0 %2817
        %2819 = vrot.lane.b32.xlu0 %v2807, 125
        %v2820 = vpop.permute.xlu0 %2819
        %vm2823 = vcmask 498688
        %v2824 = vsel %vm2823, %v2818, 0.0
        %v2825 = vsel %vm2823, %v2820, 0.0
        %v2826 = vld [vmem:[%s5] sm:$0x1]
        %v2827 = vlaneseq
        %v2828 = vshrl.u32 %v2827, 7
        %v2829 = vsub.s32 0, %v2828
        %v2830 = vrot.slane %v2826, %v2829
        %v2831 = vmul.f32 %v2824, %v2830
        %v2832 = vmul.f32 %v2825, %v2830
        %v2833 = vadd.f32 %v2813, %v2831
        %v2834 = vadd.f32 %v2813, %v2832
        %2835 = vrot.lane.b32.xlu0 %v2806, 126
        %v2836 = vpop.permute.xlu0 %2835
        %2837 = vrot.lane.b32.xlu0 %v2807, 126
        %v2838 = vpop.permute.xlu0 %2837
        %vm2841 = vcmask 506880
        %v2842 = vsel %vm2841, %v2836, 0.0
        %v2843 = vsel %vm2841, %v2838, 0.0
        %v2844 = vld [vmem:[%s5 + $0x1] sm:$0x1]
        %v2845 = vlaneseq
        %v2846 = vshrl.u32 %v2845, 7
        %v2847 = vsub.s32 0, %v2846
        %v2848 = vrot.slane %v2844, %v2847
        %v2849 = vmul.f32 %v2842, %v2848
        %v2850 = vmul.f32 %v2843, %v2848
        %v2851 = vadd.f32 %v2833, %v2849
        %v2852 = vadd.f32 %v2834, %v2850
        %2853 = vrot.lane.b32.xlu0 %v2806, 127
        %v2854 = vpop.permute.xlu0 %2853
        %2855 = vrot.lane.b32.xlu0 %v2807, 127
        %v2856 = vpop.permute.xlu0 %2855
        %vm2859 = vcmask 515072
        %v2860 = vsel %vm2859, %v2854, 0.0
        %v2861 = vsel %vm2859, %v2856, 0.0
        %v2862 = vld [vmem:[%s5 + $0x2] sm:$0x1]
        %v2863 = vlaneseq
        %v2864 = vshrl.u32 %v2863, 7
        %v2865 = vsub.s32 0, %v2864
        %v2866 = vrot.slane %v2862, %v2865
        %v2867 = vmul.f32 %v2860, %v2866
        %v2868 = vmul.f32 %v2861, %v2866
        %v2869 = vadd.f32 %v2851, %v2867
        %v2870 = vadd.f32 %v2852, %v2868
        %v2871 = vld [vmem:[%s5 + $0x3] sm:$0x1]
        %v2872 = vlaneseq
        %v2873 = vshrl.u32 %v2872, 7
        %v2874 = vsub.s32 0, %v2873
        %v2875 = vrot.slane %v2871, %v2874
        %v2876 = vmul.f32 %v2806, %v2875
        %v2877 = vmul.f32 %v2807, %v2875
        %v2878 = vadd.f32 %v2869, %v2876
        %v2879 = vadd.f32 %v2870, %v2877
        %2880 = vrot.lane.b32.xlu0 %v2806, 1
        %v2881 = vpop.permute.xlu0 %2880
        %2882 = vrot.lane.b32.xlu0 %v2807, 1
        %v2883 = vpop.permute.xlu0 %2882
        %vm2886 = vcmask 7168
        %v2887 = vsel %vm2886, 0.0, %v2881
        %v2888 = vsel %vm2886, 0.0, %v2883
        %v2889 = vld [vmem:[%s5 + $0x4] sm:$0x1]
        %v2890 = vlaneseq
        %v2891 = vshrl.u32 %v2890, 7
        %v2892 = vsub.s32 0, %v2891
        %v2893 = vrot.slane %v2889, %v2892
        %v2894 = vmul.f32 %v2887, %v2893
        %v2895 = vmul.f32 %v2888, %v2893
        %v2896 = vadd.f32 %v2878, %v2894
        %v2897 = vadd.f32 %v2879, %v2895
        %2898 = vrot.lane.b32.xlu0 %v2806, 2
        %v2899 = vpop.permute.xlu0 %2898
        %2900 = vrot.lane.b32.xlu0 %v2807, 2
        %v2901 = vpop.permute.xlu0 %2900
        %vm2904 = vcmask 15360
        %v2905 = vsel %vm2904, 0.0, %v2899
        %v2906 = vsel %vm2904, 0.0, %v2901
        %v2907 = vld [vmem:[%s5 + $0x5] sm:$0x1]
        %v2908 = vlaneseq
        %v2909 = vshrl.u32 %v2908, 7
        %v2910 = vsub.s32 0, %v2909
        %v2911 = vrot.slane %v2907, %v2910
        %v2912 = vmul.f32 %v2905, %v2911
        %v2913 = vmul.f32 %v2906, %v2911
        %v2914 = vadd.f32 %v2896, %v2912
        %v2915 = vadd.f32 %v2897, %v2913
        %2916 = vrot.lane.b32.xlu0 %v2806, 3
        %v2917 = vpop.permute.xlu0 %2916
        %2918 = vrot.lane.b32.xlu0 %v2807, 3
        %v2919 = vpop.permute.xlu0 %2918
        %vm2922 = vcmask 23552
        %v2923 = vsel %vm2922, 0.0, %v2917
        %v2924 = vsel %vm2922, 0.0, %v2919
        %v2925 = vld [vmem:[%s5 + $0x6] sm:$0x1]
        %v2926 = vlaneseq
        %v2927 = vshrl.u32 %v2926, 7
        %v2928 = vsub.s32 0, %v2927
        %v2929 = vrot.slane %v2925, %v2928
        %v2930 = vmul.f32 %v2923, %v2929
        %v2931 = vmul.f32 %v2924, %v2929
        %v2932 = vadd.f32 %v2914, %v2930
        %v2933 = vadd.f32 %v2915, %v2931
        %v2934 = vld [vmem:[%s369] sm:$0xff]
        %v2935 = vld [vmem:[%s369 + $0x8] sm:$0xff]
        %v2936 = vmul.f32 %v2934, %v2932
        %v2937 = vmul.f32 %v2935, %v2933
        %vm2938 = vcmask 523264
        %2939 = vst.msk [vmem:[%s352] sm:$0xff] %vm2938, %v2936
        %2940 = vst.msk [vmem:[%s352 + $0x8] sm:$0xff] %vm2938, %v2937
        %s2941 = sand.u32 %s200, 1
        %s2942 = scalar_lea.sflag [#allocation6], %s2941
        %s2943 = sand.u32 %s200, 1
        %s2944 = smul.addr %s2943, 16
        %s2945 = scalar_lea.vmem [#allocation12], %s2944
        // Predicated region
        $region85: #{tpu_custom_call.1} parent=47 // pred_check
          %p2946 = pneg %p210
        $region86: #{tpu_custom_call.1} parent=47 // pred_check_branch
          %2948 = sbr.rel (%p2946) target = $region88
        $region87: #{tpu_custom_call.1} parent=47 // pred_region
          %s2949 = smul.u32 2, %s31
          %s2951 = ssub.s32 256, 256
          %2952 = vsyncadd %s2942, %s2951
          %s2953 = smul.addr %s30, 2
          %s2954 = sadd.s32 %s2949, %s2953
          %s2955 = smul.addr %s2954, 128
          %s2956 = scalar_lea.hbm %s7, %s2955
          %s2957 = sshll.u32 %s2945, 4
          %s2958 = int_to_ptr.vmem [resolvable:$true] %s2957
          %2963 = dma.vmem_to_hbm [thread:$0]  %s2958, 256, %s2956, %s2942, 128, 128, 8
        $region88: #{tpu_custom_call.1} parent=47 // pred_fallthru
          _
      $region48: #{tpu_custom_call.1} parent=5 // pred_fallthru
        _
      %p2964 = scmp.le.s32.totalorder 2, %s21
      // Predicated region
      $region89: #{tpu_custom_call.1} parent=5 // pred_check
        %p2965 = pneg %p2964
      $region90: #{tpu_custom_call.1} parent=5 // pred_check_branch
        %2967 = sbr.rel (%p2965) target = $region92
      $region91: #{tpu_custom_call.1} parent=5 // pred_region
        %s2968 = ssub.s32 %s21, 2
        // Predicated region
        $region93: #{tpu_custom_call.1} parent=91 // pred_check
          %p2969 = pneg %p216
        $region94: #{tpu_custom_call.1} parent=91 // pred_check_branch
          %2971 = sbr.rel (%p2969) target = $region96
        $region95: #{tpu_custom_call.1} parent=91 // pred_region
          %s2972 = sand.u32 %s201, 1
          %s2973 = scalar_lea.sflag [#allocation6], %s2972
          %s2974 = sand.u32 %s201, 1
          %s2975 = smul.addr %s2974, 16
          %s2976 = scalar_lea.vmem [#allocation12], %s2975
          %2977 = dma.done %s2973, 256
        $region96: #{tpu_custom_call.1} parent=91 // pred_fallthru
          _
      $region92: #{tpu_custom_call.1} parent=5 // pred_fallthru
        _
    $region6: #{tpu_custom_call.1} parent=1 // loop_footer
      %s25 = sadd.s32 1, %s21
    $region7: #{tpu_custom_call.1} parent=1 // loop_footer_branch
      %20 = sbr.rel target = $region3
    $region8: #{tpu_custom_call.1} parent=1 // loop_exit
      _
    %2978 = vsyncpa [#allocation5], 1
    %s2979 = scalar_lea.sflag [#allocation5], 1
    %2980 = vsyncpa %s2979, 1
    %2981 = vsyncpa [#allocation8], 1
    %2982 = vsyncpa [#allocation11], 1
    %2983 = vsyncpa [#allocation6], 1
    %s2984 = scalar_lea.sflag [#allocation6], 1
    %2985 = vsyncpa %s2984, 1

</llo_original>
